<compile_context>
chip_gen: v5e
topology: v5e:2x2
jax: 0.10.0
libtpu: 0.0.40
codegen_flags: <defaults>
</compile_context>

<pallas_src>
import functools
import math

import jax
import jax.numpy as jnp
from jax import lax
from jax.experimental import pallas as pl
from jax.experimental.pallas import tpu as pltpu


# ----------------------------------------------------------------------------
# helpers
# ----------------------------------------------------------------------------
def _shift_right_time(a, s):
    """Shift (Bb, T, C) right along T by s steps, zero-filling the front."""
    if s == 0:
        return a
    bb, t, c = a.shape
    if s >= t:
        return jnp.zeros_like(a)
    zeros = jnp.zeros((bb, s, c), a.dtype)
    return jnp.concatenate([zeros, a[:, :t - s, :]], axis=1)


def _causal_conv_relu(x, w_ref, b_ref, dil, ks, cdt):
    """Causal dilated Conv1d (+bias, ReLU) as an accumulation of ks shifted
    matmuls (no (Bb,T,ks*C) concatenated slab)."""
    bb, t, c_in = x.shape
    acc = None
    for kk in range(ks):
        shift = (ks - 1 - kk) * dil
        xs = _shift_right_time(x, shift).reshape(bb * t, c_in)
        contrib = jnp.dot(xs.astype(cdt), w_ref[kk],
                          preferred_element_type=jnp.float32)
        acc = contrib if acc is None else acc + contrib
    c_out = acc.shape[-1]
    return jnp.maximum(acc + b_ref[...], 0.0).reshape(bb, t, c_out)


def _pick_batch_block(n, cap):
    """Largest divisor of n <= cap, preferring an even grid count so v7x's two
    TensorCores get equal numbers of batch blocks."""
    cap = max(1, min(n, cap))
    divs = [d for d in range(1, cap + 1) if n % d == 0]
    even = [d for d in divs if (n // d) % 2 == 0]
    if even:
        return max(even)
    multi = [d for d in divs if (n // d) >= 2]
    if multi:
        return max(multi)
    return max(divs)


def _pick_key_tile(t, cap):
    """Largest divisor of T <= cap (prefer multiples of 8); fall back to T."""
    if t <= cap:
        return t
    divs = [d for d in range(1, cap + 1) if t % d == 0]
    divs8 = [d for d in divs if d % 8 == 0]
    best = max(divs8) if divs8 else max(divs)
    return best if best >= 8 else t


def _vmem_limit_bytes():
    """Generation-aware scoped-VMEM limit: ~75% of physical, capped at 100 MiB
    (v7x: ~48 MiB of 64 MiB physical; v5e/v6e: 96-100 MiB of 128 MiB)."""
    cap = 64 << 20
    try:
        info = pltpu.get_tpu_info()
        cap = int(getattr(info, "vmem_capacity_bytes", cap))
    except Exception:
        pass
    return max(32 << 20, min(int(cap * 3 // 4), 100 << 20))


def _estimate_kernel_vmem(bb, t, key_tile, layers, c0, key_size):
    """Rough upper bound on live VMEM inside one grid step (bytes)."""
    c_max = max([c0] + [m["c_in"] for m in layers] + [m["c_out"] for m in layers])
    att = bb * t * key_tile * (4 + 4 + 2) + bb * key_tile * (c_max + 1) * 6
    act = bb * t * (c_max + 1) * 4 * 6 + bb * t * (2 * key_size + c_max) * 4
    scr = bb * t * (key_size + c_max) * 4 if t > key_tile else 0
    xin = 2 * bb * t * c0 * 4
    return att + act + scr + xin


# ----------------------------------------------------------------------------
# Fused TCAN kernel: all temporal blocks + head, one batch block per grid step
# ----------------------------------------------------------------------------
def _tcan_fused_kernel(x_ref, *refs, layers, key_size, kernel_size, key_tile,
                       c_max, compute_dtype):
    bb, t, _ = x_ref.shape
    num_kt = t // key_tile
    if num_kt > 1:
        *w_refs, o_ref, k_scr, v_scr = refs
    else:
        *w_refs, o_ref = refs
        k_scr = v_scr = None

    cdt = compute_dtype
    inv_sqrt_k = 1.0 / math.sqrt(key_size)

    # Causal-mask index vectors, hoisted once for all layers / key tiles.
    q_idx = lax.broadcasted_iota(jnp.int32, (t, 1), 0)          # query index
    k_idx = lax.broadcasted_iota(jnp.int32, (1, key_tile), 1)   # key index in tile

    y = x_ref[...].astype(jnp.float32)                          # (Bb, T, C0)

    idx = 0
    for meta in layers:
        c_in, c_out = meta["c_in"], meta["c_out"]
        dil, has_ds = meta["dilation"], meta["has_ds"]
        wqkv_ref, bqkv_ref, w1_ref, b1_ref, w2_ref, b2_ref = w_refs[idx:idx + 6]
        idx += 6
        if has_ds:
            wds_ref, bds2_ref = w_refs[idx:idx + 2]
            idx += 2

        # ---- fused Q/K/V projection (one wide matmul on the flat slab) ------
        y2 = y.reshape(bb * t, c_in)
        qkv = jnp.dot(y2.astype(cdt), wqkv_ref[...],
                      preferred_element_type=jnp.float32) + bqkv_ref[...]
        q = (qkv[:, :key_size] * inv_sqrt_k).reshape(bb, t, key_size)
        k = qkv[:, key_size:2 * key_size].reshape(bb, t, key_size)
        v = qkv[:, 2 * key_size:].reshape(bb, t, c_in)
        q_c = q.astype(cdt)

        # ---- attention: softmax over the QUERY axis, streamed over key tiles.
        #      Per-key 1/denominator is folded into V (plus an extra
        #      all-reciprocal column): one e@V' matmul yields out_attn AND the
        #      per-query row-sum s.  `probs` is never materialized. -----------
        def attn_tile(k0, k_t, v_t):
            logits = jnp.einsum("bqd,bkd->bqk", q_c, k_t.astype(cdt),
                                preferred_element_type=jnp.float32)  # (Bb,T,Tk)
            logits = jnp.where((k_idx + k0) > q_idx, -jnp.inf, logits)
            m = jnp.max(logits, axis=1, keepdims=True)               # over queries
            e = jnp.exp(logits - m)                                   # f32 (v5e EUP)
            recip = pl.reciprocal(jnp.sum(e, axis=1, keepdims=True),
                                  approx=True)                        # (Bb,1,Tk)
            recip_col = recip.reshape(bb, key_tile, 1)                # (Bb,Tk,1)
            vprime = jnp.concatenate([v_t * recip_col, recip_col], axis=-1)
            return jnp.einsum("bqk,bkd->bqd", e.astype(cdt), vprime.astype(cdt),
                              preferred_element_type=jnp.float32)

        if num_kt == 1:
            out_all = attn_tile(0, k, v)                              # (Bb,T,C_in+1)
            out_attn = out_all[:, :, :c_in]
            s = out_all[:, :, c_in:c_in + 1]
        else:
            # Stage K / zero-padded V once; stream key tiles with dynamic
            # leading-index loads inside a fori_loop so the live set stays
            # O(Bb*T*Tk) (bounded, unlike an unrolled Python loop).
            if c_in < c_max:
                v_st = jnp.concatenate(
                    [v, jnp.zeros((bb, t, c_max - c_in), jnp.float32)], axis=-1)
            else:
                v_st = v
            for j in range(num_kt):
                sl = slice(j * key_tile, (j + 1) * key_tile)
                k_scr[j] = k[:, sl, :]
                v_scr[j] = v_st[:, sl, :]

            def kt_body(step, acc):
                return acc + attn_tile(step * key_tile, k_scr[step], v_scr[step])

            out_all = lax.fori_loop(0, num_kt, kt_body,
                                    jnp.zeros((bb, t, c_max + 1), jnp.float32))
            out_attn = out_all[:, :, :c_in]
            s = out_all[:, :, c_max:c_max + 1]

        # ---- enhanced-residual time weights: softmax_T(sum over keys) -------
        se = jnp.exp(s - jnp.max(s, axis=1, keepdims=True))
        w_time = se / jnp.sum(se, axis=1, keepdims=True)   # exact recip (tiny)

        # ---- two causal dilated conv sub-blocks ------------------------------
        h1 = _causal_conv_relu(out_attn, w1_ref, b1_ref, dil, kernel_size, cdt)
        h2 = _causal_conv_relu(h1, w2_ref, b2_ref, dil, kernel_size, cdt)

        # ---- residual + enhanced residual (merged), final ReLU ---------------
        xr = (1.0 + w_time) * y                                      # (Bb, T, C_in)
        if has_ds:
            r = (jnp.dot(xr.reshape(bb * t, c_in).astype(cdt), wds_ref[...],
                         preferred_element_type=jnp.float32)
                 + bds2_ref[...]).reshape(bb, t, c_out)
        else:
            r = xr                                                    # identity downsample
        y = jnp.maximum(h2 + r, 0.0)

    # ---- head on the LAST time step only: Linear + log_softmax --------------
    wl_ref, bl_ref = w_refs[idx], w_refs[idx + 1]
    y_last = y[:, t - 1, :]                                           # (Bb, C_last)
    o = jnp.dot(y_last.astype(cdt), wl_ref[...],
                preferred_element_type=jnp.float32) + bl_ref[...]
    z = o - jnp.max(o, axis=1, keepdims=True)
    o_ref[0] = z - jnp.log(jnp.sum(jnp.exp(z), axis=1, keepdims=True))


# ----------------------------------------------------------------------------
# Parameter packing (fuse QKV, merge residual bias, cast MXU operands)
# ----------------------------------------------------------------------------
def _pack_params(blocks, head_p, compute_dtype):
    layers, args = [], []
    for li, blk in enumerate(blocks):
        ks, c_in, c_out = blk["w1"].shape
        wqkv = jnp.concatenate([blk["wq"], blk["wk"], blk["wv"]], axis=1).astype(compute_dtype)
        bqkv = jnp.concatenate([blk["bq"], blk["bk"], blk["bv"]], axis=1).astype(jnp.float32)
        args += [wqkv, bqkv,
                 blk["w1"].astype(compute_dtype), blk["b1"].astype(jnp.float32),
                 blk["w2"].astype(compute_dtype), blk["b2"].astype(jnp.float32)]
        has_ds = "wds" in blk
        if has_ds:
            args += [blk["wds"].astype(compute_dtype),
                     (2.0 * blk["bds"]).astype(jnp.float32)]   # bias counted twice (res + en_res)
        layers.append(dict(c_in=c_in, c_out=c_out, dilation=2 ** li, has_ds=has_ds))
    args += [head_p["wl"].astype(compute_dtype), head_p["bl"].astype(jnp.float32)]
    return layers, args


# ----------------------------------------------------------------------------
# Deterministic parameter construction (synthetic, no checkpoint loading)
# ----------------------------------------------------------------------------
def init_tcan_params(key, input_size, output_size, num_channels, kernel_size,
                     key_size=25):
    keys = iter(jax.random.split(key, 128))

    def nrm(shape, std=0.01):
        return std * jax.random.normal(next(keys), shape, jnp.float32)

    def uni(shape, bound):
        return jax.random.uniform(next(keys), shape, jnp.float32, -bound, bound)

    blocks = []
    c_prev = input_size
    for c_out in num_channels:
        c_in = c_prev
        lb = 1.0 / math.sqrt(c_in)
        cb1 = 1.0 / math.sqrt(c_in * kernel_size)
        cb2 = 1.0 / math.sqrt(c_out * kernel_size)
        blk = dict(
            # attention nn.Linear weights stored pre-transposed: (in_features, out_features)
            wq=uni((c_in, key_size), lb), bq=uni((1, key_size), lb),
            wk=uni((c_in, key_size), lb), bk=uni((1, key_size), lb),
            wv=uni((c_in, c_in), lb),     bv=uni((1, c_in), lb),
            # weight_norm(Conv1d) effective weights ~ N(0, 0.01), stored (ks, C_in, C_out)
            w1=nrm((kernel_size, c_in, c_out)),  b1=uni((1, c_out), cb1),
            w2=nrm((kernel_size, c_out, c_out)), b2=uni((1, c_out), cb2),
        )
        if c_in != c_out:   # downsample 1x1 conv only when needed; identity otherwise
            blk["wds"] = nrm((c_in, c_out))
            blk["bds"] = uni((1, c_out), 1.0 / math.sqrt(c_in))
        blocks.append(blk)
        c_prev = c_out

    lb = 1.0 / math.sqrt(c_prev)
    head_p = dict(wl=uni((c_prev, output_size), lb), bl=uni((1, output_size), lb))
    return blocks, head_p


# ----------------------------------------------------------------------------
# Forward wrapper: one fused pallas_call over batch blocks
# ----------------------------------------------------------------------------
def tcan_forward(x_ncl, blocks, head_p, *, kernel_size, key_size=25,
                 compute_dtype=jnp.bfloat16, max_batch_block=8, key_tile_cap=256):
    """x_ncl: (N, C_in, L) -- same convention as the PyTorch module."""
    x_tc = jnp.transpose(x_ncl, (0, 2, 1)).astype(jnp.float32)   # (N, T, C)
    n, t, c0 = x_tc.shape
    out_size = head_p["wl"].shape[1]

    layers, wargs = _pack_params(blocks, head_p, compute_dtype)
    c_max = max(m["c_in"] for m in layers)

    key_tile = _pick_key_tile(t, key_tile_cap)
    assert t % key_tile == 0
    num_kt = t // key_tile

    vmem_limit = _vmem_limit_bytes()
    cap = max_batch_block
    while cap > 1 and _estimate_kernel_vmem(cap, t, key_tile, layers, c0,
                                            key_size) > int(0.6 * vmem_limit):
        cap -= 1
    bb = _pick_batch_block(n, cap)
    n_blk = n // bb

    kernel = functools.partial(
        _tcan_fused_kernel, layers=layers, key_size=key_size,
        kernel_size=kernel_size, key_tile=key_tile, c_max=c_max,
        compute_dtype=compute_dtype)

    scratch_shapes = []
    if num_kt > 1:
        scratch_shapes = [
            pltpu.VMEM((num_kt, bb, key_tile, key_size), jnp.float32),
            pltpu.VMEM((num_kt, bb, key_tile, c_max), jnp.float32),
        ]

    def _wspec(a, buffered):
        nd = a.ndim
        imap = lambda i, _nd=nd: (0,) * _nd
        if buffered:
            # Constant weight blocks never change across grid steps: single-buffer.
            return pl.BlockSpec(a.shape, imap, pipeline_mode=pl.Buffered(1))
        return pl.BlockSpec(a.shape, imap)

    def _run(buffered_weights):
        call = pl.pallas_call(
            kernel,
            out_shape=jax.ShapeDtypeStruct((n_blk, bb, out_size), jnp.float32),
            grid=(n_blk,),
            in_specs=[pl.BlockSpec((bb, t, c0), lambda i: (i, 0, 0))]
                     + [_wspec(w, buffered_weights) for w in wargs],
            out_specs=pl.BlockSpec((1, bb, out_size), lambda i: (i, 0, 0)),
            scratch_shapes=scratch_shapes,
            compiler_params=pltpu.CompilerParams(
                dimension_semantics=("parallel",),      # batch blocks independent
                vmem_limit_bytes=vmem_limit),
        )
        return jax.block_until_ready(call(x_tc, *wargs))

    try:
        out = _run(True)
    except Exception:
        # pipeline_mode / Buffered(1) unsupported on this jax: default buffering.
        out = _run(False)
    return out.reshape(n, out_size)


# ----------------------------------------------------------------------------
# Pure-JAX f32 reference (same math, no Pallas) for validation
# ----------------------------------------------------------------------------
def tcan_reference(x_ncl, blocks, head_p, *, kernel_size, key_size=25):
    x = jnp.transpose(x_ncl, (0, 2, 1)).astype(jnp.float32)
    n, t, _ = x.shape
    inv = 1.0 / math.sqrt(key_size)
    y = x
    for li, blk in enumerate(blocks):
        dil = 2 ** li
        ks = blk["w1"].shape[0]
        q = (y @ blk["wq"] + blk["bq"]) * inv
        k = y @ blk["wk"] + blk["bk"]
        v = y @ blk["wv"] + blk["bv"]
        logits = jnp.einsum("bqd,bkd->bqk", q, k)
        qi = jnp.arange(t)[:, None]
        ki = jnp.arange(t)[None, :]
        logits = jnp.where((ki > qi)[None], -jnp.inf, logits)
        probs = jax.nn.softmax(logits, axis=1)
        out_attn = jnp.einsum("bqk,bkd->bqd", probs, v)
        s = probs.sum(axis=2, keepdims=True)
        w_time = jax.nn.softmax(s, axis=1)

        def conv(xx, w, b):
            acc = 0.0
            for kk in range(ks):
                sft = (ks - 1 - kk) * dil
                xs = xx if sft == 0 else jnp.concatenate(
                    [jnp.zeros((n, sft, xx.shape[-1]), xx.dtype),
                     xx[:, :t - sft, :]], axis=1)
                acc = acc + xs @ w[kk]
            return jax.nn.relu(acc + b)

        h1 = conv(out_attn, blk["w1"], blk["b1"])
        h2 = conv(h1, blk["w2"], blk["b2"])
        xr = (1.0 + w_time) * y
        r = xr @ blk["wds"] + 2.0 * blk["bds"] if "wds" in blk else xr
        y = jax.nn.relu(h2 + r)
    o = y[:, -1, :] @ head_p["wl"] + head_p["bl"]
    return jax.nn.log_softmax(o, axis=-1)


if __name__ == "__main__":
    key = jax.random.PRNGKey(0)
    kx, kp = jax.random.split(key)

    # Small shapes consistent with TCAN(input_size, output_size, num_channels, kernel_size, dropout)
    N, input_size, seq_len = 2, 4, 16
    output_size = 10
    num_channels = [8, 8]        # two temporal blocks, dilations 1 and 2
    kernel_size = 3

    blocks, head_p = init_tcan_params(kp, input_size, output_size,
                                      num_channels, kernel_size, key_size=25)
    x = jax.random.normal(kx, (N, input_size, seq_len), jnp.float32)   # (N, C_in, L_in)

    # Main run: bf16 MXU operands, single key tile (T=16 fits in one tile).
    out = tcan_forward(x, blocks, head_p, kernel_size=kernel_size, key_size=25)
    out = jax.block_until_ready(out)
    assert out.shape == (N, output_size)
    assert bool(jnp.all(jnp.isfinite(out)))
    # log_softmax rows must exponentiate-sum to 1
    assert bool(jnp.allclose(jnp.sum(jnp.exp(out), axis=1), 1.0, atol=1e-4))

    # Exercise the key-tiled (fori_loop + VMEM scratch) attention path in f32 and
    # validate against the pure-JAX reference and the bf16 run.
    out_tiled_f32 = tcan_forward(x, blocks, head_p, kernel_size=kernel_size,
                                 key_size=25, compute_dtype=jnp.float32,
                                 key_tile_cap=8)
    out_tiled_f32 = jax.block_until_ready(out_tiled_f32)
    ref = tcan_reference(x, blocks, head_p, kernel_size=kernel_size, key_size=25)
    assert bool(jnp.allclose(out_tiled_f32, ref, atol=5e-2))
    assert bool(jnp.allclose(out, out_tiled_f32, atol=1e-1))

    print("KERNEL_OK")
</pallas_src>

<mosaic_0001>
module attributes {stable_mosaic.version = 11 : i64} {
  func.func @_tcan_fused_kernel(%arg0: i32, %arg1: memref<1x16x4xf32, #tpu.memory_space<vmem>>, %arg2: memref<4x54xbf16, #tpu.memory_space<vmem>>, %arg3: memref<1x54xf32, #tpu.memory_space<vmem>>, %arg4: memref<3x4x8xbf16, #tpu.memory_space<vmem>>, %arg5: memref<1x8xf32, #tpu.memory_space<vmem>>, %arg6: memref<3x8x8xbf16, #tpu.memory_space<vmem>>, %arg7: memref<1x8xf32, #tpu.memory_space<vmem>>, %arg8: memref<4x8xbf16, #tpu.memory_space<vmem>>, %arg9: memref<1x8xf32, #tpu.memory_space<vmem>>, %arg10: memref<8x58xbf16, #tpu.memory_space<vmem>>, %arg11: memref<1x58xf32, #tpu.memory_space<vmem>>, %arg12: memref<3x8x8xbf16, #tpu.memory_space<vmem>>, %arg13: memref<1x8xf32, #tpu.memory_space<vmem>>, %arg14: memref<3x8x8xbf16, #tpu.memory_space<vmem>>, %arg15: memref<1x8xf32, #tpu.memory_space<vmem>>, %arg16: memref<8x10xbf16, #tpu.memory_space<vmem>>, %arg17: memref<1x10xf32, #tpu.memory_space<vmem>>, %arg18: memref<1x1x10xf32, #tpu.memory_space<vmem>>) attributes {dimension_semantics = [#tpu.dimension_semantics<parallel>], iteration_bounds = array<i64: 2>, scalar_prefetch = 0 : i64, scratch_operands = 0 : i64, tpu.core_type = #tpu.core_type<tc>, window_params = [{transform_indices = @transform_0, window_bounds = array<i64: 1, 16, 4>}, {pipeline_mode = #tpu.pipeline_mode<synchronous>, transform_indices = @transform_1, window_bounds = array<i64: 4, 54>}, {pipeline_mode = #tpu.pipeline_mode<synchronous>, transform_indices = @transform_2, window_bounds = array<i64: 1, 54>}, {pipeline_mode = #tpu.pipeline_mode<synchronous>, transform_indices = @transform_3, window_bounds = array<i64: 3, 4, 8>}, {pipeline_mode = #tpu.pipeline_mode<synchronous>, transform_indices = @transform_4, window_bounds = array<i64: 1, 8>}, {pipeline_mode = #tpu.pipeline_mode<synchronous>, transform_indices = @transform_5, window_bounds = array<i64: 3, 8, 8>}, {pipeline_mode = #tpu.pipeline_mode<synchronous>, transform_indices = @transform_6, window_bounds = array<i64: 1, 8>}, {pipeline_mode = #tpu.pipeline_mode<synchronous>, transform_indices = @transform_7, window_bounds = array<i64: 4, 8>}, {pipeline_mode = #tpu.pipeline_mode<synchronous>, transform_indices = @transform_8, window_bounds = array<i64: 1, 8>}, {pipeline_mode = #tpu.pipeline_mode<synchronous>, transform_indices = @transform_9, window_bounds = array<i64: 8, 58>}, {pipeline_mode = #tpu.pipeline_mode<synchronous>, transform_indices = @transform_10, window_bounds = array<i64: 1, 58>}, {pipeline_mode = #tpu.pipeline_mode<synchronous>, transform_indices = @transform_11, window_bounds = array<i64: 3, 8, 8>}, {pipeline_mode = #tpu.pipeline_mode<synchronous>, transform_indices = @transform_12, window_bounds = array<i64: 1, 8>}, {pipeline_mode = #tpu.pipeline_mode<synchronous>, transform_indices = @transform_13, window_bounds = array<i64: 3, 8, 8>}, {pipeline_mode = #tpu.pipeline_mode<synchronous>, transform_indices = @transform_14, window_bounds = array<i64: 1, 8>}, {pipeline_mode = #tpu.pipeline_mode<synchronous>, transform_indices = @transform_15, window_bounds = array<i64: 8, 10>}, {pipeline_mode = #tpu.pipeline_mode<synchronous>, transform_indices = @transform_16, window_bounds = array<i64: 1, 10>}, {transform_indices = @transform_17, window_bounds = array<i64: 1, 1, 10>}]} {
    %0 = tpu.iota {dimensions = array<i32: 0>} : vector<16x1xi32>
    %1 = tpu.iota {dimensions = array<i32: 1>} : vector<1x16xi32>
    %c0 = arith.constant 0 : index
    %c0_0 = arith.constant 0 : index
    %c0_1 = arith.constant 0 : index
    %2 = vector.load %arg1[%c0, %c0_0, %c0_1] : memref<1x16x4xf32, #tpu.memory_space<vmem>>, vector<1x16x4xf32>
    %3 = vector.shape_cast %2 : vector<1x16x4xf32> to vector<16x4xf32>
    %4 = arith.truncf %3 : vector<16x4xf32> to vector<16x4xbf16>
    %c0_2 = arith.constant 0 : index
    %c0_3 = arith.constant 0 : index
    %5 = vector.load %arg2[%c0_2, %c0_3] : memref<4x54xbf16, #tpu.memory_space<vmem>>, vector<4x54xbf16>
    %cst = arith.constant dense<0.000000e+00> : vector<16x54xf32>
    %6 = tpu.matmul %4, %5, %cst {dimension_numbers = #tpu.dot_dimension_numbers<[1], [0], [0], [1], [0, 0, 1, 1], [], []>} : vector<16x4xbf16>, vector<4x54xbf16>, vector<16x54xf32> -> vector<16x54xf32>
    %c0_4 = arith.constant 0 : index
    %c0_5 = arith.constant 0 : index
    %7 = vector.load %arg3[%c0_4, %c0_5] : memref<1x54xf32, #tpu.memory_space<vmem>>, vector<1x54xf32>
    %8 = vector.broadcast %7 : vector<1x54xf32> to vector<16x54xf32>
    %9 = arith.addf %6, %8 : vector<16x54xf32>
    %10 = vector.extract_strided_slice %9 {offsets = [0, 0], sizes = [16, 25], strides = [1, 1]} : vector<16x54xf32> to vector<16x25xf32>
    %cst_6 = arith.constant 2.000000e-01 : f32
    %11 = vector.broadcast %cst_6 : f32 to vector<16x25xf32>
    %12 = arith.mulf %10, %11 : vector<16x25xf32>
    %13 = vector.shape_cast %12 : vector<16x25xf32> to vector<1x16x25xf32>
    %14 = vector.extract_strided_slice %9 {offsets = [0, 25], sizes = [16, 25], strides = [1, 1]} : vector<16x54xf32> to vector<16x25xf32>
    %15 = vector.shape_cast %14 : vector<16x25xf32> to vector<1x16x25xf32>
    %16 = vector.extract_strided_slice %9 {offsets = [0, 50], sizes = [16, 4], strides = [1, 1]} : vector<16x54xf32> to vector<16x4xf32>
    %17 = vector.shape_cast %16 : vector<16x4xf32> to vector<1x16x4xf32>
    %18 = arith.truncf %13 : vector<1x16x25xf32> to vector<1x16x25xbf16>
    %19 = arith.truncf %15 : vector<1x16x25xf32> to vector<1x16x25xbf16>
    "tpu.trace_start"() <{level = 10 : i32, message = "bqd,bkd->bqk"}> : () -> ()
    %cst_7 = arith.constant dense<0.000000e+00> : vector<1x16x16xf32>
    %20 = tpu.matmul %18, %19, %cst_7 {dimension_numbers = #tpu.dot_dimension_numbers<[2], [2], [1], [1], [0, 0, 0, 1, 1, 1], [0], [0]>} : vector<1x16x25xbf16>, vector<1x16x25xbf16>, vector<1x16x16xf32> -> vector<1x16x16xf32>
    "tpu.trace_stop"() : () -> ()
    %c0_i32 = arith.constant 0 : i32
    %21 = vector.broadcast %c0_i32 : i32 to vector<1x16xi32>
    %22 = arith.addi %1, %21 : vector<1x16xi32>
    %23 = vector.broadcast %22 : vector<1x16xi32> to vector<16x16xi32>
    %24 = vector.broadcast %0 : vector<16x1xi32> to vector<16x16xi32>
    %25 = arith.cmpi sgt, %23, %24 : vector<16x16xi32>
    %cst_8 = arith.constant 0xFF800000 : f32
    %26 = vector.shape_cast %25 : vector<16x16xi1> to vector<1x16x16xi1>
    %27 = vector.broadcast %cst_8 : f32 to vector<1x16x16xf32>
    %28 = arith.select %26, %27, %20 : vector<1x16x16xi1>, vector<1x16x16xf32>
    %cst_9 = arith.constant dense<0xFF800000> : vector<1x16xf32>
    %29 = vector.multi_reduction <maximumf>, %28, %cst_9 [1] : vector<1x16x16xf32> to vector<1x16xf32>
    %30 = vector.shape_cast %29 : vector<1x16xf32> to vector<1x1x16xf32>
    %31 = vector.broadcast %30 : vector<1x1x16xf32> to vector<1x16x16xf32>
    %32 = arith.subf %28, %31 : vector<1x16x16xf32>
    %33 = math.exp %32 : vector<1x16x16xf32>
    %cst_10 = arith.constant dense<0.000000e+00> : vector<1x16xf32>
    %34 = vector.multi_reduction <add>, %33, %cst_10 [1] : vector<1x16x16xf32> to vector<1x16xf32>
    %35 = vector.shape_cast %34 : vector<1x16xf32> to vector<1x1x16xf32>
    %36 = tpu.reciprocal %35 {approx = true} : vector<1x1x16xf32> -> vector<1x1x16xf32>
    %37 = vector.shape_cast %36 : vector<1x1x16xf32> to vector<1x16x1xf32>
    %38 = vector.broadcast %37 : vector<1x16x1xf32> to vector<1x16x4xf32>
    %39 = arith.mulf %17, %38 : vector<1x16x4xf32>
    %40 = tpu.concatenate %39, %37 in 2 : vector<1x16x4xf32>, vector<1x16x1xf32> -> vector<1x16x5xf32>
    %41 = arith.truncf %33 : vector<1x16x16xf32> to vector<1x16x16xbf16>
    %42 = arith.truncf %40 : vector<1x16x5xf32> to vector<1x16x5xbf16>
    "tpu.trace_start"() <{level = 10 : i32, message = "bqk,bkd->bqd"}> : () -> ()
    %cst_11 = arith.constant dense<0.000000e+00> : vector<1x16x5xf32>
    %43 = tpu.matmul %41, %42, %cst_11 {dimension_numbers = #tpu.dot_dimension_numbers<[2], [1], [1], [2], [0, 0, 0, 1, 1, 2], [0], [0]>} : vector<1x16x16xbf16>, vector<1x16x5xbf16>, vector<1x16x5xf32> -> vector<1x16x5xf32>
    "tpu.trace_stop"() : () -> ()
    %44 = vector.extract_strided_slice %43 {offsets = [0, 0, 0], sizes = [1, 16, 4], strides = [1, 1, 1]} : vector<1x16x5xf32> to vector<1x16x4xf32>
    %45 = vector.extract_strided_slice %43 {offsets = [0, 0, 4], sizes = [1, 16, 1], strides = [1, 1, 1]} : vector<1x16x5xf32> to vector<1x16x1xf32>
    %cst_12 = arith.constant dense<0xFF800000> : vector<1x1xf32>
    %46 = vector.multi_reduction <maximumf>, %45, %cst_12 [1] : vector<1x16x1xf32> to vector<1x1xf32>
    %47 = vector.shape_cast %46 : vector<1x1xf32> to vector<1x1x1xf32>
    %48 = vector.broadcast %47 : vector<1x1x1xf32> to vector<1x16x1xf32>
    %49 = arith.subf %45, %48 : vector<1x16x1xf32>
    %50 = math.exp %49 : vector<1x16x1xf32>
    %cst_13 = arith.constant dense<0.000000e+00> : vector<1x1xf32>
    %51 = vector.multi_reduction <add>, %50, %cst_13 [1] : vector<1x16x1xf32> to vector<1x1xf32>
    %52 = vector.shape_cast %51 : vector<1x1xf32> to vector<1x1x1xf32>
    %53 = vector.broadcast %52 : vector<1x1x1xf32> to vector<1x16x1xf32>
    %54 = arith.divf %50, %53 : vector<1x16x1xf32>
    %cst_14 = arith.constant 0.000000e+00 : f32
    %55 = vector.broadcast %cst_14 : f32 to vector<1x2x4xf32>
    %56 = vector.extract_strided_slice %44 {offsets = [0, 0, 0], sizes = [1, 14, 4], strides = [1, 1, 1]} : vector<1x16x4xf32> to vector<1x14x4xf32>
    %57 = tpu.concatenate %55, %56 in 1 : vector<1x2x4xf32>, vector<1x14x4xf32> -> vector<1x16x4xf32>
    %58 = vector.shape_cast %57 : vector<1x16x4xf32> to vector<16x4xf32>
    %59 = arith.truncf %58 : vector<16x4xf32> to vector<16x4xbf16>
    %c0_15 = arith.constant 0 : index
    %c0_16 = arith.constant 0 : index
    %c0_17 = arith.constant 0 : index
    %60 = vector.load %arg4[%c0_15, %c0_16, %c0_17] : memref<3x4x8xbf16, #tpu.memory_space<vmem>>, vector<1x4x8xbf16>
    %61 = vector.shape_cast %60 : vector<1x4x8xbf16> to vector<4x8xbf16>
    %cst_18 = arith.constant dense<0.000000e+00> : vector<16x8xf32>
    %62 = tpu.matmul %59, %61, %cst_18 {dimension_numbers = #tpu.dot_dimension_numbers<[1], [0], [0], [1], [0, 0, 1, 1], [], []>} : vector<16x4xbf16>, vector<4x8xbf16>, vector<16x8xf32> -> vector<16x8xf32>
    %cst_19 = arith.constant 0.000000e+00 : f32
    %63 = vector.broadcast %cst_19 : f32 to vector<1x1x4xf32>
    %64 = vector.extract_strided_slice %44 {offsets = [0, 0, 0], sizes = [1, 15, 4], strides = [1, 1, 1]} : vector<1x16x4xf32> to vector<1x15x4xf32>
    %65 = tpu.concatenate %63, %64 in 1 : vector<1x1x4xf32>, vector<1x15x4xf32> -> vector<1x16x4xf32>
    %66 = vector.shape_cast %65 : vector<1x16x4xf32> to vector<16x4xf32>
    %67 = arith.truncf %66 : vector<16x4xf32> to vector<16x4xbf16>
    %c1 = arith.constant 1 : index
    %c0_20 = arith.constant 0 : index
    %c0_21 = arith.constant 0 : index
    %68 = vector.load %arg4[%c1, %c0_20, %c0_21] : memref<3x4x8xbf16, #tpu.memory_space<vmem>>, vector<1x4x8xbf16>
    %69 = vector.shape_cast %68 : vector<1x4x8xbf16> to vector<4x8xbf16>
    %cst_22 = arith.constant dense<0.000000e+00> : vector<16x8xf32>
    %70 = tpu.matmul %67, %69, %cst_22 {dimension_numbers = #tpu.dot_dimension_numbers<[1], [0], [0], [1], [0, 0, 1, 1], [], []>} : vector<16x4xbf16>, vector<4x8xbf16>, vector<16x8xf32> -> vector<16x8xf32>
    %71 = arith.addf %62, %70 : vector<16x8xf32>
    %72 = vector.shape_cast %44 : vector<1x16x4xf32> to vector<16x4xf32>
    %73 = arith.truncf %72 : vector<16x4xf32> to vector<16x4xbf16>
    %c2 = arith.constant 2 : index
    %c0_23 = arith.constant 0 : index
    %c0_24 = arith.constant 0 : index
    %74 = vector.load %arg4[%c2, %c0_23, %c0_24] : memref<3x4x8xbf16, #tpu.memory_space<vmem>>, vector<1x4x8xbf16>
    %75 = vector.shape_cast %74 : vector<1x4x8xbf16> to vector<4x8xbf16>
    %cst_25 = arith.constant dense<0.000000e+00> : vector<16x8xf32>
    %76 = tpu.matmul %73, %75, %cst_25 {dimension_numbers = #tpu.dot_dimension_numbers<[1], [0], [0], [1], [0, 0, 1, 1], [], []>} : vector<16x4xbf16>, vector<4x8xbf16>, vector<16x8xf32> -> vector<16x8xf32>
    %77 = arith.addf %71, %76 : vector<16x8xf32>
    %c0_26 = arith.constant 0 : index
    %c0_27 = arith.constant 0 : index
    %78 = vector.load %arg5[%c0_26, %c0_27] : memref<1x8xf32, #tpu.memory_space<vmem>>, vector<1x8xf32>
    %79 = vector.broadcast %78 : vector<1x8xf32> to vector<16x8xf32>
    %80 = arith.addf %77, %79 : vector<16x8xf32>
    %cst_28 = arith.constant 0.000000e+00 : f32
    %81 = vector.broadcast %cst_28 : f32 to vector<16x8xf32>
    %82 = arith.maximumf %80, %81 : vector<16x8xf32>
    %83 = vector.shape_cast %82 : vector<16x8xf32> to vector<1x16x8xf32>
    %cst_29 = arith.constant 0.000000e+00 : f32
    %84 = vector.broadcast %cst_29 : f32 to vector<1x2x8xf32>
    %85 = vector.extract_strided_slice %83 {offsets = [0, 0, 0], sizes = [1, 14, 8], strides = [1, 1, 1]} : vector<1x16x8xf32> to vector<1x14x8xf32>
    %86 = tpu.concatenate %84, %85 in 1 : vector<1x2x8xf32>, vector<1x14x8xf32> -> vector<1x16x8xf32>
    %87 = vector.shape_cast %86 : vector<1x16x8xf32> to vector<16x8xf32>
    %88 = arith.truncf %87 : vector<16x8xf32> to vector<16x8xbf16>
    %c0_30 = arith.constant 0 : index
    %c0_31 = arith.constant 0 : index
    %c0_32 = arith.constant 0 : index
    %89 = vector.load %arg6[%c0_30, %c0_31, %c0_32] : memref<3x8x8xbf16, #tpu.memory_space<vmem>>, vector<1x8x8xbf16>
    %90 = vector.shape_cast %89 : vector<1x8x8xbf16> to vector<8x8xbf16>
    %cst_33 = arith.constant dense<0.000000e+00> : vector<16x8xf32>
    %91 = tpu.matmul %88, %90, %cst_33 {dimension_numbers = #tpu.dot_dimension_numbers<[1], [0], [0], [1], [0, 0, 1, 1], [], []>} : vector<16x8xbf16>, vector<8x8xbf16>, vector<16x8xf32> -> vector<16x8xf32>
    %cst_34 = arith.constant 0.000000e+00 : f32
    %92 = vector.broadcast %cst_34 : f32 to vector<1x1x8xf32>
    %93 = vector.extract_strided_slice %83 {offsets = [0, 0, 0], sizes = [1, 15, 8], strides = [1, 1, 1]} : vector<1x16x8xf32> to vector<1x15x8xf32>
    %94 = tpu.concatenate %92, %93 in 1 : vector<1x1x8xf32>, vector<1x15x8xf32> -> vector<1x16x8xf32>
    %95 = vector.shape_cast %94 : vector<1x16x8xf32> to vector<16x8xf32>
    %96 = arith.truncf %95 : vector<16x8xf32> to vector<16x8xbf16>
    %c1_35 = arith.constant 1 : index
    %c0_36 = arith.constant 0 : index
    %c0_37 = arith.constant 0 : index
    %97 = vector.load %arg6[%c1_35, %c0_36, %c0_37] : memref<3x8x8xbf16, #tpu.memory_space<vmem>>, vector<1x8x8xbf16>
    %98 = vector.shape_cast %97 : vector<1x8x8xbf16> to vector<8x8xbf16>
    %cst_38 = arith.constant dense<0.000000e+00> : vector<16x8xf32>
    %99 = tpu.matmul %96, %98, %cst_38 {dimension_numbers = #tpu.dot_dimension_numbers<[1], [0], [0], [1], [0, 0, 1, 1], [], []>} : vector<16x8xbf16>, vector<8x8xbf16>, vector<16x8xf32> -> vector<16x8xf32>
    %100 = arith.addf %91, %99 : vector<16x8xf32>
    %101 = vector.shape_cast %83 : vector<1x16x8xf32> to vector<16x8xf32>
    %102 = arith.truncf %101 : vector<16x8xf32> to vector<16x8xbf16>
    %c2_39 = arith.constant 2 : index
    %c0_40 = arith.constant 0 : index
    %c0_41 = arith.constant 0 : index
    %103 = vector.load %arg6[%c2_39, %c0_40, %c0_41] : memref<3x8x8xbf16, #tpu.memory_space<vmem>>, vector<1x8x8xbf16>
    %104 = vector.shape_cast %103 : vector<1x8x8xbf16> to vector<8x8xbf16>
    %cst_42 = arith.constant dense<0.000000e+00> : vector<16x8xf32>
    %105 = tpu.matmul %102, %104, %cst_42 {dimension_numbers = #tpu.dot_dimension_numbers<[1], [0], [0], [1], [0, 0, 1, 1], [], []>} : vector<16x8xbf16>, vector<8x8xbf16>, vector<16x8xf32> -> vector<16x8xf32>
    %106 = arith.addf %100, %105 : vector<16x8xf32>
    %c0_43 = arith.constant 0 : index
    %c0_44 = arith.constant 0 : index
    %107 = vector.load %arg7[%c0_43, %c0_44] : memref<1x8xf32, #tpu.memory_space<vmem>>, vector<1x8xf32>
    %108 = vector.broadcast %107 : vector<1x8xf32> to vector<16x8xf32>
    %109 = arith.addf %106, %108 : vector<16x8xf32>
    %cst_45 = arith.constant 0.000000e+00 : f32
    %110 = vector.broadcast %cst_45 : f32 to vector<16x8xf32>
    %111 = arith.maximumf %109, %110 : vector<16x8xf32>
    %112 = vector.shape_cast %111 : vector<16x8xf32> to vector<1x16x8xf32>
    %cst_46 = arith.constant 1.000000e+00 : f32
    %113 = vector.broadcast %cst_46 : f32 to vector<1x16x1xf32>
    %114 = arith.addf %113, %54 : vector<1x16x1xf32>
    %115 = vector.broadcast %114 : vector<1x16x1xf32> to vector<1x16x4xf32>
    %116 = arith.mulf %115, %2 : vector<1x16x4xf32>
    %117 = vector.shape_cast %116 : vector<1x16x4xf32> to vector<16x4xf32>
    %118 = arith.truncf %117 : vector<16x4xf32> to vector<16x4xbf16>
    %c0_47 = arith.constant 0 : index
    %c0_48 = arith.constant 0 : index
    %119 = vector.load %arg8[%c0_47, %c0_48] : memref<4x8xbf16, #tpu.memory_space<vmem>>, vector<4x8xbf16>
    %cst_49 = arith.constant dense<0.000000e+00> : vector<16x8xf32>
    %120 = tpu.matmul %118, %119, %cst_49 {dimension_numbers = #tpu.dot_dimension_numbers<[1], [0], [0], [1], [0, 0, 1, 1], [], []>} : vector<16x4xbf16>, vector<4x8xbf16>, vector<16x8xf32> -> vector<16x8xf32>
    %c0_50 = arith.constant 0 : index
    %c0_51 = arith.constant 0 : index
    %121 = vector.load %arg9[%c0_50, %c0_51] : memref<1x8xf32, #tpu.memory_space<vmem>>, vector<1x8xf32>
    %122 = vector.broadcast %121 : vector<1x8xf32> to vector<16x8xf32>
    %123 = arith.addf %120, %122 : vector<16x8xf32>
    %124 = vector.shape_cast %123 : vector<16x8xf32> to vector<1x16x8xf32>
    %125 = arith.addf %112, %124 : vector<1x16x8xf32>
    %cst_52 = arith.constant 0.000000e+00 : f32
    %126 = vector.broadcast %cst_52 : f32 to vector<1x16x8xf32>
    %127 = arith.maximumf %125, %126 : vector<1x16x8xf32>
    %128 = vector.shape_cast %127 : vector<1x16x8xf32> to vector<16x8xf32>
    %129 = arith.truncf %128 : vector<16x8xf32> to vector<16x8xbf16>
    %c0_53 = arith.constant 0 : index
    %c0_54 = arith.constant 0 : index
    %130 = vector.load %arg10[%c0_53, %c0_54] : memref<8x58xbf16, #tpu.memory_space<vmem>>, vector<8x58xbf16>
    %cst_55 = arith.constant dense<0.000000e+00> : vector<16x58xf32>
    %131 = tpu.matmul %129, %130, %cst_55 {dimension_numbers = #tpu.dot_dimension_numbers<[1], [0], [0], [1], [0, 0, 1, 1], [], []>} : vector<16x8xbf16>, vector<8x58xbf16>, vector<16x58xf32> -> vector<16x58xf32>
    %c0_56 = arith.constant 0 : index
    %c0_57 = arith.constant 0 : index
    %132 = vector.load %arg11[%c0_56, %c0_57] : memref<1x58xf32, #tpu.memory_space<vmem>>, vector<1x58xf32>
    %133 = vector.broadcast %132 : vector<1x58xf32> to vector<16x58xf32>
    %134 = arith.addf %131, %133 : vector<16x58xf32>
    %135 = vector.extract_strided_slice %134 {offsets = [0, 0], sizes = [16, 25], strides = [1, 1]} : vector<16x58xf32> to vector<16x25xf32>
    %cst_58 = arith.constant 2.000000e-01 : f32
    %136 = vector.broadcast %cst_58 : f32 to vector<16x25xf32>
    %137 = arith.mulf %135, %136 : vector<16x25xf32>
    %138 = vector.shape_cast %137 : vector<16x25xf32> to vector<1x16x25xf32>
    %139 = vector.extract_strided_slice %134 {offsets = [0, 25], sizes = [16, 25], strides = [1, 1]} : vector<16x58xf32> to vector<16x25xf32>
    %140 = vector.shape_cast %139 : vector<16x25xf32> to vector<1x16x25xf32>
    %141 = vector.extract_strided_slice %134 {offsets = [0, 50], sizes = [16, 8], strides = [1, 1]} : vector<16x58xf32> to vector<16x8xf32>
    %142 = vector.shape_cast %141 : vector<16x8xf32> to vector<1x16x8xf32>
    %143 = arith.truncf %138 : vector<1x16x25xf32> to vector<1x16x25xbf16>
    %144 = arith.truncf %140 : vector<1x16x25xf32> to vector<1x16x25xbf16>
    "tpu.trace_start"() <{level = 10 : i32, message = "bqd,bkd->bqk"}> : () -> ()
    %cst_59 = arith.constant dense<0.000000e+00> : vector<1x16x16xf32>
    %145 = tpu.matmul %143, %144, %cst_59 {dimension_numbers = #tpu.dot_dimension_numbers<[2], [2], [1], [1], [0, 0, 0, 1, 1, 1], [0], [0]>} : vector<1x16x25xbf16>, vector<1x16x25xbf16>, vector<1x16x16xf32> -> vector<1x16x16xf32>
    "tpu.trace_stop"() : () -> ()
    %c0_i32_60 = arith.constant 0 : i32
    %146 = vector.broadcast %c0_i32_60 : i32 to vector<1x16xi32>
    %147 = arith.addi %1, %146 : vector<1x16xi32>
    %148 = vector.broadcast %147 : vector<1x16xi32> to vector<16x16xi32>
    %149 = vector.broadcast %0 : vector<16x1xi32> to vector<16x16xi32>
    %150 = arith.cmpi sgt, %148, %149 : vector<16x16xi32>
    %cst_61 = arith.constant 0xFF800000 : f32
    %151 = vector.shape_cast %150 : vector<16x16xi1> to vector<1x16x16xi1>
    %152 = vector.broadcast %cst_61 : f32 to vector<1x16x16xf32>
    %153 = arith.select %151, %152, %145 : vector<1x16x16xi1>, vector<1x16x16xf32>
    %cst_62 = arith.constant dense<0xFF800000> : vector<1x16xf32>
    %154 = vector.multi_reduction <maximumf>, %153, %cst_62 [1] : vector<1x16x16xf32> to vector<1x16xf32>
    %155 = vector.shape_cast %154 : vector<1x16xf32> to vector<1x1x16xf32>
    %156 = vector.broadcast %155 : vector<1x1x16xf32> to vector<1x16x16xf32>
    %157 = arith.subf %153, %156 : vector<1x16x16xf32>
    %158 = math.exp %157 : vector<1x16x16xf32>
    %cst_63 = arith.constant dense<0.000000e+00> : vector<1x16xf32>
    %159 = vector.multi_reduction <add>, %158, %cst_63 [1] : vector<1x16x16xf32> to vector<1x16xf32>
    %160 = vector.shape_cast %159 : vector<1x16xf32> to vector<1x1x16xf32>
    %161 = tpu.reciprocal %160 {approx = true} : vector<1x1x16xf32> -> vector<1x1x16xf32>
    %162 = vector.shape_cast %161 : vector<1x1x16xf32> to vector<1x16x1xf32>
    %163 = vector.broadcast %162 : vector<1x16x1xf32> to vector<1x16x8xf32>
    %164 = arith.mulf %142, %163 : vector<1x16x8xf32>
    %165 = tpu.concatenate %164, %162 in 2 : vector<1x16x8xf32>, vector<1x16x1xf32> -> vector<1x16x9xf32>
    %166 = arith.truncf %158 : vector<1x16x16xf32> to vector<1x16x16xbf16>
    %167 = arith.truncf %165 : vector<1x16x9xf32> to vector<1x16x9xbf16>
    "tpu.trace_start"() <{level = 10 : i32, message = "bqk,bkd->bqd"}> : () -> ()
    %cst_64 = arith.constant dense<0.000000e+00> : vector<1x16x9xf32>
    %168 = tpu.matmul %166, %167, %cst_64 {dimension_numbers = #tpu.dot_dimension_numbers<[2], [1], [1], [2], [0, 0, 0, 1, 1, 2], [0], [0]>} : vector<1x16x16xbf16>, vector<1x16x9xbf16>, vector<1x16x9xf32> -> vector<1x16x9xf32>
    "tpu.trace_stop"() : () -> ()
    %169 = vector.extract_strided_slice %168 {offsets = [0, 0, 0], sizes = [1, 16, 8], strides = [1, 1, 1]} : vector<1x16x9xf32> to vector<1x16x8xf32>
    %170 = vector.extract_strided_slice %168 {offsets = [0, 0, 8], sizes = [1, 16, 1], strides = [1, 1, 1]} : vector<1x16x9xf32> to vector<1x16x1xf32>
    %cst_65 = arith.constant dense<0xFF800000> : vector<1x1xf32>
    %171 = vector.multi_reduction <maximumf>, %170, %cst_65 [1] : vector<1x16x1xf32> to vector<1x1xf32>
    %172 = vector.shape_cast %171 : vector<1x1xf32> to vector<1x1x1xf32>
    %173 = vector.broadcast %172 : vector<1x1x1xf32> to vector<1x16x1xf32>
    %174 = arith.subf %170, %173 : vector<1x16x1xf32>
    %175 = math.exp %174 : vector<1x16x1xf32>
    %cst_66 = arith.constant dense<0.000000e+00> : vector<1x1xf32>
    %176 = vector.multi_reduction <add>, %175, %cst_66 [1] : vector<1x16x1xf32> to vector<1x1xf32>
    %177 = vector.shape_cast %176 : vector<1x1xf32> to vector<1x1x1xf32>
    %178 = vector.broadcast %177 : vector<1x1x1xf32> to vector<1x16x1xf32>
    %179 = arith.divf %175, %178 : vector<1x16x1xf32>
    %cst_67 = arith.constant 0.000000e+00 : f32
    %180 = vector.broadcast %cst_67 : f32 to vector<1x4x8xf32>
    %181 = vector.extract_strided_slice %169 {offsets = [0, 0, 0], sizes = [1, 12, 8], strides = [1, 1, 1]} : vector<1x16x8xf32> to vector<1x12x8xf32>
    %182 = tpu.concatenate %180, %181 in 1 : vector<1x4x8xf32>, vector<1x12x8xf32> -> vector<1x16x8xf32>
    %183 = vector.shape_cast %182 : vector<1x16x8xf32> to vector<16x8xf32>
    %184 = arith.truncf %183 : vector<16x8xf32> to vector<16x8xbf16>
    %c0_68 = arith.constant 0 : index
    %c0_69 = arith.constant 0 : index
    %c0_70 = arith.constant 0 : index
    %185 = vector.load %arg12[%c0_68, %c0_69, %c0_70] : memref<3x8x8xbf16, #tpu.memory_space<vmem>>, vector<1x8x8xbf16>
    %186 = vector.shape_cast %185 : vector<1x8x8xbf16> to vector<8x8xbf16>
    %cst_71 = arith.constant dense<0.000000e+00> : vector<16x8xf32>
    %187 = tpu.matmul %184, %186, %cst_71 {dimension_numbers = #tpu.dot_dimension_numbers<[1], [0], [0], [1], [0, 0, 1, 1], [], []>} : vector<16x8xbf16>, vector<8x8xbf16>, vector<16x8xf32> -> vector<16x8xf32>
    %cst_72 = arith.constant 0.000000e+00 : f32
    %188 = vector.broadcast %cst_72 : f32 to vector<1x2x8xf32>
    %189 = vector.extract_strided_slice %169 {offsets = [0, 0, 0], sizes = [1, 14, 8], strides = [1, 1, 1]} : vector<1x16x8xf32> to vector<1x14x8xf32>
    %190 = tpu.concatenate %188, %189 in 1 : vector<1x2x8xf32>, vector<1x14x8xf32> -> vector<1x16x8xf32>
    %191 = vector.shape_cast %190 : vector<1x16x8xf32> to vector<16x8xf32>
    %192 = arith.truncf %191 : vector<16x8xf32> to vector<16x8xbf16>
    %c1_73 = arith.constant 1 : index
    %c0_74 = arith.constant 0 : index
    %c0_75 = arith.constant 0 : index
    %193 = vector.load %arg12[%c1_73, %c0_74, %c0_75] : memref<3x8x8xbf16, #tpu.memory_space<vmem>>, vector<1x8x8xbf16>
    %194 = vector.shape_cast %193 : vector<1x8x8xbf16> to vector<8x8xbf16>
    %cst_76 = arith.constant dense<0.000000e+00> : vector<16x8xf32>
    %195 = tpu.matmul %192, %194, %cst_76 {dimension_numbers = #tpu.dot_dimension_numbers<[1], [0], [0], [1], [0, 0, 1, 1], [], []>} : vector<16x8xbf16>, vector<8x8xbf16>, vector<16x8xf32> -> vector<16x8xf32>
    %196 = arith.addf %187, %195 : vector<16x8xf32>
    %197 = vector.shape_cast %169 : vector<1x16x8xf32> to vector<16x8xf32>
    %198 = arith.truncf %197 : vector<16x8xf32> to vector<16x8xbf16>
    %c2_77 = arith.constant 2 : index
    %c0_78 = arith.constant 0 : index
    %c0_79 = arith.constant 0 : index
    %199 = vector.load %arg12[%c2_77, %c0_78, %c0_79] : memref<3x8x8xbf16, #tpu.memory_space<vmem>>, vector<1x8x8xbf16>
    %200 = vector.shape_cast %199 : vector<1x8x8xbf16> to vector<8x8xbf16>
    %cst_80 = arith.constant dense<0.000000e+00> : vector<16x8xf32>
    %201 = tpu.matmul %198, %200, %cst_80 {dimension_numbers = #tpu.dot_dimension_numbers<[1], [0], [0], [1], [0, 0, 1, 1], [], []>} : vector<16x8xbf16>, vector<8x8xbf16>, vector<16x8xf32> -> vector<16x8xf32>
    %202 = arith.addf %196, %201 : vector<16x8xf32>
    %c0_81 = arith.constant 0 : index
    %c0_82 = arith.constant 0 : index
    %203 = vector.load %arg13[%c0_81, %c0_82] : memref<1x8xf32, #tpu.memory_space<vmem>>, vector<1x8xf32>
    %204 = vector.broadcast %203 : vector<1x8xf32> to vector<16x8xf32>
    %205 = arith.addf %202, %204 : vector<16x8xf32>
    %cst_83 = arith.constant 0.000000e+00 : f32
    %206 = vector.broadcast %cst_83 : f32 to vector<16x8xf32>
    %207 = arith.maximumf %205, %206 : vector<16x8xf32>
    %208 = vector.shape_cast %207 : vector<16x8xf32> to vector<1x16x8xf32>
    %cst_84 = arith.constant 0.000000e+00 : f32
    %209 = vector.broadcast %cst_84 : f32 to vector<1x4x8xf32>
    %210 = vector.extract_strided_slice %208 {offsets = [0, 0, 0], sizes = [1, 12, 8], strides = [1, 1, 1]} : vector<1x16x8xf32> to vector<1x12x8xf32>
    %211 = tpu.concatenate %209, %210 in 1 : vector<1x4x8xf32>, vector<1x12x8xf32> -> vector<1x16x8xf32>
    %212 = vector.shape_cast %211 : vector<1x16x8xf32> to vector<16x8xf32>
    %213 = arith.truncf %212 : vector<16x8xf32> to vector<16x8xbf16>
    %c0_85 = arith.constant 0 : index
    %c0_86 = arith.constant 0 : index
    %c0_87 = arith.constant 0 : index
    %214 = vector.load %arg14[%c0_85, %c0_86, %c0_87] : memref<3x8x8xbf16, #tpu.memory_space<vmem>>, vector<1x8x8xbf16>
    %215 = vector.shape_cast %214 : vector<1x8x8xbf16> to vector<8x8xbf16>
    %cst_88 = arith.constant dense<0.000000e+00> : vector<16x8xf32>
    %216 = tpu.matmul %213, %215, %cst_88 {dimension_numbers = #tpu.dot_dimension_numbers<[1], [0], [0], [1], [0, 0, 1, 1], [], []>} : vector<16x8xbf16>, vector<8x8xbf16>, vector<16x8xf32> -> vector<16x8xf32>
    %cst_89 = arith.constant 0.000000e+00 : f32
    %217 = vector.broadcast %cst_89 : f32 to vector<1x2x8xf32>
    %218 = vector.extract_strided_slice %208 {offsets = [0, 0, 0], sizes = [1, 14, 8], strides = [1, 1, 1]} : vector<1x16x8xf32> to vector<1x14x8xf32>
    %219 = tpu.concatenate %217, %218 in 1 : vector<1x2x8xf32>, vector<1x14x8xf32> -> vector<1x16x8xf32>
    %220 = vector.shape_cast %219 : vector<1x16x8xf32> to vector<16x8xf32>
    %221 = arith.truncf %220 : vector<16x8xf32> to vector<16x8xbf16>
    %c1_90 = arith.constant 1 : index
    %c0_91 = arith.constant 0 : index
    %c0_92 = arith.constant 0 : index
    %222 = vector.load %arg14[%c1_90, %c0_91, %c0_92] : memref<3x8x8xbf16, #tpu.memory_space<vmem>>, vector<1x8x8xbf16>
    %223 = vector.shape_cast %222 : vector<1x8x8xbf16> to vector<8x8xbf16>
    %cst_93 = arith.constant dense<0.000000e+00> : vector<16x8xf32>
    %224 = tpu.matmul %221, %223, %cst_93 {dimension_numbers = #tpu.dot_dimension_numbers<[1], [0], [0], [1], [0, 0, 1, 1], [], []>} : vector<16x8xbf16>, vector<8x8xbf16>, vector<16x8xf32> -> vector<16x8xf32>
    %225 = arith.addf %216, %224 : vector<16x8xf32>
    %226 = vector.shape_cast %208 : vector<1x16x8xf32> to vector<16x8xf32>
    %227 = arith.truncf %226 : vector<16x8xf32> to vector<16x8xbf16>
    %c2_94 = arith.constant 2 : index
    %c0_95 = arith.constant 0 : index
    %c0_96 = arith.constant 0 : index
    %228 = vector.load %arg14[%c2_94, %c0_95, %c0_96] : memref<3x8x8xbf16, #tpu.memory_space<vmem>>, vector<1x8x8xbf16>
    %229 = vector.shape_cast %228 : vector<1x8x8xbf16> to vector<8x8xbf16>
    %cst_97 = arith.constant dense<0.000000e+00> : vector<16x8xf32>
    %230 = tpu.matmul %227, %229, %cst_97 {dimension_numbers = #tpu.dot_dimension_numbers<[1], [0], [0], [1], [0, 0, 1, 1], [], []>} : vector<16x8xbf16>, vector<8x8xbf16>, vector<16x8xf32> -> vector<16x8xf32>
    %231 = arith.addf %225, %230 : vector<16x8xf32>
    %c0_98 = arith.constant 0 : index
    %c0_99 = arith.constant 0 : index
    %232 = vector.load %arg15[%c0_98, %c0_99] : memref<1x8xf32, #tpu.memory_space<vmem>>, vector<1x8xf32>
    %233 = vector.broadcast %232 : vector<1x8xf32> to vector<16x8xf32>
    %234 = arith.addf %231, %233 : vector<16x8xf32>
    %cst_100 = arith.constant 0.000000e+00 : f32
    %235 = vector.broadcast %cst_100 : f32 to vector<16x8xf32>
    %236 = arith.maximumf %234, %235 : vector<16x8xf32>
    %237 = vector.shape_cast %236 : vector<16x8xf32> to vector<1x16x8xf32>
    %cst_101 = arith.constant 1.000000e+00 : f32
    %238 = vector.broadcast %cst_101 : f32 to vector<1x16x1xf32>
    %239 = arith.addf %238, %179 : vector<1x16x1xf32>
    %240 = vector.broadcast %239 : vector<1x16x1xf32> to vector<1x16x8xf32>
    %241 = arith.mulf %240, %127 : vector<1x16x8xf32>
    %242 = arith.addf %237, %241 : vector<1x16x8xf32>
    %cst_102 = arith.constant 0.000000e+00 : f32
    %243 = vector.broadcast %cst_102 : f32 to vector<1x16x8xf32>
    %244 = arith.maximumf %242, %243 : vector<1x16x8xf32>
    %245 = vector.extract_strided_slice %244 {offsets = [0, 15, 0], sizes = [1, 1, 8], strides = [1, 1, 1]} : vector<1x16x8xf32> to vector<1x1x8xf32>
    %246 = vector.shape_cast %245 : vector<1x1x8xf32> to vector<1x8xf32>
    %247 = arith.truncf %246 : vector<1x8xf32> to vector<1x8xbf16>
    %c0_103 = arith.constant 0 : index
    %c0_104 = arith.constant 0 : index
    %248 = vector.load %arg16[%c0_103, %c0_104] : memref<8x10xbf16, #tpu.memory_space<vmem>>, vector<8x10xbf16>
    %cst_105 = arith.constant dense<0.000000e+00> : vector<1x10xf32>
    %249 = tpu.matmul %247, %248, %cst_105 {dimension_numbers = #tpu.dot_dimension_numbers<[1], [0], [0], [1], [0, 0, 1, 1], [], []>} : vector<1x8xbf16>, vector<8x10xbf16>, vector<1x10xf32> -> vector<1x10xf32>
    %c0_106 = arith.constant 0 : index
    %c0_107 = arith.constant 0 : index
    %250 = vector.load %arg17[%c0_106, %c0_107] : memref<1x10xf32, #tpu.memory_space<vmem>>, vector<1x10xf32>
    %251 = arith.addf %249, %250 : vector<1x10xf32>
    %cst_108 = arith.constant dense<0xFF800000> : vector<1xf32>
    %252 = vector.multi_reduction <maximumf>, %251, %cst_108 [1] : vector<1x10xf32> to vector<1xf32>
    %253 = vector.shape_cast %252 : vector<1xf32> to vector<1x1xf32>
    %254 = vector.broadcast %253 : vector<1x1xf32> to vector<1x10xf32>
    %255 = arith.subf %251, %254 : vector<1x10xf32>
    %256 = math.exp %255 : vector<1x10xf32>
    %cst_109 = arith.constant dense<0.000000e+00> : vector<1xf32>
    %257 = vector.multi_reduction <add>, %256, %cst_109 [1] : vector<1x10xf32> to vector<1xf32>
    %258 = vector.shape_cast %257 : vector<1xf32> to vector<1x1xf32>
    %259 = math.log %258 : vector<1x1xf32>
    %260 = vector.broadcast %259 : vector<1x1xf32> to vector<1x10xf32>
    %261 = arith.subf %255, %260 : vector<1x10xf32>
    %c0_110 = arith.constant 0 : index
    %c0_111 = arith.constant 0 : index
    %c0_112 = arith.constant 0 : index
    %262 = vector.load %arg18[%c0_110, %c0_111, %c0_112] : memref<1x1x10xf32, #tpu.memory_space<vmem>>, vector<1x1x10xf32>
    %263 = vector.shape_cast %262 : vector<1x1x10xf32> to vector<1x10xf32>
    %264 = vector.shape_cast %261 : vector<1x10xf32> to vector<1x1x10xf32>
    tpu.vector_store %arg18[%c0_110, %c0_111, %c0_112], %264 {strides = array<i32>} : memref<1x1x10xf32, #tpu.memory_space<vmem>>, vector<1x1x10xf32>,
    return
  }
  func.func @transform_0(%arg0: i32) -> (i32, i32, i32) {
    %c0_i32 = arith.constant 0 : i32
    %c0_i32_0 = arith.constant 0 : i32
    %c0_i32_1 = arith.constant 0 : i32
    return %arg0, %c0_i32, %c0_i32_0 : i32, i32, i32
  }
  func.func @transform_1(%arg0: i32) -> (i32, i32) {
    %c0_i32 = arith.constant 0 : i32
    %c0_i32_0 = arith.constant 0 : i32
    %c0_i32_1 = arith.constant 0 : i32
    return %c0_i32, %c0_i32_0 : i32, i32
  }
  func.func @transform_2(%arg0: i32) -> (i32, i32) {
    %c0_i32 = arith.constant 0 : i32
    %c0_i32_0 = arith.constant 0 : i32
    %c0_i32_1 = arith.constant 0 : i32
    return %c0_i32, %c0_i32_0 : i32, i32
  }
  func.func @transform_3(%arg0: i32) -> (i32, i32, i32) {
    %c0_i32 = arith.constant 0 : i32
    %c0_i32_0 = arith.constant 0 : i32
    %c0_i32_1 = arith.constant 0 : i32
    %c0_i32_2 = arith.constant 0 : i32
    return %c0_i32, %c0_i32_0, %c0_i32_1 : i32, i32, i32
  }
  func.func @transform_4(%arg0: i32) -> (i32, i32) {
    %c0_i32 = arith.constant 0 : i32
    %c0_i32_0 = arith.constant 0 : i32
    %c0_i32_1 = arith.constant 0 : i32
    return %c0_i32, %c0_i32_0 : i32, i32
  }
  func.func @transform_5(%arg0: i32) -> (i32, i32, i32) {
    %c0_i32 = arith.constant 0 : i32
    %c0_i32_0 = arith.constant 0 : i32
    %c0_i32_1 = arith.constant 0 : i32
    %c0_i32_2 = arith.constant 0 : i32
    return %c0_i32, %c0_i32_0, %c0_i32_1 : i32, i32, i32
  }
  func.func @transform_6(%arg0: i32) -> (i32, i32) {
    %c0_i32 = arith.constant 0 : i32
    %c0_i32_0 = arith.constant 0 : i32
    %c0_i32_1 = arith.constant 0 : i32
    return %c0_i32, %c0_i32_0 : i32, i32
  }
  func.func @transform_7(%arg0: i32) -> (i32, i32) {
    %c0_i32 = arith.constant 0 : i32
    %c0_i32_0 = arith.constant 0 : i32
    %c0_i32_1 = arith.constant 0 : i32
    return %c0_i32, %c0_i32_0 : i32, i32
  }
  func.func @transform_8(%arg0: i32) -> (i32, i32) {
    %c0_i32 = arith.constant 0 : i32
    %c0_i32_0 = arith.constant 0 : i32
    %c0_i32_1 = arith.constant 0 : i32
    return %c0_i32, %c0_i32_0 : i32, i32
  }
  func.func @transform_9(%arg0: i32) -> (i32, i32) {
    %c0_i32 = arith.constant 0 : i32
    %c0_i32_0 = arith.constant 0 : i32
    %c0_i32_1 = arith.constant 0 : i32
    return %c0_i32, %c0_i32_0 : i32, i32
  }
  func.func @transform_10(%arg0: i32) -> (i32, i32) {
    %c0_i32 = arith.constant 0 : i32
    %c0_i32_0 = arith.constant 0 : i32
    %c0_i32_1 = arith.constant 0 : i32
    return %c0_i32, %c0_i32_0 : i32, i32
  }
  func.func @transform_11(%arg0: i32) -> (i32, i32, i32) {
    %c0_i32 = arith.constant 0 : i32
    %c0_i32_0 = arith.constant 0 : i32
    %c0_i32_1 = arith.constant 0 : i32
    %c0_i32_2 = arith.constant 0 : i32
    return %c0_i32, %c0_i32_0, %c0_i32_1 : i32, i32, i32
  }
  func.func @transform_12(%arg0: i32) -> (i32, i32) {
    %c0_i32 = arith.constant 0 : i32
    %c0_i32_0 = arith.constant 0 : i32
    %c0_i32_1 = arith.constant 0 : i32
    return %c0_i32, %c0_i32_0 : i32, i32
  }
  func.func @transform_13(%arg0: i32) -> (i32, i32, i32) {
    %c0_i32 = arith.constant 0 : i32
    %c0_i32_0 = arith.constant 0 : i32
    %c0_i32_1 = arith.constant 0 : i32
    %c0_i32_2 = arith.constant 0 : i32
    return %c0_i32, %c0_i32_0, %c0_i32_1 : i32, i32, i32
  }
  func.func @transform_14(%arg0: i32) -> (i32, i32) {
    %c0_i32 = arith.constant 0 : i32
    %c0_i32_0 = arith.constant 0 : i32
    %c0_i32_1 = arith.constant 0 : i32
    return %c0_i32, %c0_i32_0 : i32, i32
  }
  func.func @transform_15(%arg0: i32) -> (i32, i32) {
    %c0_i32 = arith.constant 0 : i32
    %c0_i32_0 = arith.constant 0 : i32
    %c0_i32_1 = arith.constant 0 : i32
    return %c0_i32, %c0_i32_0 : i32, i32
  }
  func.func @transform_16(%arg0: i32) -> (i32, i32) {
    %c0_i32 = arith.constant 0 : i32
    %c0_i32_0 = arith.constant 0 : i32
    %c0_i32_1 = arith.constant 0 : i32
    return %c0_i32, %c0_i32_0 : i32, i32
  }
  func.func @transform_17(%arg0: i32) -> (i32, i32, i32) {
    %c0_i32 = arith.constant 0 : i32
    %c0_i32_0 = arith.constant 0 : i32
    %c0_i32_1 = arith.constant 0 : i32
    return %arg0, %c0_i32, %c0_i32_0 : i32, i32, i32
  }
}

module attributes {stable_mosaic.version = 11 : i64} {
  func.func @_tcan_fused_kernel(%arg0: i32, %arg1: memref<1x16x4xf32, #tpu.memory_space<vmem>>, %arg2: memref<4x54xbf16, #tpu.memory_space<vmem>>, %arg3: memref<1x54xf32, #tpu.memory_space<vmem>>, %arg4: memref<3x4x8xbf16, #tpu.memory_space<vmem>>, %arg5: memref<1x8xf32, #tpu.memory_space<vmem>>, %arg6: memref<3x8x8xbf16, #tpu.memory_space<vmem>>, %arg7: memref<1x8xf32, #tpu.memory_space<vmem>>, %arg8: memref<4x8xbf16, #tpu.memory_space<vmem>>, %arg9: memref<1x8xf32, #tpu.memory_space<vmem>>, %arg10: memref<8x58xbf16, #tpu.memory_space<vmem>>, %arg11: memref<1x58xf32, #tpu.memory_space<vmem>>, %arg12: memref<3x8x8xbf16, #tpu.memory_space<vmem>>, %arg13: memref<1x8xf32, #tpu.memory_space<vmem>>, %arg14: memref<3x8x8xbf16, #tpu.memory_space<vmem>>, %arg15: memref<1x8xf32, #tpu.memory_space<vmem>>, %arg16: memref<8x10xbf16, #tpu.memory_space<vmem>>, %arg17: memref<1x10xf32, #tpu.memory_space<vmem>>, %arg18: memref<1x1x10xf32, #tpu.memory_space<vmem>>) attributes {dimension_semantics = [#tpu.dimension_semantics<parallel>], iteration_bounds = array<i64: 2>, scalar_prefetch = 0 : i64, scratch_operands = 0 : i64, tpu.core_type = #tpu.core_type<tc>, window_params = [{transform_indices = @transform_0, window_bounds = array<i64: 1, 16, 4>}, {pipeline_mode = #tpu.pipeline_mode<synchronous>, transform_indices = @transform_1, window_bounds = array<i64: 4, 54>}, {pipeline_mode = #tpu.pipeline_mode<synchronous>, transform_indices = @transform_2, window_bounds = array<i64: 1, 54>}, {pipeline_mode = #tpu.pipeline_mode<synchronous>, transform_indices = @transform_3, window_bounds = array<i64: 3, 4, 8>}, {pipeline_mode = #tpu.pipeline_mode<synchronous>, transform_indices = @transform_4, window_bounds = array<i64: 1, 8>}, {pipeline_mode = #tpu.pipeline_mode<synchronous>, transform_indices = @transform_5, window_bounds = array<i64: 3, 8, 8>}, {pipeline_mode = #tpu.pipeline_mode<synchronous>, transform_indices = @transform_6, window_bounds = array<i64: 1, 8>}, {pipeline_mode = #tpu.pipeline_mode<synchronous>, transform_indices = @transform_7, window_bounds = array<i64: 4, 8>}, {pipeline_mode = #tpu.pipeline_mode<synchronous>, transform_indices = @transform_8, window_bounds = array<i64: 1, 8>}, {pipeline_mode = #tpu.pipeline_mode<synchronous>, transform_indices = @transform_9, window_bounds = array<i64: 8, 58>}, {pipeline_mode = #tpu.pipeline_mode<synchronous>, transform_indices = @transform_10, window_bounds = array<i64: 1, 58>}, {pipeline_mode = #tpu.pipeline_mode<synchronous>, transform_indices = @transform_11, window_bounds = array<i64: 3, 8, 8>}, {pipeline_mode = #tpu.pipeline_mode<synchronous>, transform_indices = @transform_12, window_bounds = array<i64: 1, 8>}, {pipeline_mode = #tpu.pipeline_mode<synchronous>, transform_indices = @transform_13, window_bounds = array<i64: 3, 8, 8>}, {pipeline_mode = #tpu.pipeline_mode<synchronous>, transform_indices = @transform_14, window_bounds = array<i64: 1, 8>}, {pipeline_mode = #tpu.pipeline_mode<synchronous>, transform_indices = @transform_15, window_bounds = array<i64: 8, 10>}, {pipeline_mode = #tpu.pipeline_mode<synchronous>, transform_indices = @transform_16, window_bounds = array<i64: 1, 10>}, {transform_indices = @transform_17, window_bounds = array<i64: 1, 1, 10>}]} {
    %0 = tpu.iota {dimensions = array<i32: 0>} : vector<16x1xi32>
    %1 = tpu.iota {dimensions = array<i32: 1>} : vector<1x16xi32>
    %c0 = arith.constant 0 : index
    %c0_0 = arith.constant 0 : index
    %c0_1 = arith.constant 0 : index
    %2 = vector.load %arg1[%c0, %c0_0, %c0_1] : memref<1x16x4xf32, #tpu.memory_space<vmem>>, vector<1x16x4xf32>
    %3 = vector.shape_cast %2 : vector<1x16x4xf32> to vector<16x4xf32>
    %4 = arith.truncf %3 : vector<16x4xf32> to vector<16x4xbf16>
    %c0_2 = arith.constant 0 : index
    %c0_3 = arith.constant 0 : index
    %5 = vector.load %arg2[%c0_2, %c0_3] : memref<4x54xbf16, #tpu.memory_space<vmem>>, vector<4x54xbf16>
    %cst = arith.constant dense<0.000000e+00> : vector<16x54xf32>
    %6 = tpu.matmul %4, %5, %cst {dimension_numbers = #tpu.dot_dimension_numbers<[1], [0], [0], [1], [0, 0, 1, 1], [], []>} : vector<16x4xbf16>, vector<4x54xbf16>, vector<16x54xf32> -> vector<16x54xf32>
    %c0_4 = arith.constant 0 : index
    %c0_5 = arith.constant 0 : index
    %7 = vector.load %arg3[%c0_4, %c0_5] : memref<1x54xf32, #tpu.memory_space<vmem>>, vector<1x54xf32>
    %8 = vector.broadcast %7 : vector<1x54xf32> to vector<16x54xf32>
    %9 = arith.addf %6, %8 : vector<16x54xf32>
    %10 = vector.extract_strided_slice %9 {offsets = [0, 0], sizes = [16, 25], strides = [1, 1]} : vector<16x54xf32> to vector<16x25xf32>
    %cst_6 = arith.constant 2.000000e-01 : f32
    %11 = vector.broadcast %cst_6 : f32 to vector<16x25xf32>
    %12 = arith.mulf %10, %11 : vector<16x25xf32>
    %13 = vector.shape_cast %12 : vector<16x25xf32> to vector<1x16x25xf32>
    %14 = vector.extract_strided_slice %9 {offsets = [0, 25], sizes = [16, 25], strides = [1, 1]} : vector<16x54xf32> to vector<16x25xf32>
    %15 = vector.shape_cast %14 : vector<16x25xf32> to vector<1x16x25xf32>
    %16 = vector.extract_strided_slice %9 {offsets = [0, 50], sizes = [16, 4], strides = [1, 1]} : vector<16x54xf32> to vector<16x4xf32>
    %17 = vector.shape_cast %16 : vector<16x4xf32> to vector<1x16x4xf32>
    %18 = arith.truncf %13 : vector<1x16x25xf32> to vector<1x16x25xbf16>
    %19 = arith.truncf %15 : vector<1x16x25xf32> to vector<1x16x25xbf16>
    "tpu.trace_start"() <{level = 10 : i32, message = "bqd,bkd->bqk"}> : () -> ()
    %cst_7 = arith.constant dense<0.000000e+00> : vector<1x16x16xf32>
    %20 = tpu.matmul %18, %19, %cst_7 {dimension_numbers = #tpu.dot_dimension_numbers<[2], [2], [1], [1], [0, 0, 0, 1, 1, 1], [0], [0]>} : vector<1x16x25xbf16>, vector<1x16x25xbf16>, vector<1x16x16xf32> -> vector<1x16x16xf32>
    "tpu.trace_stop"() : () -> ()
    %c0_i32 = arith.constant 0 : i32
    %21 = vector.broadcast %c0_i32 : i32 to vector<1x16xi32>
    %22 = arith.addi %1, %21 : vector<1x16xi32>
    %23 = vector.broadcast %22 : vector<1x16xi32> to vector<16x16xi32>
    %24 = vector.broadcast %0 : vector<16x1xi32> to vector<16x16xi32>
    %25 = arith.cmpi sgt, %23, %24 : vector<16x16xi32>
    %cst_8 = arith.constant 0xFF800000 : f32
    %26 = vector.shape_cast %25 : vector<16x16xi1> to vector<1x16x16xi1>
    %27 = vector.broadcast %cst_8 : f32 to vector<1x16x16xf32>
    %28 = arith.select %26, %27, %20 : vector<1x16x16xi1>, vector<1x16x16xf32>
    %cst_9 = arith.constant dense<0xFF800000> : vector<1x16xf32>
    %29 = vector.multi_reduction <maximumf>, %28, %cst_9 [1] : vector<1x16x16xf32> to vector<1x16xf32>
    %30 = vector.shape_cast %29 : vector<1x16xf32> to vector<1x1x16xf32>
    %31 = vector.broadcast %30 : vector<1x1x16xf32> to vector<1x16x16xf32>
    %32 = arith.subf %28, %31 : vector<1x16x16xf32>
    %33 = math.exp %32 : vector<1x16x16xf32>
    %cst_10 = arith.constant dense<0.000000e+00> : vector<1x16xf32>
    %34 = vector.multi_reduction <add>, %33, %cst_10 [1] : vector<1x16x16xf32> to vector<1x16xf32>
    %35 = vector.shape_cast %34 : vector<1x16xf32> to vector<1x1x16xf32>
    %36 = tpu.reciprocal %35 {approx = true} : vector<1x1x16xf32> -> vector<1x1x16xf32>
    %37 = vector.shape_cast %36 : vector<1x1x16xf32> to vector<1x16x1xf32>
    %38 = vector.broadcast %37 : vector<1x16x1xf32> to vector<1x16x4xf32>
    %39 = arith.mulf %17, %38 : vector<1x16x4xf32>
    %40 = tpu.concatenate %39, %37 in 2 : vector<1x16x4xf32>, vector<1x16x1xf32> -> vector<1x16x5xf32>
    %41 = arith.truncf %33 : vector<1x16x16xf32> to vector<1x16x16xbf16>
    %42 = arith.truncf %40 : vector<1x16x5xf32> to vector<1x16x5xbf16>
    "tpu.trace_start"() <{level = 10 : i32, message = "bqk,bkd->bqd"}> : () -> ()
    %cst_11 = arith.constant dense<0.000000e+00> : vector<1x16x5xf32>
    %43 = tpu.matmul %41, %42, %cst_11 {dimension_numbers = #tpu.dot_dimension_numbers<[2], [1], [1], [2], [0, 0, 0, 1, 1, 2], [0], [0]>} : vector<1x16x16xbf16>, vector<1x16x5xbf16>, vector<1x16x5xf32> -> vector<1x16x5xf32>
    "tpu.trace_stop"() : () -> ()
    %44 = vector.extract_strided_slice %43 {offsets = [0, 0, 0], sizes = [1, 16, 4], strides = [1, 1, 1]} : vector<1x16x5xf32> to vector<1x16x4xf32>
    %45 = vector.extract_strided_slice %43 {offsets = [0, 0, 4], sizes = [1, 16, 1], strides = [1, 1, 1]} : vector<1x16x5xf32> to vector<1x16x1xf32>
    %cst_12 = arith.constant dense<0xFF800000> : vector<1x1xf32>
    %46 = vector.multi_reduction <maximumf>, %45, %cst_12 [1] : vector<1x16x1xf32> to vector<1x1xf32>
    %47 = vector.shape_cast %46 : vector<1x1xf32> to vector<1x1x1xf32>
    %48 = vector.broadcast %47 : vector<1x1x1xf32> to vector<1x16x1xf32>
    %49 = arith.subf %45, %48 : vector<1x16x1xf32>
    %50 = math.exp %49 : vector<1x16x1xf32>
    %cst_13 = arith.constant dense<0.000000e+00> : vector<1x1xf32>
    %51 = vector.multi_reduction <add>, %50, %cst_13 [1] : vector<1x16x1xf32> to vector<1x1xf32>
    %52 = vector.shape_cast %51 : vector<1x1xf32> to vector<1x1x1xf32>
    %53 = vector.broadcast %52 : vector<1x1x1xf32> to vector<1x16x1xf32>
    %54 = arith.divf %50, %53 : vector<1x16x1xf32>
    %cst_14 = arith.constant 0.000000e+00 : f32
    %55 = vector.broadcast %cst_14 : f32 to vector<1x2x4xf32>
    %56 = vector.extract_strided_slice %44 {offsets = [0, 0, 0], sizes = [1, 14, 4], strides = [1, 1, 1]} : vector<1x16x4xf32> to vector<1x14x4xf32>
    %57 = tpu.concatenate %55, %56 in 1 : vector<1x2x4xf32>, vector<1x14x4xf32> -> vector<1x16x4xf32>
    %58 = vector.shape_cast %57 : vector<1x16x4xf32> to vector<16x4xf32>
    %59 = arith.truncf %58 : vector<16x4xf32> to vector<16x4xbf16>
    %c0_15 = arith.constant 0 : index
    %c0_16 = arith.constant 0 : index
    %c0_17 = arith.constant 0 : index
    %60 = vector.load %arg4[%c0_15, %c0_16, %c0_17] : memref<3x4x8xbf16, #tpu.memory_space<vmem>>, vector<1x4x8xbf16>
    %61 = vector.shape_cast %60 : vector<1x4x8xbf16> to vector<4x8xbf16>
    %cst_18 = arith.constant dense<0.000000e+00> : vector<16x8xf32>
    %62 = tpu.matmul %59, %61, %cst_18 {dimension_numbers = #tpu.dot_dimension_numbers<[1], [0], [0], [1], [0, 0, 1, 1], [], []>} : vector<16x4xbf16>, vector<4x8xbf16>, vector<16x8xf32> -> vector<16x8xf32>
    %cst_19 = arith.constant 0.000000e+00 : f32
    %63 = vector.broadcast %cst_19 : f32 to vector<1x1x4xf32>
    %64 = vector.extract_strided_slice %44 {offsets = [0, 0, 0], sizes = [1, 15, 4], strides = [1, 1, 1]} : vector<1x16x4xf32> to vector<1x15x4xf32>
    %65 = tpu.concatenate %63, %64 in 1 : vector<1x1x4xf32>, vector<1x15x4xf32> -> vector<1x16x4xf32>
    %66 = vector.shape_cast %65 : vector<1x16x4xf32> to vector<16x4xf32>
    %67 = arith.truncf %66 : vector<16x4xf32> to vector<16x4xbf16>
    %c1 = arith.constant 1 : index
    %c0_20 = arith.constant 0 : index
    %c0_21 = arith.constant 0 : index
    %68 = vector.load %arg4[%c1, %c0_20, %c0_21] : memref<3x4x8xbf16, #tpu.memory_space<vmem>>, vector<1x4x8xbf16>
    %69 = vector.shape_cast %68 : vector<1x4x8xbf16> to vector<4x8xbf16>
    %cst_22 = arith.constant dense<0.000000e+00> : vector<16x8xf32>
    %70 = tpu.matmul %67, %69, %cst_22 {dimension_numbers = #tpu.dot_dimension_numbers<[1], [0], [0], [1], [0, 0, 1, 1], [], []>} : vector<16x4xbf16>, vector<4x8xbf16>, vector<16x8xf32> -> vector<16x8xf32>
    %71 = arith.addf %62, %70 : vector<16x8xf32>
    %72 = vector.shape_cast %44 : vector<1x16x4xf32> to vector<16x4xf32>
    %73 = arith.truncf %72 : vector<16x4xf32> to vector<16x4xbf16>
    %c2 = arith.constant 2 : index
    %c0_23 = arith.constant 0 : index
    %c0_24 = arith.constant 0 : index
    %74 = vector.load %arg4[%c2, %c0_23, %c0_24] : memref<3x4x8xbf16, #tpu.memory_space<vmem>>, vector<1x4x8xbf16>
    %75 = vector.shape_cast %74 : vector<1x4x8xbf16> to vector<4x8xbf16>
    %cst_25 = arith.constant dense<0.000000e+00> : vector<16x8xf32>
    %76 = tpu.matmul %73, %75, %cst_25 {dimension_numbers = #tpu.dot_dimension_numbers<[1], [0], [0], [1], [0, 0, 1, 1], [], []>} : vector<16x4xbf16>, vector<4x8xbf16>, vector<16x8xf32> -> vector<16x8xf32>
    %77 = arith.addf %71, %76 : vector<16x8xf32>
    %c0_26 = arith.constant 0 : index
    %c0_27 = arith.constant 0 : index
    %78 = vector.load %arg5[%c0_26, %c0_27] : memref<1x8xf32, #tpu.memory_space<vmem>>, vector<1x8xf32>
    %79 = vector.broadcast %78 : vector<1x8xf32> to vector<16x8xf32>
    %80 = arith.addf %77, %79 : vector<16x8xf32>
    %cst_28 = arith.constant 0.000000e+00 : f32
    %81 = vector.broadcast %cst_28 : f32 to vector<16x8xf32>
    %82 = arith.maximumf %80, %81 : vector<16x8xf32>
    %83 = vector.shape_cast %82 : vector<16x8xf32> to vector<1x16x8xf32>
    %cst_29 = arith.constant 0.000000e+00 : f32
    %84 = vector.broadcast %cst_29 : f32 to vector<1x2x8xf32>
    %85 = vector.extract_strided_slice %83 {offsets = [0, 0, 0], sizes = [1, 14, 8], strides = [1, 1, 1]} : vector<1x16x8xf32> to vector<1x14x8xf32>
    %86 = tpu.concatenate %84, %85 in 1 : vector<1x2x8xf32>, vector<1x14x8xf32> -> vector<1x16x8xf32>
    %87 = vector.shape_cast %86 : vector<1x16x8xf32> to vector<16x8xf32>
    %88 = arith.truncf %87 : vector<16x8xf32> to vector<16x8xbf16>
    %c0_30 = arith.constant 0 : index
    %c0_31 = arith.constant 0 : index
    %c0_32 = arith.constant 0 : index
    %89 = vector.load %arg6[%c0_30, %c0_31, %c0_32] : memref<3x8x8xbf16, #tpu.memory_space<vmem>>, vector<1x8x8xbf16>
    %90 = vector.shape_cast %89 : vector<1x8x8xbf16> to vector<8x8xbf16>
    %cst_33 = arith.constant dense<0.000000e+00> : vector<16x8xf32>
    %91 = tpu.matmul %88, %90, %cst_33 {dimension_numbers = #tpu.dot_dimension_numbers<[1], [0], [0], [1], [0, 0, 1, 1], [], []>} : vector<16x8xbf16>, vector<8x8xbf16>, vector<16x8xf32> -> vector<16x8xf32>
    %cst_34 = arith.constant 0.000000e+00 : f32
    %92 = vector.broadcast %cst_34 : f32 to vector<1x1x8xf32>
    %93 = vector.extract_strided_slice %83 {offsets = [0, 0, 0], sizes = [1, 15, 8], strides = [1, 1, 1]} : vector<1x16x8xf32> to vector<1x15x8xf32>
    %94 = tpu.concatenate %92, %93 in 1 : vector<1x1x8xf32>, vector<1x15x8xf32> -> vector<1x16x8xf32>
    %95 = vector.shape_cast %94 : vector<1x16x8xf32> to vector<16x8xf32>
    %96 = arith.truncf %95 : vector<16x8xf32> to vector<16x8xbf16>
    %c1_35 = arith.constant 1 : index
    %c0_36 = arith.constant 0 : index
    %c0_37 = arith.constant 0 : index
    %97 = vector.load %arg6[%c1_35, %c0_36, %c0_37] : memref<3x8x8xbf16, #tpu.memory_space<vmem>>, vector<1x8x8xbf16>
    %98 = vector.shape_cast %97 : vector<1x8x8xbf16> to vector<8x8xbf16>
    %cst_38 = arith.constant dense<0.000000e+00> : vector<16x8xf32>
    %99 = tpu.matmul %96, %98, %cst_38 {dimension_numbers = #tpu.dot_dimension_numbers<[1], [0], [0], [1], [0, 0, 1, 1], [], []>} : vector<16x8xbf16>, vector<8x8xbf16>, vector<16x8xf32> -> vector<16x8xf32>
    %100 = arith.addf %91, %99 : vector<16x8xf32>
    %101 = vector.shape_cast %83 : vector<1x16x8xf32> to vector<16x8xf32>
    %102 = arith.truncf %101 : vector<16x8xf32> to vector<16x8xbf16>
    %c2_39 = arith.constant 2 : index
    %c0_40 = arith.constant 0 : index
    %c0_41 = arith.constant 0 : index
    %103 = vector.load %arg6[%c2_39, %c0_40, %c0_41] : memref<3x8x8xbf16, #tpu.memory_space<vmem>>, vector<1x8x8xbf16>
    %104 = vector.shape_cast %103 : vector<1x8x8xbf16> to vector<8x8xbf16>
    %cst_42 = arith.constant dense<0.000000e+00> : vector<16x8xf32>
    %105 = tpu.matmul %102, %104, %cst_42 {dimension_numbers = #tpu.dot_dimension_numbers<[1], [0], [0], [1], [0, 0, 1, 1], [], []>} : vector<16x8xbf16>, vector<8x8xbf16>, vector<16x8xf32> -> vector<16x8xf32>
    %106 = arith.addf %100, %105 : vector<16x8xf32>
    %c0_43 = arith.constant 0 : index
    %c0_44 = arith.constant 0 : index
    %107 = vector.load %arg7[%c0_43, %c0_44] : memref<1x8xf32, #tpu.memory_space<vmem>>, vector<1x8xf32>
    %108 = vector.broadcast %107 : vector<1x8xf32> to vector<16x8xf32>
    %109 = arith.addf %106, %108 : vector<16x8xf32>
    %cst_45 = arith.constant 0.000000e+00 : f32
    %110 = vector.broadcast %cst_45 : f32 to vector<16x8xf32>
    %111 = arith.maximumf %109, %110 : vector<16x8xf32>
    %112 = vector.shape_cast %111 : vector<16x8xf32> to vector<1x16x8xf32>
    %cst_46 = arith.constant 1.000000e+00 : f32
    %113 = vector.broadcast %cst_46 : f32 to vector<1x16x1xf32>
    %114 = arith.addf %113, %54 : vector<1x16x1xf32>
    %115 = vector.broadcast %114 : vector<1x16x1xf32> to vector<1x16x4xf32>
    %116 = arith.mulf %115, %2 : vector<1x16x4xf32>
    %117 = vector.shape_cast %116 : vector<1x16x4xf32> to vector<16x4xf32>
    %118 = arith.truncf %117 : vector<16x4xf32> to vector<16x4xbf16>
    %c0_47 = arith.constant 0 : index
    %c0_48 = arith.constant 0 : index
    %119 = vector.load %arg8[%c0_47, %c0_48] : memref<4x8xbf16, #tpu.memory_space<vmem>>, vector<4x8xbf16>
    %cst_49 = arith.constant dense<0.000000e+00> : vector<16x8xf32>
    %120 = tpu.matmul %118, %119, %cst_49 {dimension_numbers = #tpu.dot_dimension_numbers<[1], [0], [0], [1], [0, 0, 1, 1], [], []>} : vector<16x4xbf16>, vector<4x8xbf16>, vector<16x8xf32> -> vector<16x8xf32>
    %c0_50 = arith.constant 0 : index
    %c0_51 = arith.constant 0 : index
    %121 = vector.load %arg9[%c0_50, %c0_51] : memref<1x8xf32, #tpu.memory_space<vmem>>, vector<1x8xf32>
    %122 = vector.broadcast %121 : vector<1x8xf32> to vector<16x8xf32>
    %123 = arith.addf %120, %122 : vector<16x8xf32>
    %124 = vector.shape_cast %123 : vector<16x8xf32> to vector<1x16x8xf32>
    %125 = arith.addf %112, %124 : vector<1x16x8xf32>
    %cst_52 = arith.constant 0.000000e+00 : f32
    %126 = vector.broadcast %cst_52 : f32 to vector<1x16x8xf32>
    %127 = arith.maximumf %125, %126 : vector<1x16x8xf32>
    %128 = vector.shape_cast %127 : vector<1x16x8xf32> to vector<16x8xf32>
    %129 = arith.truncf %128 : vector<16x8xf32> to vector<16x8xbf16>
    %c0_53 = arith.constant 0 : index
    %c0_54 = arith.constant 0 : index
    %130 = vector.load %arg10[%c0_53, %c0_54] : memref<8x58xbf16, #tpu.memory_space<vmem>>, vector<8x58xbf16>
    %cst_55 = arith.constant dense<0.000000e+00> : vector<16x58xf32>
    %131 = tpu.matmul %129, %130, %cst_55 {dimension_numbers = #tpu.dot_dimension_numbers<[1], [0], [0], [1], [0, 0, 1, 1], [], []>} : vector<16x8xbf16>, vector<8x58xbf16>, vector<16x58xf32> -> vector<16x58xf32>
    %c0_56 = arith.constant 0 : index
    %c0_57 = arith.constant 0 : index
    %132 = vector.load %arg11[%c0_56, %c0_57] : memref<1x58xf32, #tpu.memory_space<vmem>>, vector<1x58xf32>
    %133 = vector.broadcast %132 : vector<1x58xf32> to vector<16x58xf32>
    %134 = arith.addf %131, %133 : vector<16x58xf32>
    %135 = vector.extract_strided_slice %134 {offsets = [0, 0], sizes = [16, 25], strides = [1, 1]} : vector<16x58xf32> to vector<16x25xf32>
    %cst_58 = arith.constant 2.000000e-01 : f32
    %136 = vector.broadcast %cst_58 : f32 to vector<16x25xf32>
    %137 = arith.mulf %135, %136 : vector<16x25xf32>
    %138 = vector.shape_cast %137 : vector<16x25xf32> to vector<1x16x25xf32>
    %139 = vector.extract_strided_slice %134 {offsets = [0, 25], sizes = [16, 25], strides = [1, 1]} : vector<16x58xf32> to vector<16x25xf32>
    %140 = vector.shape_cast %139 : vector<16x25xf32> to vector<1x16x25xf32>
    %141 = vector.extract_strided_slice %134 {offsets = [0, 50], sizes = [16, 8], strides = [1, 1]} : vector<16x58xf32> to vector<16x8xf32>
    %142 = vector.shape_cast %141 : vector<16x8xf32> to vector<1x16x8xf32>
    %143 = arith.truncf %138 : vector<1x16x25xf32> to vector<1x16x25xbf16>
    %144 = arith.truncf %140 : vector<1x16x25xf32> to vector<1x16x25xbf16>
    "tpu.trace_start"() <{level = 10 : i32, message = "bqd,bkd->bqk"}> : () -> ()
    %cst_59 = arith.constant dense<0.000000e+00> : vector<1x16x16xf32>
    %145 = tpu.matmul %143, %144, %cst_59 {dimension_numbers = #tpu.dot_dimension_numbers<[2], [2], [1], [1], [0, 0, 0, 1, 1, 1], [0], [0]>} : vector<1x16x25xbf16>, vector<1x16x25xbf16>, vector<1x16x16xf32> -> vector<1x16x16xf32>
    "tpu.trace_stop"() : () -> ()
    %c0_i32_60 = arith.constant 0 : i32
    %146 = vector.broadcast %c0_i32_60 : i32 to vector<1x16xi32>
    %147 = arith.addi %1, %146 : vector<1x16xi32>
    %148 = vector.broadcast %147 : vector<1x16xi32> to vector<16x16xi32>
    %149 = vector.broadcast %0 : vector<16x1xi32> to vector<16x16xi32>
    %150 = arith.cmpi sgt, %148, %149 : vector<16x16xi32>
    %cst_61 = arith.constant 0xFF800000 : f32
    %151 = vector.shape_cast %150 : vector<16x16xi1> to vector<1x16x16xi1>
    %152 = vector.broadcast %cst_61 : f32 to vector<1x16x16xf32>
    %153 = arith.select %151, %152, %145 : vector<1x16x16xi1>, vector<1x16x16xf32>
    %cst_62 = arith.constant dense<0xFF800000> : vector<1x16xf32>
    %154 = vector.multi_reduction <maximumf>, %153, %cst_62 [1] : vector<1x16x16xf32> to vector<1x16xf32>
    %155 = vector.shape_cast %154 : vector<1x16xf32> to vector<1x1x16xf32>
    %156 = vector.broadcast %155 : vector<1x1x16xf32> to vector<1x16x16xf32>
    %157 = arith.subf %153, %156 : vector<1x16x16xf32>
    %158 = math.exp %157 : vector<1x16x16xf32>
    %cst_63 = arith.constant dense<0.000000e+00> : vector<1x16xf32>
    %159 = vector.multi_reduction <add>, %158, %cst_63 [1] : vector<1x16x16xf32> to vector<1x16xf32>
    %160 = vector.shape_cast %159 : vector<1x16xf32> to vector<1x1x16xf32>
    %161 = tpu.reciprocal %160 {approx = true} : vector<1x1x16xf32> -> vector<1x1x16xf32>
    %162 = vector.shape_cast %161 : vector<1x1x16xf32> to vector<1x16x1xf32>
    %163 = vector.broadcast %162 : vector<1x16x1xf32> to vector<1x16x8xf32>
    %164 = arith.mulf %142, %163 : vector<1x16x8xf32>
    %165 = tpu.concatenate %164, %162 in 2 : vector<1x16x8xf32>, vector<1x16x1xf32> -> vector<1x16x9xf32>
    %166 = arith.truncf %158 : vector<1x16x16xf32> to vector<1x16x16xbf16>
    %167 = arith.truncf %165 : vector<1x16x9xf32> to vector<1x16x9xbf16>
    "tpu.trace_start"() <{level = 10 : i32, message = "bqk,bkd->bqd"}> : () -> ()
    %cst_64 = arith.constant dense<0.000000e+00> : vector<1x16x9xf32>
    %168 = tpu.matmul %166, %167, %cst_64 {dimension_numbers = #tpu.dot_dimension_numbers<[2], [1], [1], [2], [0, 0, 0, 1, 1, 2], [0], [0]>} : vector<1x16x16xbf16>, vector<1x16x9xbf16>, vector<1x16x9xf32> -> vector<1x16x9xf32>
    "tpu.trace_stop"() : () -> ()
    %169 = vector.extract_strided_slice %168 {offsets = [0, 0, 0], sizes = [1, 16, 8], strides = [1, 1, 1]} : vector<1x16x9xf32> to vector<1x16x8xf32>
    %170 = vector.extract_strided_slice %168 {offsets = [0, 0, 8], sizes = [1, 16, 1], strides = [1, 1, 1]} : vector<1x16x9xf32> to vector<1x16x1xf32>
    %cst_65 = arith.constant dense<0xFF800000> : vector<1x1xf32>
    %171 = vector.multi_reduction <maximumf>, %170, %cst_65 [1] : vector<1x16x1xf32> to vector<1x1xf32>
    %172 = vector.shape_cast %171 : vector<1x1xf32> to vector<1x1x1xf32>
    %173 = vector.broadcast %172 : vector<1x1x1xf32> to vector<1x16x1xf32>
    %174 = arith.subf %170, %173 : vector<1x16x1xf32>
    %175 = math.exp %174 : vector<1x16x1xf32>
    %cst_66 = arith.constant dense<0.000000e+00> : vector<1x1xf32>
    %176 = vector.multi_reduction <add>, %175, %cst_66 [1] : vector<1x16x1xf32> to vector<1x1xf32>
    %177 = vector.shape_cast %176 : vector<1x1xf32> to vector<1x1x1xf32>
    %178 = vector.broadcast %177 : vector<1x1x1xf32> to vector<1x16x1xf32>
    %179 = arith.divf %175, %178 : vector<1x16x1xf32>
    %cst_67 = arith.constant 0.000000e+00 : f32
    %180 = vector.broadcast %cst_67 : f32 to vector<1x4x8xf32>
    %181 = vector.extract_strided_slice %169 {offsets = [0, 0, 0], sizes = [1, 12, 8], strides = [1, 1, 1]} : vector<1x16x8xf32> to vector<1x12x8xf32>
    %182 = tpu.concatenate %180, %181 in 1 : vector<1x4x8xf32>, vector<1x12x8xf32> -> vector<1x16x8xf32>
    %183 = vector.shape_cast %182 : vector<1x16x8xf32> to vector<16x8xf32>
    %184 = arith.truncf %183 : vector<16x8xf32> to vector<16x8xbf16>
    %c0_68 = arith.constant 0 : index
    %c0_69 = arith.constant 0 : index
    %c0_70 = arith.constant 0 : index
    %185 = vector.load %arg12[%c0_68, %c0_69, %c0_70] : memref<3x8x8xbf16, #tpu.memory_space<vmem>>, vector<1x8x8xbf16>
    %186 = vector.shape_cast %185 : vector<1x8x8xbf16> to vector<8x8xbf16>
    %cst_71 = arith.constant dense<0.000000e+00> : vector<16x8xf32>
    %187 = tpu.matmul %184, %186, %cst_71 {dimension_numbers = #tpu.dot_dimension_numbers<[1], [0], [0], [1], [0, 0, 1, 1], [], []>} : vector<16x8xbf16>, vector<8x8xbf16>, vector<16x8xf32> -> vector<16x8xf32>
    %cst_72 = arith.constant 0.000000e+00 : f32
    %188 = vector.broadcast %cst_72 : f32 to vector<1x2x8xf32>
    %189 = vector.extract_strided_slice %169 {offsets = [0, 0, 0], sizes = [1, 14, 8], strides = [1, 1, 1]} : vector<1x16x8xf32> to vector<1x14x8xf32>
    %190 = tpu.concatenate %188, %189 in 1 : vector<1x2x8xf32>, vector<1x14x8xf32> -> vector<1x16x8xf32>
    %191 = vector.shape_cast %190 : vector<1x16x8xf32> to vector<16x8xf32>
    %192 = arith.truncf %191 : vector<16x8xf32> to vector<16x8xbf16>
    %c1_73 = arith.constant 1 : index
    %c0_74 = arith.constant 0 : index
    %c0_75 = arith.constant 0 : index
    %193 = vector.load %arg12[%c1_73, %c0_74, %c0_75] : memref<3x8x8xbf16, #tpu.memory_space<vmem>>, vector<1x8x8xbf16>
    %194 = vector.shape_cast %193 : vector<1x8x8xbf16> to vector<8x8xbf16>
    %cst_76 = arith.constant dense<0.000000e+00> : vector<16x8xf32>
    %195 = tpu.matmul %192, %194, %cst_76 {dimension_numbers = #tpu.dot_dimension_numbers<[1], [0], [0], [1], [0, 0, 1, 1], [], []>} : vector<16x8xbf16>, vector<8x8xbf16>, vector<16x8xf32> -> vector<16x8xf32>
    %196 = arith.addf %187, %195 : vector<16x8xf32>
    %197 = vector.shape_cast %169 : vector<1x16x8xf32> to vector<16x8xf32>
    %198 = arith.truncf %197 : vector<16x8xf32> to vector<16x8xbf16>
    %c2_77 = arith.constant 2 : index
    %c0_78 = arith.constant 0 : index
    %c0_79 = arith.constant 0 : index
    %199 = vector.load %arg12[%c2_77, %c0_78, %c0_79] : memref<3x8x8xbf16, #tpu.memory_space<vmem>>, vector<1x8x8xbf16>
    %200 = vector.shape_cast %199 : vector<1x8x8xbf16> to vector<8x8xbf16>
    %cst_80 = arith.constant dense<0.000000e+00> : vector<16x8xf32>
    %201 = tpu.matmul %198, %200, %cst_80 {dimension_numbers = #tpu.dot_dimension_numbers<[1], [0], [0], [1], [0, 0, 1, 1], [], []>} : vector<16x8xbf16>, vector<8x8xbf16>, vector<16x8xf32> -> vector<16x8xf32>
    %202 = arith.addf %196, %201 : vector<16x8xf32>
    %c0_81 = arith.constant 0 : index
    %c0_82 = arith.constant 0 : index
    %203 = vector.load %arg13[%c0_81, %c0_82] : memref<1x8xf32, #tpu.memory_space<vmem>>, vector<1x8xf32>
    %204 = vector.broadcast %203 : vector<1x8xf32> to vector<16x8xf32>
    %205 = arith.addf %202, %204 : vector<16x8xf32>
    %cst_83 = arith.constant 0.000000e+00 : f32
    %206 = vector.broadcast %cst_83 : f32 to vector<16x8xf32>
    %207 = arith.maximumf %205, %206 : vector<16x8xf32>
    %208 = vector.shape_cast %207 : vector<16x8xf32> to vector<1x16x8xf32>
    %cst_84 = arith.constant 0.000000e+00 : f32
    %209 = vector.broadcast %cst_84 : f32 to vector<1x4x8xf32>
    %210 = vector.extract_strided_slice %208 {offsets = [0, 0, 0], sizes = [1, 12, 8], strides = [1, 1, 1]} : vector<1x16x8xf32> to vector<1x12x8xf32>
    %211 = tpu.concatenate %209, %210 in 1 : vector<1x4x8xf32>, vector<1x12x8xf32> -> vector<1x16x8xf32>
    %212 = vector.shape_cast %211 : vector<1x16x8xf32> to vector<16x8xf32>
    %213 = arith.truncf %212 : vector<16x8xf32> to vector<16x8xbf16>
    %c0_85 = arith.constant 0 : index
    %c0_86 = arith.constant 0 : index
    %c0_87 = arith.constant 0 : index
    %214 = vector.load %arg14[%c0_85, %c0_86, %c0_87] : memref<3x8x8xbf16, #tpu.memory_space<vmem>>, vector<1x8x8xbf16>
    %215 = vector.shape_cast %214 : vector<1x8x8xbf16> to vector<8x8xbf16>
    %cst_88 = arith.constant dense<0.000000e+00> : vector<16x8xf32>
    %216 = tpu.matmul %213, %215, %cst_88 {dimension_numbers = #tpu.dot_dimension_numbers<[1], [0], [0], [1], [0, 0, 1, 1], [], []>} : vector<16x8xbf16>, vector<8x8xbf16>, vector<16x8xf32> -> vector<16x8xf32>
    %cst_89 = arith.constant 0.000000e+00 : f32
    %217 = vector.broadcast %cst_89 : f32 to vector<1x2x8xf32>
    %218 = vector.extract_strided_slice %208 {offsets = [0, 0, 0], sizes = [1, 14, 8], strides = [1, 1, 1]} : vector<1x16x8xf32> to vector<1x14x8xf32>
    %219 = tpu.concatenate %217, %218 in 1 : vector<1x2x8xf32>, vector<1x14x8xf32> -> vector<1x16x8xf32>
    %220 = vector.shape_cast %219 : vector<1x16x8xf32> to vector<16x8xf32>
    %221 = arith.truncf %220 : vector<16x8xf32> to vector<16x8xbf16>
    %c1_90 = arith.constant 1 : index
    %c0_91 = arith.constant 0 : index
    %c0_92 = arith.constant 0 : index
    %222 = vector.load %arg14[%c1_90, %c0_91, %c0_92] : memref<3x8x8xbf16, #tpu.memory_space<vmem>>, vector<1x8x8xbf16>
    %223 = vector.shape_cast %222 : vector<1x8x8xbf16> to vector<8x8xbf16>
    %cst_93 = arith.constant dense<0.000000e+00> : vector<16x8xf32>
    %224 = tpu.matmul %221, %223, %cst_93 {dimension_numbers = #tpu.dot_dimension_numbers<[1], [0], [0], [1], [0, 0, 1, 1], [], []>} : vector<16x8xbf16>, vector<8x8xbf16>, vector<16x8xf32> -> vector<16x8xf32>
    %225 = arith.addf %216, %224 : vector<16x8xf32>
    %226 = vector.shape_cast %208 : vector<1x16x8xf32> to vector<16x8xf32>
    %227 = arith.truncf %226 : vector<16x8xf32> to vector<16x8xbf16>
    %c2_94 = arith.constant 2 : index
    %c0_95 = arith.constant 0 : index
    %c0_96 = arith.constant 0 : index
    %228 = vector.load %arg14[%c2_94, %c0_95, %c0_96] : memref<3x8x8xbf16, #tpu.memory_space<vmem>>, vector<1x8x8xbf16>
    %229 = vector.shape_cast %228 : vector<1x8x8xbf16> to vector<8x8xbf16>
    %cst_97 = arith.constant dense<0.000000e+00> : vector<16x8xf32>
    %230 = tpu.matmul %227, %229, %cst_97 {dimension_numbers = #tpu.dot_dimension_numbers<[1], [0], [0], [1], [0, 0, 1, 1], [], []>} : vector<16x8xbf16>, vector<8x8xbf16>, vector<16x8xf32> -> vector<16x8xf32>
    %231 = arith.addf %225, %230 : vector<16x8xf32>
    %c0_98 = arith.constant 0 : index
    %c0_99 = arith.constant 0 : index
    %232 = vector.load %arg15[%c0_98, %c0_99] : memref<1x8xf32, #tpu.memory_space<vmem>>, vector<1x8xf32>
    %233 = vector.broadcast %232 : vector<1x8xf32> to vector<16x8xf32>
    %234 = arith.addf %231, %233 : vector<16x8xf32>
    %cst_100 = arith.constant 0.000000e+00 : f32
    %235 = vector.broadcast %cst_100 : f32 to vector<16x8xf32>
    %236 = arith.maximumf %234, %235 : vector<16x8xf32>
    %237 = vector.shape_cast %236 : vector<16x8xf32> to vector<1x16x8xf32>
    %cst_101 = arith.constant 1.000000e+00 : f32
    %238 = vector.broadcast %cst_101 : f32 to vector<1x16x1xf32>
    %239 = arith.addf %238, %179 : vector<1x16x1xf32>
    %240 = vector.broadcast %239 : vector<1x16x1xf32> to vector<1x16x8xf32>
    %241 = arith.mulf %240, %127 : vector<1x16x8xf32>
    %242 = arith.addf %237, %241 : vector<1x16x8xf32>
    %cst_102 = arith.constant 0.000000e+00 : f32
    %243 = vector.broadcast %cst_102 : f32 to vector<1x16x8xf32>
    %244 = arith.maximumf %242, %243 : vector<1x16x8xf32>
    %245 = vector.extract_strided_slice %244 {offsets = [0, 15, 0], sizes = [1, 1, 8], strides = [1, 1, 1]} : vector<1x16x8xf32> to vector<1x1x8xf32>
    %246 = vector.shape_cast %245 : vector<1x1x8xf32> to vector<1x8xf32>
    %247 = arith.truncf %246 : vector<1x8xf32> to vector<1x8xbf16>
    %c0_103 = arith.constant 0 : index
    %c0_104 = arith.constant 0 : index
    %248 = vector.load %arg16[%c0_103, %c0_104] : memref<8x10xbf16, #tpu.memory_space<vmem>>, vector<8x10xbf16>
    %cst_105 = arith.constant dense<0.000000e+00> : vector<1x10xf32>
    %249 = tpu.matmul %247, %248, %cst_105 {dimension_numbers = #tpu.dot_dimension_numbers<[1], [0], [0], [1], [0, 0, 1, 1], [], []>} : vector<1x8xbf16>, vector<8x10xbf16>, vector<1x10xf32> -> vector<1x10xf32>
    %c0_106 = arith.constant 0 : index
    %c0_107 = arith.constant 0 : index
    %250 = vector.load %arg17[%c0_106, %c0_107] : memref<1x10xf32, #tpu.memory_space<vmem>>, vector<1x10xf32>
    %251 = arith.addf %249, %250 : vector<1x10xf32>
    %cst_108 = arith.constant dense<0xFF800000> : vector<1xf32>
    %252 = vector.multi_reduction <maximumf>, %251, %cst_108 [1] : vector<1x10xf32> to vector<1xf32>
    %253 = vector.shape_cast %252 : vector<1xf32> to vector<1x1xf32>
    %254 = vector.broadcast %253 : vector<1x1xf32> to vector<1x10xf32>
    %255 = arith.subf %251, %254 : vector<1x10xf32>
    %256 = math.exp %255 : vector<1x10xf32>
    %cst_109 = arith.constant dense<0.000000e+00> : vector<1xf32>
    %257 = vector.multi_reduction <add>, %256, %cst_109 [1] : vector<1x10xf32> to vector<1xf32>
    %258 = vector.shape_cast %257 : vector<1xf32> to vector<1x1xf32>
    %259 = math.log %258 : vector<1x1xf32>
    %260 = vector.broadcast %259 : vector<1x1xf32> to vector<1x10xf32>
    %261 = arith.subf %255, %260 : vector<1x10xf32>
    %c0_110 = arith.constant 0 : index
    %c0_111 = arith.constant 0 : index
    %c0_112 = arith.constant 0 : index
    %262 = vector.load %arg18[%c0_110, %c0_111, %c0_112] : memref<1x1x10xf32, #tpu.memory_space<vmem>>, vector<1x1x10xf32>
    %263 = vector.shape_cast %262 : vector<1x1x10xf32> to vector<1x10xf32>
    %264 = vector.shape_cast %261 : vector<1x10xf32> to vector<1x1x10xf32>
    tpu.vector_store %arg18[%c0_110, %c0_111, %c0_112], %264 {strides = array<i32>} : memref<1x1x10xf32, #tpu.memory_space<vmem>>, vector<1x1x10xf32>,
    return
  }
  func.func @transform_0(%arg0: i32) -> (i32, i32, i32) {
    %c0_i32 = arith.constant 0 : i32
    %c0_i32_0 = arith.constant 0 : i32
    %c0_i32_1 = arith.constant 0 : i32
    return %arg0, %c0_i32, %c0_i32_0 : i32, i32, i32
  }
  func.func @transform_1(%arg0: i32) -> (i32, i32) {
    %c0_i32 = arith.constant 0 : i32
    %c0_i32_0 = arith.constant 0 : i32
    %c0_i32_1 = arith.constant 0 : i32
    return %c0_i32, %c0_i32_0 : i32, i32
  }
  func.func @transform_2(%arg0: i32) -> (i32, i32) {
    %c0_i32 = arith.constant 0 : i32
    %c0_i32_0 = arith.constant 0 : i32
    %c0_i32_1 = arith.constant 0 : i32
    return %c0_i32, %c0_i32_0 : i32, i32
  }
  func.func @transform_3(%arg0: i32) -> (i32, i32, i32) {
    %c0_i32 = arith.constant 0 : i32
    %c0_i32_0 = arith.constant 0 : i32
    %c0_i32_1 = arith.constant 0 : i32
    %c0_i32_2 = arith.constant 0 : i32
    return %c0_i32, %c0_i32_0, %c0_i32_1 : i32, i32, i32
  }
  func.func @transform_4(%arg0: i32) -> (i32, i32) {
    %c0_i32 = arith.constant 0 : i32
    %c0_i32_0 = arith.constant 0 : i32
    %c0_i32_1 = arith.constant 0 : i32
    return %c0_i32, %c0_i32_0 : i32, i32
  }
  func.func @transform_5(%arg0: i32) -> (i32, i32, i32) {
    %c0_i32 = arith.constant 0 : i32
    %c0_i32_0 = arith.constant 0 : i32
    %c0_i32_1 = arith.constant 0 : i32
    %c0_i32_2 = arith.constant 0 : i32
    return %c0_i32, %c0_i32_0, %c0_i32_1 : i32, i32, i32
  }
  func.func @transform_6(%arg0: i32) -> (i32, i32) {
    %c0_i32 = arith.constant 0 : i32
    %c0_i32_0 = arith.constant 0 : i32
    %c0_i32_1 = arith.constant 0 : i32
    return %c0_i32, %c0_i32_0 : i32, i32
  }
  func.func @transform_7(%arg0: i32) -> (i32, i32) {
    %c0_i32 = arith.constant 0 : i32
    %c0_i32_0 = arith.constant 0 : i32
    %c0_i32_1 = arith.constant 0 : i32
    return %c0_i32, %c0_i32_0 : i32, i32
  }
  func.func @transform_8(%arg0: i32) -> (i32, i32) {
    %c0_i32 = arith.constant 0 : i32
    %c0_i32_0 = arith.constant 0 : i32
    %c0_i32_1 = arith.constant 0 : i32
    return %c0_i32, %c0_i32_0 : i32, i32
  }
  func.func @transform_9(%arg0: i32) -> (i32, i32) {
    %c0_i32 = arith.constant 0 : i32
    %c0_i32_0 = arith.constant 0 : i32
    %c0_i32_1 = arith.constant 0 : i32
    return %c0_i32, %c0_i32_0 : i32, i32
  }
  func.func @transform_10(%arg0: i32) -> (i32, i32) {
    %c0_i32 = arith.constant 0 : i32
    %c0_i32_0 = arith.constant 0 : i32
    %c0_i32_1 = arith.constant 0 : i32
    return %c0_i32, %c0_i32_0 : i32, i32
  }
  func.func @transform_11(%arg0: i32) -> (i32, i32, i32) {
    %c0_i32 = arith.constant 0 : i32
    %c0_i32_0 = arith.constant 0 : i32
    %c0_i32_1 = arith.constant 0 : i32
    %c0_i32_2 = arith.constant 0 : i32
    return %c0_i32, %c0_i32_0, %c0_i32_1 : i32, i32, i32
  }
  func.func @transform_12(%arg0: i32) -> (i32, i32) {
    %c0_i32 = arith.constant 0 : i32
    %c0_i32_0 = arith.constant 0 : i32
    %c0_i32_1 = arith.constant 0 : i32
    return %c0_i32, %c0_i32_0 : i32, i32
  }
  func.func @transform_13(%arg0: i32) -> (i32, i32, i32) {
    %c0_i32 = arith.constant 0 : i32
    %c0_i32_0 = arith.constant 0 : i32
    %c0_i32_1 = arith.constant 0 : i32
    %c0_i32_2 = arith.constant 0 : i32
    return %c0_i32, %c0_i32_0, %c0_i32_1 : i32, i32, i32
  }
  func.func @transform_14(%arg0: i32) -> (i32, i32) {
    %c0_i32 = arith.constant 0 : i32
    %c0_i32_0 = arith.constant 0 : i32
    %c0_i32_1 = arith.constant 0 : i32
    return %c0_i32, %c0_i32_0 : i32, i32
  }
  func.func @transform_15(%arg0: i32) -> (i32, i32) {
    %c0_i32 = arith.constant 0 : i32
    %c0_i32_0 = arith.constant 0 : i32
    %c0_i32_1 = arith.constant 0 : i32
    return %c0_i32, %c0_i32_0 : i32, i32
  }
  func.func @transform_16(%arg0: i32) -> (i32, i32) {
    %c0_i32 = arith.constant 0 : i32
    %c0_i32_0 = arith.constant 0 : i32
    %c0_i32_1 = arith.constant 0 : i32
    return %c0_i32, %c0_i32_0 : i32, i32
  }
  func.func @transform_17(%arg0: i32) -> (i32, i32, i32) {
    %c0_i32 = arith.constant 0 : i32
    %c0_i32_0 = arith.constant 0 : i32
    %c0_i32_1 = arith.constant 0 : i32
    return %arg0, %c0_i32, %c0_i32_0 : i32, i32, i32
  }
}

</mosaic_0001>

<llo_original>
// kernel: tpu_custom_call.1
$region0: #{tpu_custom_call.1}
  #allocation0 [shape = 'u32[]', space=smem, size = 0x4, offset = 0x4, fixed_abs, tag = 'smem constant byte address 0x4 - core index']
  #allocation1 [shape = 'u32[72,128]{1,0:T(1,128)}', space=vmem, size = 0x9000, scoped, tag = 'internal scratch']
  %s0 = inlined_call_operand.vmem [shape: f32[2,16,4], index: 0, kind: input, shape index: {}]
  %s1 = inlined_call_operand.hbm [shape: bf16[4,54], index: 1, kind: input, shape index: {}]
  %s2 = inlined_call_operand.hbm [shape: f32[1,54], index: 2, kind: input, shape index: {}]
  %s3 = inlined_call_operand.vmem [shape: bf16[3,4,8], index: 3, kind: input, shape index: {}]
  %s4 = inlined_call_operand.hbm [shape: f32[1,8], index: 4, kind: input, shape index: {}]
  %s5 = inlined_call_operand.vmem [shape: bf16[3,8,8], index: 5, kind: input, shape index: {}]
  %s6 = inlined_call_operand.hbm [shape: f32[1,8], index: 6, kind: input, shape index: {}]
  %s7 = inlined_call_operand.hbm [shape: bf16[4,8], index: 7, kind: input, shape index: {}]
  %s8 = inlined_call_operand.hbm [shape: f32[1,8], index: 8, kind: input, shape index: {}]
  %s9 = inlined_call_operand.vmem [shape: bf16[8,58], index: 9, kind: input, shape index: {}]
  %s10 = inlined_call_operand.hbm [shape: f32[1,58], index: 10, kind: input, shape index: {}]
  %s11 = inlined_call_operand.vmem [shape: bf16[3,8,8], index: 11, kind: input, shape index: {}]
  %s12 = inlined_call_operand.vmem [shape: f32[1,8], index: 12, kind: input, shape index: {}]
  %s13 = inlined_call_operand.vmem [shape: bf16[3,8,8], index: 13, kind: input, shape index: {}]
  %s14 = inlined_call_operand.vmem [shape: f32[1,8], index: 14, kind: input, shape index: {}]
  %s15 = inlined_call_operand.vmem [shape: bf16[8,10], index: 15, kind: input, shape index: {}]
  %s16 = inlined_call_operand.vmem [shape: f32[1,10], index: 16, kind: input, shape index: {}]
  %s17 = inlined_call_operand.hbm [shape: f32[2,1,10], index: 17, kind: output, shape index: {}]
  %s18 = sld [smem:[#allocation0]]
  $region129: #{tpu_custom_call.1} parent=0
    _
  %s20 = ssub.s32 1, %s18
  %s21 = scalar_select 0, %s20, %s18
  $region1: #{tpu_custom_call.1} parent=0
    #allocation2 [shape = 'u8[1024]{0}', space=vmem, size = 0x400, scoped, tag = 'input window, operand 1, single buffered']
    #allocation3 [shape = 's32[2]{0}', space=sflag, size = 0x8, scoped, tag = 'scoped memory for tpu_custom_call.1']
    #allocation4 [shape = 's32[2]{0}', space=sflag, size = 0x8, scoped, tag = 'scoped memory for tpu_custom_call.1']
    #allocation5 [shape = 'u8[512]{0}', space=vmem, size = 0x400, scoped, tag = 'input window, operand 2, single buffered']
    #allocation6 [shape = 's32[1]{0}', space=sflag, size = 0x4, scoped, tag = 'scoped memory for tpu_custom_call.1']
    #allocation7 [shape = 'u8[512]{0}', space=vmem, size = 0x400, scoped, tag = 'input window, operand 4, single buffered']
    #allocation8 [shape = 'u8[512]{0}', space=vmem, size = 0x400, scoped, tag = 'input window, operand 6, single buffered']
    #allocation9 [shape = 's32[1]{0}', space=sflag, size = 0x4, scoped, tag = 'scoped memory for tpu_custom_call.1']
    #allocation10 [shape = 'u8[1024]{0}', space=vmem, size = 0x400, scoped, tag = 'input window, operand 7, single buffered']
    #allocation11 [shape = 'u8[512]{0}', space=vmem, size = 0x400, scoped, tag = 'input window, operand 8, single buffered']
    #allocation12 [shape = 's32[1]{0}', space=sflag, size = 0x4, scoped, tag = 'scoped memory for tpu_custom_call.1']
    #allocation13 [shape = 'u8[512]{0}', space=vmem, size = 0x400, scoped, tag = 'input window, operand 10, single buffered']
    #allocation14 [shape = 'u8[1024]{0}', space=vmem, size = 0x400, scoped, tag = 'output window, operand 0']
    %22 = vsyncpa [#allocation3], 0
    %23 = vsyncpa [#allocation6], 0
    %24 = vsyncpa [#allocation9], 0
    %25 = vsyncpa [#allocation12], 0
    %26 = vsyncpa [#allocation4], 0
    %s27 = scalar_lea.sflag [#allocation4], 1
    %28 = vsyncpa %s27, 0
    loop: start=0, step=1, limit=4
    $region2: #{tpu_custom_call.1} parent=1 // loop_pre_header
      _
    $region3: #{tpu_custom_call.1} parent=1 // loop_header
      %s30 = sphi 0, %s34
      %p31 = scmp.ge.s32.totalorder %s30, 4
      %s40 = sphi 0, %s42
      %s43 = sphi 0, %s40
      %s44 = sphi 0, %s43
      %s60 = sphi 0, %s44
      %s64 = sphi 0, %s64
      %s66 = sphi 0, %s64
      %s67 = sphi 0, %s66
      %s81 = sphi 0, %s67
      %s85 = sphi 0, %s85
      %s87 = sphi 0, %s85
      %s88 = sphi 0, %s87
      %s102 = sphi 0, %s88
      %s106 = sphi 0, %s106
      %s108 = sphi 0, %s106
      %s109 = sphi 0, %s108
      %s123 = sphi 0, %s109
      %s127 = sphi 0, %s127
      %s129 = sphi 0, %s127
      %s130 = sphi 0, %s129
      %s144 = sphi 0, %s130
      %s148 = sphi 0, %s148
      %s150 = sphi 0, %s148
      %s151 = sphi 0, %s150
      %s165 = sphi 0, %s151
      %s169 = sphi 0, %s169
      %s171 = sphi 0, %s169
      %s172 = sphi 0, %s171
      %s186 = sphi 0, %s172
      %s190 = sphi 0, %s190
      %s192 = sphi 0, %s190
      %s193 = sphi 0, %s192
      %s207 = sphi 0, %s193
      %s211 = sphi 0, %s211
      %s213 = sphi 0, %s211
      %s214 = sphi 0, %s213
      %s228 = sphi 0, %s214
      %s232 = sphi 0, %s232
      %s234 = sphi 0, %s232
      %s235 = sphi 0, %s234
      %s249 = sphi 0, %s235
      %s253 = sphi 0, %s253
      %s255 = sphi 0, %s253
      %s256 = sphi 0, %s255
      %s270 = sphi 0, %s256
      %s274 = sphi 0, %s274
      %s276 = sphi 0, %s274
      %s277 = sphi 0, %s276
      %s291 = sphi 0, %s277
      %s295 = sphi 0, %s295
      %s297 = sphi 0, %s295
      %s298 = sphi 0, %s297
      %s312 = sphi 0, %s298
      %s316 = sphi 0, %s316
      %s318 = sphi 0, %s316
      %s319 = sphi 0, %s318
      %s333 = sphi 0, %s319
      %s337 = sphi 0, %s337
      %s339 = sphi 0, %s337
      %s340 = sphi 0, %s339
      %s354 = sphi 0, %s340
      %s358 = sphi 0, %s358
      %s360 = sphi 0, %s358
      %s361 = sphi 0, %s360
      %s375 = sphi 0, %s361
      %s379 = sphi 0, %s379
      %s381 = sphi 0, %s379
      %s382 = sphi 0, %s381
      %s396 = sphi 0, %s382
      %s402 = sphi 0, %s404
      %s405 = sphi 0, %s402
      %s406 = sphi 0, %s405
      %s422 = sphi 0, %s406
    $region4: #{tpu_custom_call.1} parent=1 // loop_header_branch
      %33 = sbr.rel (%p31) target = $region8
    $region5: #{tpu_custom_call.1} parent=1 // loop_body
      %s35 = ssub.s32 %s30, 1
      %s36 = ssub.s32 %s30, 2
      %s37 = sadd.s32 %s30, 1
      %s38 = ssub.s32 %s30, %s37
      %p39 = scmp.eq.s32.totalorder %s38, 0
      %s41 = sadd.s32 %s40, 1
      %s42 = scalar_select %p39, %s40, %s41
      %p45 = pneg %p39
      %p46 = scmp.eq.s32.totalorder %s30, 1
      %p47 = por %p45, %p46
      %p48 = scmp.ne.s32.totalorder %s40, %s43
      %p49 = scmp.eq.s32.totalorder %s30, 0
      %p50 = por %p48, %p49
      %p51 = scmp.ne.s32.totalorder %s40, %s43
      %p52 = scmp.eq.s32.totalorder %s35, 1
      %p53 = por %p51, %p52
      %p54 = scmp.ne.s32.totalorder %s43, %s44
      %p55 = scmp.eq.s32.totalorder %s35, 0
      %p56 = por %p54, %p55
      %p57 = scmp.ne.s32.totalorder %s43, %s44
      %p58 = scmp.eq.s32.totalorder %s36, 1
      %p59 = por %p57, %p58
      %p61 = scmp.ne.s32.totalorder %s44, %s60
      %p62 = scmp.eq.s32.totalorder %s36, 0
      %p63 = por %p61, %p62
      %s65 = sadd.s32 %s64, 1
      %p68 = scmp.eq.s32.totalorder %s30, 1
      %p69 = scmp.ne.s32.totalorder %s64, %s66
      %p70 = scmp.eq.s32.totalorder %s30, 0
      %p71 = por %p69, %p70
      %p72 = scmp.ne.s32.totalorder %s64, %s66
      %p73 = scmp.eq.s32.totalorder %s35, 1
      %p74 = por %p72, %p73
      %p75 = scmp.ne.s32.totalorder %s66, %s67
      %p76 = scmp.eq.s32.totalorder %s35, 0
      %p77 = por %p75, %p76
      %p78 = scmp.ne.s32.totalorder %s66, %s67
      %p79 = scmp.eq.s32.totalorder %s36, 1
      %p80 = por %p78, %p79
      %p82 = scmp.ne.s32.totalorder %s67, %s81
      %p83 = scmp.eq.s32.totalorder %s36, 0
      %p84 = por %p82, %p83
      %s86 = sadd.s32 %s85, 1
      %p89 = scmp.eq.s32.totalorder %s30, 1
      %p90 = scmp.ne.s32.totalorder %s85, %s87
      %p91 = scmp.eq.s32.totalorder %s30, 0
      %p92 = por %p90, %p91
      %p93 = scmp.ne.s32.totalorder %s85, %s87
      %p94 = scmp.eq.s32.totalorder %s35, 1
      %p95 = por %p93, %p94
      %p96 = scmp.ne.s32.totalorder %s87, %s88
      %p97 = scmp.eq.s32.totalorder %s35, 0
      %p98 = por %p96, %p97
      %p99 = scmp.ne.s32.totalorder %s87, %s88
      %p100 = scmp.eq.s32.totalorder %s36, 1
      %p101 = por %p99, %p100
      %p103 = scmp.ne.s32.totalorder %s88, %s102
      %p104 = scmp.eq.s32.totalorder %s36, 0
      %p105 = por %p103, %p104
      %s107 = sadd.s32 %s106, 1
      %p110 = scmp.eq.s32.totalorder %s30, 1
      %p111 = scmp.ne.s32.totalorder %s106, %s108
      %p112 = scmp.eq.s32.totalorder %s30, 0
      %p113 = por %p111, %p112
      %p114 = scmp.ne.s32.totalorder %s106, %s108
      %p115 = scmp.eq.s32.totalorder %s35, 1
      %p116 = por %p114, %p115
      %p117 = scmp.ne.s32.totalorder %s108, %s109
      %p118 = scmp.eq.s32.totalorder %s35, 0
      %p119 = por %p117, %p118
      %p120 = scmp.ne.s32.totalorder %s108, %s109
      %p121 = scmp.eq.s32.totalorder %s36, 1
      %p122 = por %p120, %p121
      %p124 = scmp.ne.s32.totalorder %s109, %s123
      %p125 = scmp.eq.s32.totalorder %s36, 0
      %p126 = por %p124, %p125
      %s128 = sadd.s32 %s127, 1
      %p131 = scmp.eq.s32.totalorder %s30, 1
      %p132 = scmp.ne.s32.totalorder %s127, %s129
      %p133 = scmp.eq.s32.totalorder %s30, 0
      %p134 = por %p132, %p133
      %p135 = scmp.ne.s32.totalorder %s127, %s129
      %p136 = scmp.eq.s32.totalorder %s35, 1
      %p137 = por %p135, %p136
      %p138 = scmp.ne.s32.totalorder %s129, %s130
      %p139 = scmp.eq.s32.totalorder %s35, 0
      %p140 = por %p138, %p139
      %p141 = scmp.ne.s32.totalorder %s129, %s130
      %p142 = scmp.eq.s32.totalorder %s36, 1
      %p143 = por %p141, %p142
      %p145 = scmp.ne.s32.totalorder %s130, %s144
      %p146 = scmp.eq.s32.totalorder %s36, 0
      %p147 = por %p145, %p146
      %s149 = sadd.s32 %s148, 1
      %p152 = scmp.eq.s32.totalorder %s30, 1
      %p153 = scmp.ne.s32.totalorder %s148, %s150
      %p154 = scmp.eq.s32.totalorder %s30, 0
      %p155 = por %p153, %p154
      %p156 = scmp.ne.s32.totalorder %s148, %s150
      %p157 = scmp.eq.s32.totalorder %s35, 1
      %p158 = por %p156, %p157
      %p159 = scmp.ne.s32.totalorder %s150, %s151
      %p160 = scmp.eq.s32.totalorder %s35, 0
      %p161 = por %p159, %p160
      %p162 = scmp.ne.s32.totalorder %s150, %s151
      %p163 = scmp.eq.s32.totalorder %s36, 1
      %p164 = por %p162, %p163
      %p166 = scmp.ne.s32.totalorder %s151, %s165
      %p167 = scmp.eq.s32.totalorder %s36, 0
      %p168 = por %p166, %p167
      %s170 = sadd.s32 %s169, 1
      %p173 = scmp.eq.s32.totalorder %s30, 1
      %p174 = scmp.ne.s32.totalorder %s169, %s171
      %p175 = scmp.eq.s32.totalorder %s30, 0
      %p176 = por %p174, %p175
      %p177 = scmp.ne.s32.totalorder %s169, %s171
      %p178 = scmp.eq.s32.totalorder %s35, 1
      %p179 = por %p177, %p178
      %p180 = scmp.ne.s32.totalorder %s171, %s172
      %p181 = scmp.eq.s32.totalorder %s35, 0
      %p182 = por %p180, %p181
      %p183 = scmp.ne.s32.totalorder %s171, %s172
      %p184 = scmp.eq.s32.totalorder %s36, 1
      %p185 = por %p183, %p184
      %p187 = scmp.ne.s32.totalorder %s172, %s186
      %p188 = scmp.eq.s32.totalorder %s36, 0
      %p189 = por %p187, %p188
      %s191 = sadd.s32 %s190, 1
      %p194 = scmp.eq.s32.totalorder %s30, 1
      %p195 = scmp.ne.s32.totalorder %s190, %s192
      %p196 = scmp.eq.s32.totalorder %s30, 0
      %p197 = por %p195, %p196
      %p198 = scmp.ne.s32.totalorder %s190, %s192
      %p199 = scmp.eq.s32.totalorder %s35, 1
      %p200 = por %p198, %p199
      %p201 = scmp.ne.s32.totalorder %s192, %s193
      %p202 = scmp.eq.s32.totalorder %s35, 0
      %p203 = por %p201, %p202
      %p204 = scmp.ne.s32.totalorder %s192, %s193
      %p205 = scmp.eq.s32.totalorder %s36, 1
      %p206 = por %p204, %p205
      %p208 = scmp.ne.s32.totalorder %s193, %s207
      %p209 = scmp.eq.s32.totalorder %s36, 0
      %p210 = por %p208, %p209
      %s212 = sadd.s32 %s211, 1
      %p215 = scmp.eq.s32.totalorder %s30, 1
      %p216 = scmp.ne.s32.totalorder %s211, %s213
      %p217 = scmp.eq.s32.totalorder %s30, 0
      %p218 = por %p216, %p217
      %p219 = scmp.ne.s32.totalorder %s211, %s213
      %p220 = scmp.eq.s32.totalorder %s35, 1
      %p221 = por %p219, %p220
      %p222 = scmp.ne.s32.totalorder %s213, %s214
      %p223 = scmp.eq.s32.totalorder %s35, 0
      %p224 = por %p222, %p223
      %p225 = scmp.ne.s32.totalorder %s213, %s214
      %p226 = scmp.eq.s32.totalorder %s36, 1
      %p227 = por %p225, %p226
      %p229 = scmp.ne.s32.totalorder %s214, %s228
      %p230 = scmp.eq.s32.totalorder %s36, 0
      %p231 = por %p229, %p230
      %s233 = sadd.s32 %s232, 1
      %p236 = scmp.eq.s32.totalorder %s30, 1
      %p237 = scmp.ne.s32.totalorder %s232, %s234
      %p238 = scmp.eq.s32.totalorder %s30, 0
      %p239 = por %p237, %p238
      %p240 = scmp.ne.s32.totalorder %s232, %s234
      %p241 = scmp.eq.s32.totalorder %s35, 1
      %p242 = por %p240, %p241
      %p243 = scmp.ne.s32.totalorder %s234, %s235
      %p244 = scmp.eq.s32.totalorder %s35, 0
      %p245 = por %p243, %p244
      %p246 = scmp.ne.s32.totalorder %s234, %s235
      %p247 = scmp.eq.s32.totalorder %s36, 1
      %p248 = por %p246, %p247
      %p250 = scmp.ne.s32.totalorder %s235, %s249
      %p251 = scmp.eq.s32.totalorder %s36, 0
      %p252 = por %p250, %p251
      %s254 = sadd.s32 %s253, 1
      %p257 = scmp.eq.s32.totalorder %s30, 1
      %p258 = scmp.ne.s32.totalorder %s253, %s255
      %p259 = scmp.eq.s32.totalorder %s30, 0
      %p260 = por %p258, %p259
      %p261 = scmp.ne.s32.totalorder %s253, %s255
      %p262 = scmp.eq.s32.totalorder %s35, 1
      %p263 = por %p261, %p262
      %p264 = scmp.ne.s32.totalorder %s255, %s256
      %p265 = scmp.eq.s32.totalorder %s35, 0
      %p266 = por %p264, %p265
      %p267 = scmp.ne.s32.totalorder %s255, %s256
      %p268 = scmp.eq.s32.totalorder %s36, 1
      %p269 = por %p267, %p268
      %p271 = scmp.ne.s32.totalorder %s256, %s270
      %p272 = scmp.eq.s32.totalorder %s36, 0
      %p273 = por %p271, %p272
      %s275 = sadd.s32 %s274, 1
      %p278 = scmp.eq.s32.totalorder %s30, 1
      %p279 = scmp.ne.s32.totalorder %s274, %s276
      %p280 = scmp.eq.s32.totalorder %s30, 0
      %p281 = por %p279, %p280
      %p282 = scmp.ne.s32.totalorder %s274, %s276
      %p283 = scmp.eq.s32.totalorder %s35, 1
      %p284 = por %p282, %p283
      %p285 = scmp.ne.s32.totalorder %s276, %s277
      %p286 = scmp.eq.s32.totalorder %s35, 0
      %p287 = por %p285, %p286
      %p288 = scmp.ne.s32.totalorder %s276, %s277
      %p289 = scmp.eq.s32.totalorder %s36, 1
      %p290 = por %p288, %p289
      %p292 = scmp.ne.s32.totalorder %s277, %s291
      %p293 = scmp.eq.s32.totalorder %s36, 0
      %p294 = por %p292, %p293
      %s296 = sadd.s32 %s295, 1
      %p299 = scmp.eq.s32.totalorder %s30, 1
      %p300 = scmp.ne.s32.totalorder %s295, %s297
      %p301 = scmp.eq.s32.totalorder %s30, 0
      %p302 = por %p300, %p301
      %p303 = scmp.ne.s32.totalorder %s295, %s297
      %p304 = scmp.eq.s32.totalorder %s35, 1
      %p305 = por %p303, %p304
      %p306 = scmp.ne.s32.totalorder %s297, %s298
      %p307 = scmp.eq.s32.totalorder %s35, 0
      %p308 = por %p306, %p307
      %p309 = scmp.ne.s32.totalorder %s297, %s298
      %p310 = scmp.eq.s32.totalorder %s36, 1
      %p311 = por %p309, %p310
      %p313 = scmp.ne.s32.totalorder %s298, %s312
      %p314 = scmp.eq.s32.totalorder %s36, 0
      %p315 = por %p313, %p314
      %s317 = sadd.s32 %s316, 1
      %p320 = scmp.eq.s32.totalorder %s30, 1
      %p321 = scmp.ne.s32.totalorder %s316, %s318
      %p322 = scmp.eq.s32.totalorder %s30, 0
      %p323 = por %p321, %p322
      %p324 = scmp.ne.s32.totalorder %s316, %s318
      %p325 = scmp.eq.s32.totalorder %s35, 1
      %p326 = por %p324, %p325
      %p327 = scmp.ne.s32.totalorder %s318, %s319
      %p328 = scmp.eq.s32.totalorder %s35, 0
      %p329 = por %p327, %p328
      %p330 = scmp.ne.s32.totalorder %s318, %s319
      %p331 = scmp.eq.s32.totalorder %s36, 1
      %p332 = por %p330, %p331
      %p334 = scmp.ne.s32.totalorder %s319, %s333
      %p335 = scmp.eq.s32.totalorder %s36, 0
      %p336 = por %p334, %p335
      %s338 = sadd.s32 %s337, 1
      %p341 = scmp.eq.s32.totalorder %s30, 1
      %p342 = scmp.ne.s32.totalorder %s337, %s339
      %p343 = scmp.eq.s32.totalorder %s30, 0
      %p344 = por %p342, %p343
      %p345 = scmp.ne.s32.totalorder %s337, %s339
      %p346 = scmp.eq.s32.totalorder %s35, 1
      %p347 = por %p345, %p346
      %p348 = scmp.ne.s32.totalorder %s339, %s340
      %p349 = scmp.eq.s32.totalorder %s35, 0
      %p350 = por %p348, %p349
      %p351 = scmp.ne.s32.totalorder %s339, %s340
      %p352 = scmp.eq.s32.totalorder %s36, 1
      %p353 = por %p351, %p352
      %p355 = scmp.ne.s32.totalorder %s340, %s354
      %p356 = scmp.eq.s32.totalorder %s36, 0
      %p357 = por %p355, %p356
      %s359 = sadd.s32 %s358, 1
      %p362 = scmp.eq.s32.totalorder %s30, 1
      %p363 = scmp.ne.s32.totalorder %s358, %s360
      %p364 = scmp.eq.s32.totalorder %s30, 0
      %p365 = por %p363, %p364
      %p366 = scmp.ne.s32.totalorder %s358, %s360
      %p367 = scmp.eq.s32.totalorder %s35, 1
      %p368 = por %p366, %p367
      %p369 = scmp.ne.s32.totalorder %s360, %s361
      %p370 = scmp.eq.s32.totalorder %s35, 0
      %p371 = por %p369, %p370
      %p372 = scmp.ne.s32.totalorder %s360, %s361
      %p373 = scmp.eq.s32.totalorder %s36, 1
      %p374 = por %p372, %p373
      %p376 = scmp.ne.s32.totalorder %s361, %s375
      %p377 = scmp.eq.s32.totalorder %s36, 0
      %p378 = por %p376, %p377
      %s380 = sadd.s32 %s379, 1
      %p383 = scmp.eq.s32.totalorder %s30, 1
      %p384 = scmp.ne.s32.totalorder %s379, %s381
      %p385 = scmp.eq.s32.totalorder %s30, 0
      %p386 = por %p384, %p385
      %p387 = scmp.ne.s32.totalorder %s379, %s381
      %p388 = scmp.eq.s32.totalorder %s35, 1
      %p389 = por %p387, %p388
      %p390 = scmp.ne.s32.totalorder %s381, %s382
      %p391 = scmp.eq.s32.totalorder %s35, 0
      %p392 = por %p390, %p391
      %p393 = scmp.ne.s32.totalorder %s381, %s382
      %p394 = scmp.eq.s32.totalorder %s36, 1
      %p395 = por %p393, %p394
      %p397 = scmp.ne.s32.totalorder %s382, %s396
      %p398 = scmp.eq.s32.totalorder %s36, 0
      %p399 = por %p397, %p398
      %s400 = ssub.s32 %s30, %s37
      %p401 = scmp.eq.s32.totalorder %s400, 0
      %s403 = sadd.s32 %s402, 1
      %s404 = scalar_select %p401, %s402, %s403
      %p407 = pneg %p401
      %p408 = scmp.eq.s32.totalorder %s30, 1
      %p409 = por %p407, %p408
      %p410 = scmp.ne.s32.totalorder %s402, %s405
      %p411 = scmp.eq.s32.totalorder %s30, 0
      %p412 = por %p410, %p411
      %p413 = scmp.ne.s32.totalorder %s402, %s405
      %p414 = scmp.eq.s32.totalorder %s35, 1
      %p415 = por %p413, %p414
      %p416 = scmp.ne.s32.totalorder %s405, %s406
      %p417 = scmp.eq.s32.totalorder %s35, 0
      %p418 = por %p416, %p417
      %p419 = scmp.ne.s32.totalorder %s405, %s406
      %p420 = scmp.eq.s32.totalorder %s36, 1
      %p421 = por %p419, %p420
      %p423 = scmp.ne.s32.totalorder %s406, %s422
      %p424 = scmp.eq.s32.totalorder %s36, 0
      %p425 = por %p423, %p424
      %p426 = scmp.le.s32.totalorder 1, %s30
      %p427 = scmp.lt.s32.totalorder %s30, 3
      %p428 = pnand %p426, %p427
      %p429 = pneg %p428
      // Predicated region
      $region9: #{tpu_custom_call.1} parent=5 // pred_check
        _
      $region10: #{tpu_custom_call.1} parent=5 // pred_check_branch
        %431 = sbr.rel (%p428) target = $region12
      $region11: #{tpu_custom_call.1} parent=5 // pred_region
        %s432 = ssub.s32 %s30, 1
        // Predicated region
        $region13: #{tpu_custom_call.1} parent=11 // pred_check
          %p433 = pneg %p77
        $region14: #{tpu_custom_call.1} parent=11 // pred_check_branch
          %435 = sbr.rel (%p433) target = $region16
        $region15: #{tpu_custom_call.1} parent=11 // pred_region
          %437 = vsyncadd [#allocation3], 0
          %s439 = sshll.u32 %s1, 4
          %s440 = int_to_ptr.hbm [resolvable:$true] %s439
          %s441 = sshll.u32 [#allocation2], 4
          %s442 = int_to_ptr.vmem [resolvable:$true] %s441
          %444 = dma.hbm_to_vmem [thread:$0]  %s440, 32, %s442, [#allocation3]
        $region16: #{tpu_custom_call.1} parent=11 // pred_fallthru
          _
        // Predicated region
        $region17: #{tpu_custom_call.1} parent=11 // pred_check
          %p445 = pneg %p98
        $region18: #{tpu_custom_call.1} parent=11 // pred_check_branch
          %447 = sbr.rel (%p445) target = $region20
        $region19: #{tpu_custom_call.1} parent=11 // pred_region
          %449 = vsyncadd [#allocation6], 0
          %s451 = sshll.u32 %s2, 4
          %s452 = int_to_ptr.hbm [resolvable:$true] %s451
          %s453 = sshll.u32 [#allocation5], 4
          %s454 = int_to_ptr.vmem [resolvable:$true] %s453
          %456 = dma.hbm_to_vmem [thread:$0]  %s452, 16, %s454, [#allocation6]
        $region20: #{tpu_custom_call.1} parent=11 // pred_fallthru
          _
        // Predicated region
        $region21: #{tpu_custom_call.1} parent=11 // pred_check
          %p457 = pneg %p119
        $region22: #{tpu_custom_call.1} parent=11 // pred_check_branch
          %459 = sbr.rel (%p457) target = $region24
        $region23: #{tpu_custom_call.1} parent=11 // pred_region
          _
        $region24: #{tpu_custom_call.1} parent=11 // pred_fallthru
          _
        // Predicated region
        $region25: #{tpu_custom_call.1} parent=11 // pred_check
          %p460 = pneg %p140
        $region26: #{tpu_custom_call.1} parent=11 // pred_check_branch
          %462 = sbr.rel (%p460) target = $region28
        $region27: #{tpu_custom_call.1} parent=11 // pred_region
          %464 = vsyncadd [#allocation6], 0
          %s466 = sshll.u32 %s4, 4
          %s467 = int_to_ptr.hbm [resolvable:$true] %s466
          %s468 = sshll.u32 [#allocation7], 4
          %s469 = int_to_ptr.vmem [resolvable:$true] %s468
          %471 = dma.hbm_to_vmem [thread:$0]  %s467, 16, %s469, [#allocation6]
        $region28: #{tpu_custom_call.1} parent=11 // pred_fallthru
          _
        // Predicated region
        $region29: #{tpu_custom_call.1} parent=11 // pred_check
          %p472 = pneg %p161
        $region30: #{tpu_custom_call.1} parent=11 // pred_check_branch
          %474 = sbr.rel (%p472) target = $region32
        $region31: #{tpu_custom_call.1} parent=11 // pred_region
          _
        $region32: #{tpu_custom_call.1} parent=11 // pred_fallthru
          _
        // Predicated region
        $region33: #{tpu_custom_call.1} parent=11 // pred_check
          %p475 = pneg %p182
        $region34: #{tpu_custom_call.1} parent=11 // pred_check_branch
          %477 = sbr.rel (%p475) target = $region36
        $region35: #{tpu_custom_call.1} parent=11 // pred_region
          %479 = vsyncadd [#allocation9], 0
          %s481 = sshll.u32 %s6, 4
          %s482 = int_to_ptr.hbm [resolvable:$true] %s481
          %s483 = sshll.u32 [#allocation8], 4
          %s484 = int_to_ptr.vmem [resolvable:$true] %s483
          %486 = dma.hbm_to_vmem [thread:$0]  %s482, 16, %s484, [#allocation9]
        $region36: #{tpu_custom_call.1} parent=11 // pred_fallthru
          _
        // Predicated region
        $region37: #{tpu_custom_call.1} parent=11 // pred_check
          %p487 = pneg %p203
        $region38: #{tpu_custom_call.1} parent=11 // pred_check_branch
          %489 = sbr.rel (%p487) target = $region40
        $region39: #{tpu_custom_call.1} parent=11 // pred_region
          %491 = vsyncadd [#allocation9], 0
          %s493 = sshll.u32 %s7, 4
          %s494 = int_to_ptr.hbm [resolvable:$true] %s493
          %s495 = sshll.u32 [#allocation10], 4
          %s496 = int_to_ptr.vmem [resolvable:$true] %s495
          %498 = dma.hbm_to_vmem [thread:$0]  %s494, 32, %s496, [#allocation9]
        $region40: #{tpu_custom_call.1} parent=11 // pred_fallthru
          _
        // Predicated region
        $region41: #{tpu_custom_call.1} parent=11 // pred_check
          %p499 = pneg %p224
        $region42: #{tpu_custom_call.1} parent=11 // pred_check_branch
          %501 = sbr.rel (%p499) target = $region44
        $region43: #{tpu_custom_call.1} parent=11 // pred_region
          %503 = vsyncadd [#allocation12], 0
          %s505 = sshll.u32 %s8, 4
          %s506 = int_to_ptr.hbm [resolvable:$true] %s505
          %s507 = sshll.u32 [#allocation11], 4
          %s508 = int_to_ptr.vmem [resolvable:$true] %s507
          %510 = dma.hbm_to_vmem [thread:$0]  %s506, 16, %s508, [#allocation12]
        $region44: #{tpu_custom_call.1} parent=11 // pred_fallthru
          _
        // Predicated region
        $region45: #{tpu_custom_call.1} parent=11 // pred_check
          %p511 = pneg %p245
        $region46: #{tpu_custom_call.1} parent=11 // pred_check_branch
          %513 = sbr.rel (%p511) target = $region48
        $region47: #{tpu_custom_call.1} parent=11 // pred_region
          _
        $region48: #{tpu_custom_call.1} parent=11 // pred_fallthru
          _
        // Predicated region
        $region49: #{tpu_custom_call.1} parent=11 // pred_check
          %p514 = pneg %p266
        $region50: #{tpu_custom_call.1} parent=11 // pred_check_branch
          %516 = sbr.rel (%p514) target = $region52
        $region51: #{tpu_custom_call.1} parent=11 // pred_region
          %518 = vsyncadd [#allocation12], 0
          %s520 = sshll.u32 %s10, 4
          %s521 = int_to_ptr.hbm [resolvable:$true] %s520
          %s522 = sshll.u32 [#allocation13], 4
          %s523 = int_to_ptr.vmem [resolvable:$true] %s522
          %525 = dma.hbm_to_vmem [thread:$0]  %s521, 16, %s523, [#allocation12]
        $region52: #{tpu_custom_call.1} parent=11 // pred_fallthru
          _
        // Predicated region
        $region53: #{tpu_custom_call.1} parent=11 // pred_check
          %p526 = pneg %p287
        $region54: #{tpu_custom_call.1} parent=11 // pred_check_branch
          %528 = sbr.rel (%p526) target = $region56
        $region55: #{tpu_custom_call.1} parent=11 // pred_region
          _
        $region56: #{tpu_custom_call.1} parent=11 // pred_fallthru
          _
        // Predicated region
        $region57: #{tpu_custom_call.1} parent=11 // pred_check
          %p529 = pneg %p308
        $region58: #{tpu_custom_call.1} parent=11 // pred_check_branch
          %531 = sbr.rel (%p529) target = $region60
        $region59: #{tpu_custom_call.1} parent=11 // pred_region
          _
        $region60: #{tpu_custom_call.1} parent=11 // pred_fallthru
          _
        // Predicated region
        $region61: #{tpu_custom_call.1} parent=11 // pred_check
          %p532 = pneg %p329
        $region62: #{tpu_custom_call.1} parent=11 // pred_check_branch
          %534 = sbr.rel (%p532) target = $region64
        $region63: #{tpu_custom_call.1} parent=11 // pred_region
          _
        $region64: #{tpu_custom_call.1} parent=11 // pred_fallthru
          _
        // Predicated region
        $region65: #{tpu_custom_call.1} parent=11 // pred_check
          %p535 = pneg %p350
        $region66: #{tpu_custom_call.1} parent=11 // pred_check_branch
          %537 = sbr.rel (%p535) target = $region68
        $region67: #{tpu_custom_call.1} parent=11 // pred_region
          _
        $region68: #{tpu_custom_call.1} parent=11 // pred_fallthru
          _
        // Predicated region
        $region69: #{tpu_custom_call.1} parent=11 // pred_check
          %p538 = pneg %p371
        $region70: #{tpu_custom_call.1} parent=11 // pred_check_branch
          %540 = sbr.rel (%p538) target = $region72
        $region71: #{tpu_custom_call.1} parent=11 // pred_region
          _
        $region72: #{tpu_custom_call.1} parent=11 // pred_fallthru
          _
        // Predicated region
        $region73: #{tpu_custom_call.1} parent=11 // pred_check
          %p541 = pneg %p392
        $region74: #{tpu_custom_call.1} parent=11 // pred_check_branch
          %543 = sbr.rel (%p541) target = $region76
        $region75: #{tpu_custom_call.1} parent=11 // pred_region
          _
        $region76: #{tpu_custom_call.1} parent=11 // pred_fallthru
          _
      $region12: #{tpu_custom_call.1} parent=5 // pred_fallthru
        _
      %p544 = scmp.lt.s32.totalorder %s30, 2
      // Predicated region
      $region77: #{tpu_custom_call.1} parent=5 // pred_check
        %p545 = pneg %p544
      $region78: #{tpu_custom_call.1} parent=5 // pred_check_branch
        %547 = sbr.rel (%p545) target = $region80
      $region79: #{tpu_custom_call.1} parent=5 // pred_region
        // Predicated region
        $region81: #{tpu_custom_call.1} parent=79 // pred_check
          %p548 = pneg %p50
        $region82: #{tpu_custom_call.1} parent=79 // pred_check_branch
          %550 = sbr.rel (%p548) target = $region84
        $region83: #{tpu_custom_call.1} parent=79 // pred_region
          %p551 = scmp.lt.s32.totalorder %s30, 1
          %s552 = scalar_select %p551, %s30, 1
          %s553 = smul.addr %s552, 2
          %s554 = smul.addr %s553, 8
          %s555 = scalar_lea.vmem %s0, %s554
        $region84: #{tpu_custom_call.1} parent=79 // pred_fallthru
          _
      $region80: #{tpu_custom_call.1} parent=5 // pred_fallthru
        _
      %p556 = scmp.le.s32.totalorder 1, %s30
      %p557 = scmp.lt.s32.totalorder %s30, 3
      %p558 = pnand %p556, %p557
      %p559 = pneg %p558
      // Predicated region
      $region85: #{tpu_custom_call.1} parent=5 // pred_check
        _
      $region86: #{tpu_custom_call.1} parent=5 // pred_check_branch
        %561 = sbr.rel (%p558) target = $region88
      $region87: #{tpu_custom_call.1} parent=5 // pred_region
        %s562 = ssub.s32 %s30, 1
        // Predicated region
        $region89: #{tpu_custom_call.1} parent=87 // pred_check
          %p563 = pneg %p77
        $region90: #{tpu_custom_call.1} parent=87 // pred_check_branch
          %565 = sbr.rel (%p563) target = $region92
        $region91: #{tpu_custom_call.1} parent=87 // pred_region
          %567 = dma.done [#allocation3], 32
        $region92: #{tpu_custom_call.1} parent=87 // pred_fallthru
          _
        // Predicated region
        $region93: #{tpu_custom_call.1} parent=87 // pred_check
          %p568 = pneg %p98
        $region94: #{tpu_custom_call.1} parent=87 // pred_check_branch
          %570 = sbr.rel (%p568) target = $region96
        $region95: #{tpu_custom_call.1} parent=87 // pred_region
          %572 = dma.done [#allocation6], 16
        $region96: #{tpu_custom_call.1} parent=87 // pred_fallthru
          _
        // Predicated region
        $region97: #{tpu_custom_call.1} parent=87 // pred_check
          %p573 = pneg %p140
        $region98: #{tpu_custom_call.1} parent=87 // pred_check_branch
          %575 = sbr.rel (%p573) target = $region100
        $region99: #{tpu_custom_call.1} parent=87 // pred_region
          %577 = dma.done [#allocation6], 16
        $region100: #{tpu_custom_call.1} parent=87 // pred_fallthru
          _
        // Predicated region
        $region101: #{tpu_custom_call.1} parent=87 // pred_check
          %p578 = pneg %p182
        $region102: #{tpu_custom_call.1} parent=87 // pred_check_branch
          %580 = sbr.rel (%p578) target = $region104
        $region103: #{tpu_custom_call.1} parent=87 // pred_region
          %582 = dma.done [#allocation9], 16
        $region104: #{tpu_custom_call.1} parent=87 // pred_fallthru
          _
        // Predicated region
        $region105: #{tpu_custom_call.1} parent=87 // pred_check
          %p583 = pneg %p203
        $region106: #{tpu_custom_call.1} parent=87 // pred_check_branch
          %585 = sbr.rel (%p583) target = $region108
        $region107: #{tpu_custom_call.1} parent=87 // pred_region
          %587 = dma.done [#allocation9], 32
        $region108: #{tpu_custom_call.1} parent=87 // pred_fallthru
          _
        // Predicated region
        $region109: #{tpu_custom_call.1} parent=87 // pred_check
          %p588 = pneg %p224
        $region110: #{tpu_custom_call.1} parent=87 // pred_check_branch
          %590 = sbr.rel (%p588) target = $region112
        $region111: #{tpu_custom_call.1} parent=87 // pred_region
          %592 = dma.done [#allocation12], 16
        $region112: #{tpu_custom_call.1} parent=87 // pred_fallthru
          _
        // Predicated region
        $region113: #{tpu_custom_call.1} parent=87 // pred_check
          %p593 = pneg %p266
        $region114: #{tpu_custom_call.1} parent=87 // pred_check_branch
          %595 = sbr.rel (%p593) target = $region116
        $region115: #{tpu_custom_call.1} parent=87 // pred_region
          %597 = dma.done [#allocation12], 16
        $region116: #{tpu_custom_call.1} parent=87 // pred_fallthru
          _
        %p598 = scmp.lt.s32.totalorder %s35, 1
        %s599 = scalar_select %p598, %s35, 1
        %s600 = smul.addr %s599, 2
        %s601 = smul.addr %s600, 8
        %s602 = scalar_lea.vmem %s0, %s601
        %p603 = pneg %p56
        %p604 = pneg %p53
        %p605 = pneg %p77
        %p606 = pneg %p74
        %p607 = pneg %p98
        %p608 = pneg %p95
        %p609 = pneg %p119
        %p610 = pneg %p116
        %p611 = pneg %p140
        %p612 = pneg %p137
        %p613 = pneg %p161
        %p614 = pneg %p158
        %p615 = pneg %p182
        %p616 = pneg %p179
        %p617 = pneg %p203
        %p618 = pneg %p200
        %p619 = pneg %p224
        %p620 = pneg %p221
        %p621 = pneg %p245
        %p622 = pneg %p242
        %p623 = pneg %p266
        %p624 = pneg %p263
        %p625 = pneg %p287
        %p626 = pneg %p284
        %p627 = pneg %p308
        %p628 = pneg %p305
        %p629 = pneg %p329
        %p630 = pneg %p326
        %p631 = pneg %p350
        %p632 = pneg %p347
        %p633 = pneg %p371
        %p634 = pneg %p368
        %p635 = pneg %p392
        %p636 = pneg %p389
        %p637 = pneg %p418
        %p638 = pneg %p415
        %s639 = sand.u32 %s405, 1
        %s640 = scalar_lea.sflag [#allocation4], %s639
        %s641 = sand.u32 %s405, 1
        %s642 = scalar_lea.vmem [#allocation14], %s641
        %p643 = scmp.lt.s32.totalorder %s35, 1
        %s644 = scalar_select %p643, %s35, 1
        %s645 = smul.addr %s644, 2
        %s646 = smul.addr %s645, 8
        %s647 = scalar_lea.vmem %s0, %s646
        %v649 = vlaneseq
        %v650 = vshrl.u32 %v649, 7
        %v651 = vadd.s32 %v650, 8
        %v652 = vlaneseq
        %v653 = vand.u32 %v652, 127
        %v654 = vld [vmem:[%s647] sm:$0xff]
        %v655 = vld [vmem:[%s647 + $0x8] sm:$0xff]
        %v656 = vpack.c.bf16 %v655, %v654
        %v657 = vld [vmem:[#allocation2] sm:$0x3]
        %v658 = vld [vmem:[#allocation5] sm:$0x1]
        %v660 = vperm.slane %v658, 0
        %vm662 = vcmask 31744
        %v664 = vsel %vm662, %v656, 0
        %vm666 = vcmask 1041408
        %v668 = vsel %vm666, %v657, 0
        %670 = vmatpush.bf16.msra.mxu0 0
        %671 = vmatpush.bf16.msra.mxu0 0
        %672 = vmatpush.bf16.msra.mxu0 0
        %673 = vmatpush.bf16.msra.mxu0 0
        %674 = vmatpush.bf16.msra.mxu0 0
        %675 = vmatpush.bf16.msra.mxu0 0
        %676 = vmatpush.bf16.msra.mxu0 0
        %677 = vmatpush.bf16.msra.mxu0 %v668
        %678 = vmatmul.bf16.gmra.mxu0 %v664
        %v679 = vpop.f32.mrf.mxu0
        %v680 = vadd.f32 %v660, %v679
        %v681 = vpop.f32.mrf.mxu0
        %v682 = vadd.f32 %v660, %v681
        %683 = vdwg.mxu0
        %v684 = vmul.f32 %v680, 0.2
        %v685 = vmul.f32 %v682, 0.2
        %v686 = vpack.c.bf16 %v684, %v684
        %v687 = vpack.c.bf16 %v685, %v685
        %v688 = vpack.c.bf16 %v680, %v680
        %v689 = vpack.c.bf16 %v682, %v682
        %v692 = vunpack.c.l.b16 %v686
        %v693 = vunpack.c.l.b16 %v687
        %v694 = vpack.c.b16 %v693, %v692
        %v697 = vunpack.c.l.b16 %v688
        %v698 = vunpack.c.l.b16 %v689
        %v699 = vpack.c.b16 %v698, %v697
        %700 = vrot.lane.b32.xlu0 %v699, 103
        %v701 = vpop.permute.xlu0 %700
        %vm702 = vcmask 203776
        %v704 = vsel %vm702, %v694, 0
        %v707 = vsel %vm702, %v701, 0
        %709 = vmatpush.bf16.xpose.msra.mxu0 0
        %710 = vmatpush.bf16.xpose.msra.mxu0 0
        %711 = vmatpush.bf16.xpose.msra.mxu0 0
        %712 = vmatpush.bf16.xpose.msra.mxu0 0
        %713 = vmatpush.bf16.xpose.msra.mxu0 0
        %714 = vmatpush.bf16.xpose.msra.mxu0 0
        %715 = vmatpush.bf16.xpose.msra.mxu0 0
        %716 = vmatpush.bf16.xpose.msra.mxu0 %v707
        %717 = vmatmul.bf16.gmra.mxu0 %v704
        %v718 = vpop.f32.mrf.mxu0
        %v719 = vadd.f32 0.0, %v718
        %v720 = vpop.f32.mrf.mxu0
        %v721 = vadd.f32 0.0, %v720
        %722 = vdwg.mxu0
        %vm723 = vcmp.gt.s32.totalorder %v653, %v650
        %vm724 = vcmp.gt.s32.totalorder %v653, %v651
        %v725 = vsel %vm723, -inf, %v719
        %v726 = vsel %vm724, -inf, %v721
        %vm727 = vcmask 130048
        %v728 = vsel %vm727, %v725, -inf
        %v729 = vsel %vm727, %v726, -inf
        %v730 = vmax.f32 %v728, %v729
        %v731 = vrot.slane %v730, 4
        %v732 = vmax.f32 %v730, %v731
        %v733 = vrot.slane %v732, 2
        %v734 = vmax.f32 %v732, %v733
        %v735 = vrot.slane %v734, 1
        %v736 = vmax.f32 %v734, %v735
        %v737 = vsub.f32 %v725, %v736
        %v738 = vsub.f32 %v726, %v736
        %v739 = vmul.f32 %v737, 1.442695
        %v740 = vpow.pop %v739
        %v741 = vmul.f32 %v738, 1.442695
        %v742 = vpow.pop %v741
        %v743 = vsel %vm727, %v740, 0.0
        %v744 = vsel %vm727, %v742, 0.0
        %v745 = vadd.f32 %v743, %v744
        %v746 = vrot.slane %v745, 4
        %v747 = vadd.f32 %v745, %v746
        %v748 = vrot.slane %v747, 2
        %v749 = vadd.f32 %v747, %v748
        %v750 = vrot.slane %v749, 1
        %v751 = vadd.f32 %v749, %v750
        %v752 = vrcp.pop %v751
        %v753 = vlaneseq
        %v754 = vshrl.u32 %v753, 7
        %756 = vset.pattern.permute.xlu0 %v754
        %757 = vperm.xlu0 %756, %v752
        %v758 = vpop.permute.xlu0 %757
        %v759 = vlaneseq
        %v760 = vshrl.u32 %v759, 7
        %v761 = vadd.s32 %v760, 8
        %762 = vset.pattern.permute.xlu0 %v761
        %763 = vperm.xlu0 %762, %v752
        %v764 = vpop.permute.xlu0 %763
        %v765 = vmul.f32 %v680, %v758
        %v766 = vmul.f32 %v682, %v764
        %769 = vrot.lane.b32.xlu0 %v765, 78
        %v770 = vpop.permute.xlu0 %769
        %771 = vrot.lane.b32.xlu0 %v766, 78
        %v772 = vpop.permute.xlu0 %771
        %v775 = vsel %vm662, %v770, %v758
        %v776 = vsel %vm662, %v772, %v764
        %v777 = vpack.c.bf16 %v740, %v740
        %v778 = vpack.c.bf16 %v742, %v742
        %v779 = vpack.c.bf16 %v775, %v775
        %v780 = vpack.c.bf16 %v776, %v776
        %v783 = vunpack.c.l.b16 %v777
        %v784 = vunpack.c.l.b16 %v778
        %v785 = vpack.c.b16 %v784, %v783
        %v788 = vunpack.c.l.b16 %v779
        %v789 = vunpack.c.l.b16 %v780
        %v790 = vpack.c.b16 %v789, %v788
        %v793 = vsel %vm727, %v785, 0
        %795 = vmatpush.bf16.msra.mxu0 0
        %796 = vmatpush.bf16.msra.mxu0 0
        %797 = vmatpush.bf16.msra.mxu0 0
        %798 = vmatpush.bf16.msra.mxu0 0
        %799 = vmatpush.bf16.msra.mxu0 0
        %800 = vmatpush.bf16.msra.mxu0 0
        %801 = vmatpush.bf16.msra.mxu0 0
        %802 = vmatpush.bf16.msra.mxu0 %v790
        %803 = vmatmul.bf16.gmra.mxu0 %v793
        %v804 = vpop.f32.mrf.mxu0
        %v805 = vadd.f32 0.0, %v804
        %v806 = vpop.f32.mrf.mxu0
        %v807 = vadd.f32 0.0, %v806
        %808 = vdwg.mxu0
        %vm809 = vcmask 39968
        %v810 = vsel %vm809, %v805, -inf
        %v811 = vsel %vm809, %v807, -inf
        %v812 = vmax.f32 %v810, %v811
        %v813 = vrot.slane %v812, 4
        %v814 = vmax.f32 %v812, %v813
        %v815 = vrot.slane %v814, 2
        %v816 = vmax.f32 %v814, %v815
        %v817 = vrot.slane %v816, 1
        %v818 = vmax.f32 %v816, %v817
        %v819 = vsub.f32 %v805, %v818
        %v820 = vsub.f32 %v807, %v818
        %v821 = vmul.f32 %v819, 1.442695
        %v822 = vpow.pop %v821
        %v823 = vmul.f32 %v820, 1.442695
        %v824 = vpow.pop %v823
        %v825 = vsel %vm809, %v822, 0.0
        %v826 = vsel %vm809, %v824, 0.0
        %v827 = vadd.f32 %v825, %v826
        %v828 = vrot.slane %v827, 4
        %v829 = vadd.f32 %v827, %v828
        %v830 = vrot.slane %v829, 2
        %v831 = vadd.f32 %v829, %v830
        %v832 = vrot.slane %v831, 1
        %v833 = vadd.f32 %v831, %v832
        %v834 = vrcp.pop %v833
        %v835 = vmul.f32 %v833, %v834
        %v836 = vsub.f32 1.0, %v835
        %v837 = vmul.f32 %v834, %v836
        %v838 = vadd.f32 %v834, %v837
        %vm839 = vweird.f32 %v833
        %vm840 = vweird.f32 %v834
        %vm841 = vmor %vm839, %vm840
        %v842 = vsel %vm841, %v834, %v838
        %v843 = vand.u32 2147483647, %v833
        %vm844 = vcmp.eq.f32.partialorder %v843, 8.507059e+37
        %v845 = vand.u32 %v833, 2147483648
        %v846 = vor.u32 1.1754944e-38, %v845
        %v847 = vsel %vm844, %v846, %v842
        %v848 = vmul.f32 %v822, %v847
        %v849 = vmul.f32 %v824, %v847
        %v852 = vrot.slane %v805, 6
        %v853 = vrot.slane %v807, 6
        %v854 = vsel %vm666, %v852, %v853
        %v857 = vsel %vm666, 0.0, %v852
        %v858 = vpack.c.bf16 %v854, %v857
        %v859 = vld [vmem:[%s3] sm:$0x3]
        %vm860 = vcmask 1040384
        %v861 = vrot.slane %v805, 7
        %v862 = vrot.slane %v807, 7
        %v863 = vsel %vm860, %v861, %v862
        %v866 = vsel %vm860, 0.0, %v861
        %v867 = vpack.c.bf16 %v863, %v866
        %s868 = scalar_lea.vmem %s3, 2
        %v869 = vld [vmem:[%s868] sm:$0x3]
        %v871 = vsel %vm662, %v867, 0
        %v874 = vsel %vm666, %v869, 0
        %876 = vmatpush.bf16.msra.mxu0 0
        %877 = vmatpush.bf16.msra.mxu0 0
        %878 = vmatpush.bf16.msra.mxu0 0
        %879 = vmatpush.bf16.msra.mxu0 0
        %880 = vmatpush.bf16.msra.mxu0 0
        %881 = vmatpush.bf16.msra.mxu0 0
        %882 = vmatpush.bf16.msra.mxu0 0
        %883 = vmatpush.bf16.msra.mxu0 %v874
        %884 = vmatmul.bf16.gmra.mxu0 %v871
        %v885 = vpop.f32.mrf.mxu0
        %v886 = vadd.f32 0.0, %v885
        %v887 = vpop.f32.mrf.mxu0
        %v888 = vadd.f32 0.0, %v887
        %889 = vdwg.mxu0
        %v891 = vsel %vm662, %v858, 0
        %v894 = vsel %vm666, %v859, 0
        %896 = vmatpush.bf16.msra.mxu0 0
        %897 = vmatpush.bf16.msra.mxu0 0
        %898 = vmatpush.bf16.msra.mxu0 0
        %899 = vmatpush.bf16.msra.mxu0 0
        %900 = vmatpush.bf16.msra.mxu0 0
        %901 = vmatpush.bf16.msra.mxu0 0
        %902 = vmatpush.bf16.msra.mxu0 0
        %903 = vmatpush.bf16.msra.mxu0 %v894
        %904 = vmatmul.bf16.gmra.mxu0 %v891
        %v905 = vpop.f32.mrf.mxu0
        %v906 = vadd.f32 %v886, %v905
        %v907 = vpop.f32.mrf.mxu0
        %v908 = vadd.f32 %v888, %v907
        %909 = vdwg.mxu0
        %v910 = vpack.c.bf16 %v807, %v805
        %s911 = scalar_lea.vmem %s3, 4
        %v912 = vld [vmem:[%s911] sm:$0x3]
        %v914 = vsel %vm662, %v910, 0
        %v917 = vsel %vm666, %v912, 0
        %919 = vmatpush.bf16.msra.mxu0 0
        %920 = vmatpush.bf16.msra.mxu0 0
        %921 = vmatpush.bf16.msra.mxu0 0
        %922 = vmatpush.bf16.msra.mxu0 0
        %923 = vmatpush.bf16.msra.mxu0 0
        %924 = vmatpush.bf16.msra.mxu0 0
        %925 = vmatpush.bf16.msra.mxu0 0
        %926 = vmatpush.bf16.msra.mxu0 %v917
        %927 = vmatmul.bf16.gmra.mxu0 %v914
        %v928 = vpop.f32.mrf.mxu0
        %v929 = vadd.f32 0.0, %v928
        %v930 = vpop.f32.mrf.mxu0
        %v931 = vadd.f32 0.0, %v930
        %932 = vdwg.mxu0
        %v933 = vadd.f32 %v906, %v929
        %v934 = vadd.f32 %v908, %v931
        %v935 = vld [vmem:[#allocation7] sm:$0x1]
        %v937 = vperm.slane %v935, 0
        %v939 = vadd.f32 %v933, %v937
        %v940 = vadd.f32 %v934, %v937
        %v941 = vmax.f32 %v939, 0.0
        %v942 = vmax.f32 %v940, 0.0
        %v945 = vrot.slane %v941, 6
        %v946 = vrot.slane %v942, 6
        %v947 = vsel %vm666, %v945, %v946
        %v950 = vsel %vm666, 0.0, %v945
        %v951 = vpack.c.bf16 %v947, %v950
        %v952 = vld [vmem:[%s5] sm:$0xf]
        %v953 = vrot.slane %v941, 7
        %v954 = vrot.slane %v942, 7
        %v955 = vsel %vm860, %v953, %v954
        %v958 = vsel %vm860, 0.0, %v953
        %v959 = vpack.c.bf16 %v955, %v958
        %s960 = scalar_lea.vmem %s5, 4
        %v961 = vld [vmem:[%s960] sm:$0xf]
        %vm962 = vcmask 64512
        %v964 = vsel %vm962, %v959, 0
        %vm966 = vcmask 1043456
        %v968 = vsel %vm966, %v961, 0
        %970 = vmatpush.bf16.msra.mxu0 0
        %971 = vmatpush.bf16.msra.mxu0 0
        %972 = vmatpush.bf16.msra.mxu0 0
        %973 = vmatpush.bf16.msra.mxu0 0
        %974 = vmatpush.bf16.msra.mxu0 0
        %975 = vmatpush.bf16.msra.mxu0 0
        %976 = vmatpush.bf16.msra.mxu0 0
        %977 = vmatpush.bf16.msra.mxu0 %v968
        %978 = vmatmul.bf16.gmra.mxu0 %v964
        %v979 = vpop.f32.mrf.mxu0
        %v980 = vadd.f32 0.0, %v979
        %v981 = vpop.f32.mrf.mxu0
        %v982 = vadd.f32 0.0, %v981
        %983 = vdwg.mxu0
        %v985 = vsel %vm962, %v951, 0
        %v988 = vsel %vm966, %v952, 0
        %990 = vmatpush.bf16.msra.mxu0 0
        %991 = vmatpush.bf16.msra.mxu0 0
        %992 = vmatpush.bf16.msra.mxu0 0
        %993 = vmatpush.bf16.msra.mxu0 0
        %994 = vmatpush.bf16.msra.mxu0 0
        %995 = vmatpush.bf16.msra.mxu0 0
        %996 = vmatpush.bf16.msra.mxu0 0
        %997 = vmatpush.bf16.msra.mxu0 %v988
        %998 = vmatmul.bf16.gmra.mxu0 %v985
        %v999 = vpop.f32.mrf.mxu0
        %v1000 = vadd.f32 %v980, %v999
        %v1001 = vpop.f32.mrf.mxu0
        %v1002 = vadd.f32 %v982, %v1001
        %1003 = vdwg.mxu0
        %v1004 = vpack.c.bf16 %v942, %v941
        %s1005 = scalar_lea.vmem %s5, 8
        %v1006 = vld [vmem:[%s1005] sm:$0xf]
        %v1008 = vsel %vm962, %v1004, 0
        %v1011 = vsel %vm966, %v1006, 0
        %1013 = vmatpush.bf16.msra.mxu0 0
        %1014 = vmatpush.bf16.msra.mxu0 0
        %1015 = vmatpush.bf16.msra.mxu0 0
        %1016 = vmatpush.bf16.msra.mxu0 0
        %1017 = vmatpush.bf16.msra.mxu0 0
        %1018 = vmatpush.bf16.msra.mxu0 0
        %1019 = vmatpush.bf16.msra.mxu0 0
        %1020 = vmatpush.bf16.msra.mxu0 %v1011
        %1021 = vmatmul.bf16.gmra.mxu0 %v1008
        %v1022 = vpop.f32.mrf.mxu0
        %v1023 = vadd.f32 0.0, %v1022
        %v1024 = vpop.f32.mrf.mxu0
        %v1025 = vadd.f32 0.0, %v1024
        %1026 = vdwg.mxu0
        %v1027 = vadd.f32 %v1000, %v1023
        %v1028 = vadd.f32 %v1002, %v1025
        %v1029 = vld [vmem:[#allocation8] sm:$0x1]
        %v1031 = vperm.slane %v1029, 0
        %v1033 = vadd.f32 %v1027, %v1031
        %v1034 = vadd.f32 %v1028, %v1031
        %v1035 = vmax.f32 %v1033, 0.0
        %v1036 = vmax.f32 %v1034, 0.0
        %v1037 = vadd.f32 %v848, 1.0
        %v1038 = vadd.f32 %v849, 1.0
        %1040 = vset.pattern.permute.xlu0 4
        %1041 = vperm.xlu0 %1040, %v1037
        %v1042 = vpop.permute.xlu0 %1041
        %1045 = vset.pattern.permute.xlu0 4
        %1046 = vperm.xlu0 %1045, %v1038
        %v1047 = vpop.permute.xlu0 %1046
        %v1049 = vmul.f32 %v1042, %v654
        %v1050 = vmul.f32 %v1047, %v655
        %v1051 = vpack.c.bf16 %v1050, %v1049
        %v1052 = vld [vmem:[#allocation10] sm:$0x3]
        %v1053 = vld [vmem:[#allocation11] sm:$0x1]
        %v1055 = vperm.slane %v1053, 0
        %v1058 = vsel %vm662, %v1051, 0
        %v1061 = vsel %vm666, %v1052, 0
        %1063 = vmatpush.bf16.msra.mxu0 0
        %1064 = vmatpush.bf16.msra.mxu0 0
        %1065 = vmatpush.bf16.msra.mxu0 0
        %1066 = vmatpush.bf16.msra.mxu0 0
        %1067 = vmatpush.bf16.msra.mxu0 0
        %1068 = vmatpush.bf16.msra.mxu0 0
        %1069 = vmatpush.bf16.msra.mxu0 0
        %1070 = vmatpush.bf16.msra.mxu0 %v1061
        %1071 = vmatmul.bf16.gmra.mxu0 %v1058
        %v1072 = vpop.f32.mrf.mxu0
        %v1073 = vadd.f32 %v1055, %v1072
        %v1074 = vpop.f32.mrf.mxu0
        %v1075 = vadd.f32 %v1055, %v1074
        %1076 = vdwg.mxu0
        %v1077 = vadd.f32 %v1035, %v1073
        %v1078 = vadd.f32 %v1036, %v1075
        %v1079 = vmax.f32 %v1077, 0.0
        %v1080 = vmax.f32 %v1078, 0.0
        %v1081 = vpack.c.bf16 %v1080, %v1079
        %v1082 = vld [vmem:[%s9] sm:$0xf]
        %v1083 = vld [vmem:[#allocation13] sm:$0x1]
        %v1085 = vperm.slane %v1083, 0
        %v1088 = vsel %vm962, %v1081, 0
        %v1091 = vsel %vm966, %v1082, 0
        %1093 = vmatpush.bf16.msra.mxu0 0
        %1094 = vmatpush.bf16.msra.mxu0 0
        %1095 = vmatpush.bf16.msra.mxu0 0
        %1096 = vmatpush.bf16.msra.mxu0 0
        %1097 = vmatpush.bf16.msra.mxu0 0
        %1098 = vmatpush.bf16.msra.mxu0 0
        %1099 = vmatpush.bf16.msra.mxu0 0
        %1100 = vmatpush.bf16.msra.mxu0 %v1091
        %1101 = vmatmul.bf16.gmra.mxu0 %v1088
        %v1102 = vpop.f32.mrf.mxu0
        %v1103 = vadd.f32 %v1085, %v1102
        %v1104 = vpop.f32.mrf.mxu0
        %v1105 = vadd.f32 %v1085, %v1104
        %1106 = vdwg.mxu0
        %v1107 = vmul.f32 %v1103, 0.2
        %v1108 = vmul.f32 %v1105, 0.2
        %v1109 = vpack.c.bf16 %v1107, %v1107
        %v1110 = vpack.c.bf16 %v1108, %v1108
        %v1111 = vpack.c.bf16 %v1103, %v1103
        %v1112 = vpack.c.bf16 %v1105, %v1105
        %v1115 = vunpack.c.l.b16 %v1109
        %v1116 = vunpack.c.l.b16 %v1110
        %v1117 = vpack.c.b16 %v1116, %v1115
        %v1120 = vunpack.c.l.b16 %v1111
        %v1121 = vunpack.c.l.b16 %v1112
        %v1122 = vpack.c.b16 %v1121, %v1120
        %1123 = vrot.lane.b32.xlu0 %v1122, 103
        %v1124 = vpop.permute.xlu0 %1123
        %v1126 = vsel %vm702, %v1117, 0
        %v1129 = vsel %vm702, %v1124, 0
        %1131 = vmatpush.bf16.xpose.msra.mxu0 0
        %1132 = vmatpush.bf16.xpose.msra.mxu0 0
        %1133 = vmatpush.bf16.xpose.msra.mxu0 0
        %1134 = vmatpush.bf16.xpose.msra.mxu0 0
        %1135 = vmatpush.bf16.xpose.msra.mxu0 0
        %1136 = vmatpush.bf16.xpose.msra.mxu0 0
        %1137 = vmatpush.bf16.xpose.msra.mxu0 0
        %1138 = vmatpush.bf16.xpose.msra.mxu0 %v1129
        %1139 = vmatmul.bf16.gmra.mxu0 %v1126
        %v1140 = vpop.f32.mrf.mxu0
        %v1141 = vadd.f32 0.0, %v1140
        %v1142 = vpop.f32.mrf.mxu0
        %v1143 = vadd.f32 0.0, %v1142
        %1144 = vdwg.mxu0
        %v1145 = vsel %vm723, -inf, %v1141
        %v1146 = vsel %vm724, -inf, %v1143
        %v1147 = vsel %vm727, %v1145, -inf
        %v1148 = vsel %vm727, %v1146, -inf
        %v1149 = vmax.f32 %v1147, %v1148
        %v1150 = vrot.slane %v1149, 4
        %v1151 = vmax.f32 %v1149, %v1150
        %v1152 = vrot.slane %v1151, 2
        %v1153 = vmax.f32 %v1151, %v1152
        %v1154 = vrot.slane %v1153, 1
        %v1155 = vmax.f32 %v1153, %v1154
        %v1156 = vsub.f32 %v1145, %v1155
        %v1157 = vsub.f32 %v1146, %v1155
        %v1158 = vmul.f32 %v1156, 1.442695
        %v1159 = vpow.pop %v1158
        %v1160 = vmul.f32 %v1157, 1.442695
        %v1161 = vpow.pop %v1160
        %v1162 = vsel %vm727, %v1159, 0.0
        %v1163 = vsel %vm727, %v1161, 0.0
        %v1164 = vadd.f32 %v1162, %v1163
        %v1165 = vrot.slane %v1164, 4
        %v1166 = vadd.f32 %v1164, %v1165
        %v1167 = vrot.slane %v1166, 2
        %v1168 = vadd.f32 %v1166, %v1167
        %v1169 = vrot.slane %v1168, 1
        %v1170 = vadd.f32 %v1168, %v1169
        %v1171 = vrcp.pop %v1170
        %v1172 = vlaneseq
        %v1173 = vshrl.u32 %v1172, 7
        %1175 = vset.pattern.permute.xlu0 %v1173
        %1176 = vperm.xlu0 %1175, %v1171
        %v1177 = vpop.permute.xlu0 %1176
        %v1178 = vlaneseq
        %v1179 = vshrl.u32 %v1178, 7
        %v1180 = vadd.s32 %v1179, 8
        %1181 = vset.pattern.permute.xlu0 %v1180
        %1182 = vperm.xlu0 %1181, %v1171
        %v1183 = vpop.permute.xlu0 %1182
        %v1184 = vmul.f32 %v1103, %v1177
        %v1185 = vmul.f32 %v1105, %v1183
        %1188 = vrot.lane.b32.xlu0 %v1184, 78
        %v1189 = vpop.permute.xlu0 %1188
        %1190 = vrot.lane.b32.xlu0 %v1185, 78
        %v1191 = vpop.permute.xlu0 %1190
        %v1194 = vsel %vm962, %v1189, %v1177
        %v1195 = vsel %vm962, %v1191, %v1183
        %v1196 = vpack.c.bf16 %v1159, %v1159
        %v1197 = vpack.c.bf16 %v1161, %v1161
        %v1198 = vpack.c.bf16 %v1194, %v1194
        %v1199 = vpack.c.bf16 %v1195, %v1195
        %v1202 = vunpack.c.l.b16 %v1196
        %v1203 = vunpack.c.l.b16 %v1197
        %v1204 = vpack.c.b16 %v1203, %v1202
        %v1207 = vunpack.c.l.b16 %v1198
        %v1208 = vunpack.c.l.b16 %v1199
        %v1209 = vpack.c.b16 %v1208, %v1207
        %v1212 = vsel %vm727, %v1204, 0
        %1214 = vmatpush.bf16.msra.mxu0 0
        %1215 = vmatpush.bf16.msra.mxu0 0
        %1216 = vmatpush.bf16.msra.mxu0 0
        %1217 = vmatpush.bf16.msra.mxu0 0
        %1218 = vmatpush.bf16.msra.mxu0 0
        %1219 = vmatpush.bf16.msra.mxu0 0
        %1220 = vmatpush.bf16.msra.mxu0 0
        %1221 = vmatpush.bf16.msra.mxu0 %v1209
        %1222 = vmatmul.bf16.gmra.mxu0 %v1212
        %v1223 = vpop.f32.mrf.mxu0
        %v1224 = vadd.f32 0.0, %v1223
        %v1225 = vpop.f32.mrf.mxu0
        %v1226 = vadd.f32 0.0, %v1225
        %1227 = vdwg.mxu0
        %vm1228 = vcmask 72768
        %v1229 = vsel %vm1228, %v1224, -inf
        %v1230 = vsel %vm1228, %v1226, -inf
        %v1231 = vmax.f32 %v1229, %v1230
        %v1232 = vrot.slane %v1231, 4
        %v1233 = vmax.f32 %v1231, %v1232
        %v1234 = vrot.slane %v1233, 2
        %v1235 = vmax.f32 %v1233, %v1234
        %v1236 = vrot.slane %v1235, 1
        %v1237 = vmax.f32 %v1235, %v1236
        %v1238 = vsub.f32 %v1224, %v1237
        %v1239 = vsub.f32 %v1226, %v1237
        %v1240 = vmul.f32 %v1238, 1.442695
        %v1241 = vpow.pop %v1240
        %v1242 = vmul.f32 %v1239, 1.442695
        %v1243 = vpow.pop %v1242
        %v1244 = vsel %vm1228, %v1241, 0.0
        %v1245 = vsel %vm1228, %v1243, 0.0
        %v1246 = vadd.f32 %v1244, %v1245
        %v1247 = vrot.slane %v1246, 4
        %v1248 = vadd.f32 %v1246, %v1247
        %v1249 = vrot.slane %v1248, 2
        %v1250 = vadd.f32 %v1248, %v1249
        %v1251 = vrot.slane %v1250, 1
        %v1252 = vadd.f32 %v1250, %v1251
        %v1253 = vrcp.pop %v1252
        %v1254 = vmul.f32 %v1252, %v1253
        %v1255 = vsub.f32 1.0, %v1254
        %v1256 = vmul.f32 %v1253, %v1255
        %v1257 = vadd.f32 %v1253, %v1256
        %vm1258 = vweird.f32 %v1252
        %vm1259 = vweird.f32 %v1253
        %vm1260 = vmor %vm1258, %vm1259
        %v1261 = vsel %vm1260, %v1253, %v1257
        %v1262 = vand.u32 2147483647, %v1252
        %vm1263 = vcmp.eq.f32.partialorder %v1262, 8.507059e+37
        %v1264 = vand.u32 %v1252, 2147483648
        %v1265 = vor.u32 1.1754944e-38, %v1264
        %v1266 = vsel %vm1263, %v1265, %v1261
        %v1267 = vmul.f32 %v1243, %v1266
        %v1270 = vrot.slane %v1224, 4
        %v1271 = vrot.slane %v1226, 4
        %v1272 = vsel %vm966, %v1270, %v1271
        %v1275 = vsel %vm966, 0.0, %v1270
        %v1276 = vpack.c.bf16 %v1272, %v1275
        %v1277 = vld [vmem:[%s11] sm:$0xf]
        %v1278 = vrot.slane %v1224, 6
        %v1279 = vrot.slane %v1226, 6
        %v1280 = vsel %vm666, %v1278, %v1279
        %v1283 = vsel %vm666, 0.0, %v1278
        %v1284 = vpack.c.bf16 %v1280, %v1283
        %s1285 = scalar_lea.vmem %s11, 4
        %v1286 = vld [vmem:[%s1285] sm:$0xf]
        %v1288 = vsel %vm962, %v1284, 0
        %v1291 = vsel %vm966, %v1286, 0
        %1293 = vmatpush.bf16.msra.mxu0 0
        %1294 = vmatpush.bf16.msra.mxu0 0
        %1295 = vmatpush.bf16.msra.mxu0 0
        %1296 = vmatpush.bf16.msra.mxu0 0
        %1297 = vmatpush.bf16.msra.mxu0 0
        %1298 = vmatpush.bf16.msra.mxu0 0
        %1299 = vmatpush.bf16.msra.mxu0 0
        %1300 = vmatpush.bf16.msra.mxu0 %v1291
        %1301 = vmatmul.bf16.gmra.mxu0 %v1288
        %v1302 = vpop.f32.mrf.mxu0
        %v1303 = vadd.f32 0.0, %v1302
        %v1304 = vpop.f32.mrf.mxu0
        %v1305 = vadd.f32 0.0, %v1304
        %1306 = vdwg.mxu0
        %v1308 = vsel %vm962, %v1276, 0
        %v1311 = vsel %vm966, %v1277, 0
        %1313 = vmatpush.bf16.msra.mxu0 0
        %1314 = vmatpush.bf16.msra.mxu0 0
        %1315 = vmatpush.bf16.msra.mxu0 0
        %1316 = vmatpush.bf16.msra.mxu0 0
        %1317 = vmatpush.bf16.msra.mxu0 0
        %1318 = vmatpush.bf16.msra.mxu0 0
        %1319 = vmatpush.bf16.msra.mxu0 0
        %1320 = vmatpush.bf16.msra.mxu0 %v1311
        %1321 = vmatmul.bf16.gmra.mxu0 %v1308
        %v1322 = vpop.f32.mrf.mxu0
        %v1323 = vadd.f32 %v1303, %v1322
        %v1324 = vpop.f32.mrf.mxu0
        %v1325 = vadd.f32 %v1305, %v1324
        %1326 = vdwg.mxu0
        %v1327 = vpack.c.bf16 %v1226, %v1224
        %s1328 = scalar_lea.vmem %s11, 8
        %v1329 = vld [vmem:[%s1328] sm:$0xf]
        %v1331 = vsel %vm962, %v1327, 0
        %v1334 = vsel %vm966, %v1329, 0
        %1336 = vmatpush.bf16.msra.mxu0 0
        %1337 = vmatpush.bf16.msra.mxu0 0
        %1338 = vmatpush.bf16.msra.mxu0 0
        %1339 = vmatpush.bf16.msra.mxu0 0
        %1340 = vmatpush.bf16.msra.mxu0 0
        %1341 = vmatpush.bf16.msra.mxu0 0
        %1342 = vmatpush.bf16.msra.mxu0 0
        %1343 = vmatpush.bf16.msra.mxu0 %v1334
        %1344 = vmatmul.bf16.gmra.mxu0 %v1331
        %v1345 = vpop.f32.mrf.mxu0
        %v1346 = vadd.f32 0.0, %v1345
        %v1347 = vpop.f32.mrf.mxu0
        %v1348 = vadd.f32 0.0, %v1347
        %1349 = vdwg.mxu0
        %v1350 = vadd.f32 %v1323, %v1346
        %v1351 = vadd.f32 %v1325, %v1348
        %v1352 = vld [vmem:[%s12] sm:$0x1]
        %v1354 = vperm.slane %v1352, 0
        %v1356 = vadd.f32 %v1350, %v1354
        %v1357 = vadd.f32 %v1351, %v1354
        %v1358 = vmax.f32 %v1356, 0.0
        %v1359 = vmax.f32 %v1357, 0.0
        %v1362 = vrot.slane %v1358, 4
        %v1363 = vrot.slane %v1359, 4
        %v1364 = vsel %vm966, %v1362, %v1363
        %v1367 = vsel %vm966, 0.0, %v1362
        %v1368 = vpack.c.bf16 %v1364, %v1367
        %v1369 = vld [vmem:[%s13] sm:$0xf]
        %v1370 = vrot.slane %v1358, 6
        %v1371 = vrot.slane %v1359, 6
        %v1372 = vsel %vm666, %v1370, %v1371
        %v1375 = vsel %vm666, 0.0, %v1370
        %v1376 = vpack.c.bf16 %v1372, %v1375
        %s1377 = scalar_lea.vmem %s13, 4
        %v1378 = vld [vmem:[%s1377] sm:$0xf]
        %v1380 = vsel %vm962, %v1376, 0
        %v1383 = vsel %vm966, %v1378, 0
        %1385 = vmatpush.bf16.msra.mxu0 0
        %1386 = vmatpush.bf16.msra.mxu0 0
        %1387 = vmatpush.bf16.msra.mxu0 0
        %1388 = vmatpush.bf16.msra.mxu0 0
        %1389 = vmatpush.bf16.msra.mxu0 0
        %1390 = vmatpush.bf16.msra.mxu0 0
        %1391 = vmatpush.bf16.msra.mxu0 0
        %1392 = vmatpush.bf16.msra.mxu0 %v1383
        %1393 = vmatmul.bf16.gmra.mxu0 %v1380
        %v1394 = vpop.f32.mrf.mxu0
        %v1395 = vpop.f32.mrf.mxu0
        %v1396 = vadd.f32 0.0, %v1395
        %1397 = vdwg.mxu0
        %v1399 = vsel %vm962, %v1368, 0
        %v1402 = vsel %vm966, %v1369, 0
        %1404 = vmatpush.bf16.msra.mxu0 0
        %1405 = vmatpush.bf16.msra.mxu0 0
        %1406 = vmatpush.bf16.msra.mxu0 0
        %1407 = vmatpush.bf16.msra.mxu0 0
        %1408 = vmatpush.bf16.msra.mxu0 0
        %1409 = vmatpush.bf16.msra.mxu0 0
        %1410 = vmatpush.bf16.msra.mxu0 0
        %1411 = vmatpush.bf16.msra.mxu0 %v1402
        %1412 = vmatmul.bf16.gmra.mxu0 %v1399
        %v1413 = vpop.f32.mrf.mxu0
        %v1414 = vpop.f32.mrf.mxu0
        %v1415 = vadd.f32 %v1396, %v1414
        %1416 = vdwg.mxu0
        %v1417 = vpack.c.bf16 %v1359, %v1358
        %s1418 = scalar_lea.vmem %s13, 8
        %v1419 = vld [vmem:[%s1418] sm:$0xf]
        %v1421 = vsel %vm962, %v1417, 0
        %v1424 = vsel %vm966, %v1419, 0
        %1426 = vmatpush.bf16.msra.mxu0 0
        %1427 = vmatpush.bf16.msra.mxu0 0
        %1428 = vmatpush.bf16.msra.mxu0 0
        %1429 = vmatpush.bf16.msra.mxu0 0
        %1430 = vmatpush.bf16.msra.mxu0 0
        %1431 = vmatpush.bf16.msra.mxu0 0
        %1432 = vmatpush.bf16.msra.mxu0 0
        %1433 = vmatpush.bf16.msra.mxu0 %v1424
        %1434 = vmatmul.bf16.gmra.mxu0 %v1421
        %v1435 = vpop.f32.mrf.mxu0
        %v1436 = vpop.f32.mrf.mxu0
        %v1437 = vadd.f32 0.0, %v1436
        %1438 = vdwg.mxu0
        %v1439 = vadd.f32 %v1415, %v1437
        %v1440 = vld [vmem:[%s14] sm:$0x1]
        %v1442 = vperm.slane %v1440, 0
        %v1444 = vadd.f32 %v1439, %v1442
        %v1445 = vmax.f32 %v1444, 0.0
        %v1446 = vadd.f32 %v1267, 1.0
        %1448 = vset.pattern.permute.xlu0 8
        %1449 = vperm.xlu0 %1448, %v1446
        %v1450 = vpop.permute.xlu0 %1449
        %v1452 = vmul.f32 %v1450, %v1080
        %v1453 = vadd.f32 %v1445, %v1452
        %v1454 = vmax.f32 %v1453, 0.0
        %v1455 = vpack.c.bf16 %v1454, %v1454
        %v1456 = vld [vmem:[%s15] sm:$0xf]
        %v1457 = vld [vmem:[%s16] sm:$0x1]
        %v1459 = vshrl.u32 %v1455, 16
        %v1461 = vrot.slane %v1459, 3
        %v1463 = vsel %vm962, %v1461, 0
        %v1466 = vsel %vm966, %v1456, 0
        %1468 = vmatpush.bf16.msra.mxu0 0
        %1469 = vmatpush.bf16.msra.mxu0 0
        %1470 = vmatpush.bf16.msra.mxu0 0
        %1471 = vmatpush.bf16.msra.mxu0 0
        %1472 = vmatpush.bf16.msra.mxu0 0
        %1473 = vmatpush.bf16.msra.mxu0 0
        %1474 = vmatpush.bf16.msra.mxu0 0
        %1475 = vmatpush.bf16.msra.mxu0 %v1466
        %1476 = vmatmul.bf16.gmra.mxu0 %v1463
        %v1477 = vpop.f32.mrf.mxu0
        %v1478 = vadd.f32 %v1457, %v1477
        %v1479 = vpop.f32.mrf.mxu0
        %1480 = vdwg.mxu0
        %vm1481 = vcmask 73728
        %v1482 = vsel %vm1481, %v1478, -inf
        %1483 = vmax.xlane.f32.xlu0 %v1482
        %v1484 = vpop.xlane.xlu0 %1483
        %v1485 = vsub.f32 %v1478, %v1484
        %v1486 = vmul.f32 %v1485, 1.442695
        %v1487 = vpow.pop %v1486
        %v1488 = vsel %vm1481, %v1487, 0.0
        %1489 = vadd.xlane.f32.xlu0 %v1488
        %v1490 = vpop.xlane.xlu0 %1489
        %v1491 = vlog2.pop %v1490
        %v1492 = vmul.f32 %v1491, 0.6931472
        %v1493 = vsub.f32 %v1485, %v1492
        %1494 = vst.msk [vmem:[%s642] sm:$0x1] %vm1481, %v1493
        %s1495 = sand.u32 %s405, 1
        %s1496 = scalar_lea.sflag [#allocation4], %s1495
        %s1497 = sand.u32 %s405, 1
        %s1498 = scalar_lea.vmem [#allocation14], %s1497
        // Predicated region
        $region117: #{tpu_custom_call.1} parent=87 // pred_check
          %p1499 = pneg %p415
        $region118: #{tpu_custom_call.1} parent=87 // pred_check_branch
          %1501 = sbr.rel (%p1499) target = $region120
        $region119: #{tpu_custom_call.1} parent=87 // pred_region
          %1503 = vsyncadd %s1496, 0
          %s1504 = scalar_lea.hbm %s17, %s35
          %s1506 = sshll.u32 %s1498, 4
          %s1507 = int_to_ptr.vmem [resolvable:$true] %s1506
          %s1508 = sshll.u32 %s1504, 4
          %s1509 = int_to_ptr.hbm [resolvable:$true] %s1508
          %1511 = dma.vmem_to_hbm [thread:$0]  %s1507, 16, %s1509, %s1496
        $region120: #{tpu_custom_call.1} parent=87 // pred_fallthru
          _
      $region88: #{tpu_custom_call.1} parent=5 // pred_fallthru
        _
      %p1512 = scmp.le.s32.totalorder 2, %s30
      // Predicated region
      $region121: #{tpu_custom_call.1} parent=5 // pred_check
        %p1513 = pneg %p1512
      $region122: #{tpu_custom_call.1} parent=5 // pred_check_branch
        %1515 = sbr.rel (%p1513) target = $region124
      $region123: #{tpu_custom_call.1} parent=5 // pred_region
        %s1516 = ssub.s32 %s30, 2
        // Predicated region
        $region125: #{tpu_custom_call.1} parent=123 // pred_check
          %p1517 = pneg %p421
        $region126: #{tpu_custom_call.1} parent=123 // pred_check_branch
          %1519 = sbr.rel (%p1517) target = $region128
        $region127: #{tpu_custom_call.1} parent=123 // pred_region
          %s1520 = sand.u32 %s406, 1
          %s1521 = scalar_lea.sflag [#allocation4], %s1520
          %s1522 = sand.u32 %s406, 1
          %s1523 = scalar_lea.vmem [#allocation14], %s1522
          %1525 = dma.done %s1521, 16
        $region128: #{tpu_custom_call.1} parent=123 // pred_fallthru
          _
      $region124: #{tpu_custom_call.1} parent=5 // pred_fallthru
        _
    $region6: #{tpu_custom_call.1} parent=1 // loop_footer
      %s34 = sadd.s32 1, %s30
    $region7: #{tpu_custom_call.1} parent=1 // loop_footer_branch
      %29 = sbr.rel target = $region3
    $region8: #{tpu_custom_call.1} parent=1 // loop_exit
      _
    %1526 = vsyncpa [#allocation3], 1
    %s1527 = scalar_lea.sflag [#allocation3], 1
    %1528 = vsyncpa %s1527, 1
    %1529 = vsyncpa [#allocation6], 1
    %1530 = vsyncpa [#allocation9], 1
    %1531 = vsyncpa [#allocation12], 1
    %1532 = vsyncpa [#allocation4], 1
    %s1533 = scalar_lea.sflag [#allocation4], 1
    %1534 = vsyncpa %s1533, 1

// kernel: tpu_custom_call.1
$region0: #{tpu_custom_call.1}
  #allocation0 [shape = 'u32[]', space=smem, size = 0x4, offset = 0x4, fixed_abs, tag = 'smem constant byte address 0x4 - core index']
  #allocation1 [shape = 'u32[72,128]{1,0:T(1,128)}', space=vmem, size = 0x9000, scoped, tag = 'internal scratch']
  %s0 = inlined_call_operand.vmem [shape: f32[2,16,4], index: 0, kind: input, shape index: {}]
  %s1 = inlined_call_operand.hbm [shape: bf16[4,54], index: 1, kind: input, shape index: {}]
  %s2 = inlined_call_operand.hbm [shape: f32[1,54], index: 2, kind: input, shape index: {}]
  %s3 = inlined_call_operand.vmem [shape: bf16[3,4,8], index: 3, kind: input, shape index: {}]
  %s4 = inlined_call_operand.hbm [shape: f32[1,8], index: 4, kind: input, shape index: {}]
  %s5 = inlined_call_operand.vmem [shape: bf16[3,8,8], index: 5, kind: input, shape index: {}]
  %s6 = inlined_call_operand.hbm [shape: f32[1,8], index: 6, kind: input, shape index: {}]
  %s7 = inlined_call_operand.hbm [shape: bf16[4,8], index: 7, kind: input, shape index: {}]
  %s8 = inlined_call_operand.hbm [shape: f32[1,8], index: 8, kind: input, shape index: {}]
  %s9 = inlined_call_operand.vmem [shape: bf16[8,58], index: 9, kind: input, shape index: {}]
  %s10 = inlined_call_operand.hbm [shape: f32[1,58], index: 10, kind: input, shape index: {}]
  %s11 = inlined_call_operand.vmem [shape: bf16[3,8,8], index: 11, kind: input, shape index: {}]
  %s12 = inlined_call_operand.vmem [shape: f32[1,8], index: 12, kind: input, shape index: {}]
  %s13 = inlined_call_operand.vmem [shape: bf16[3,8,8], index: 13, kind: input, shape index: {}]
  %s14 = inlined_call_operand.vmem [shape: f32[1,8], index: 14, kind: input, shape index: {}]
  %s15 = inlined_call_operand.vmem [shape: bf16[8,10], index: 15, kind: input, shape index: {}]
  %s16 = inlined_call_operand.vmem [shape: f32[1,10], index: 16, kind: input, shape index: {}]
  %s17 = inlined_call_operand.hbm [shape: f32[2,1,10], index: 17, kind: output, shape index: {}]
  %s18 = sld [smem:[#allocation0]]
  $region129: #{tpu_custom_call.1} parent=0
    _
  %s20 = ssub.s32 1, %s18
  %s21 = scalar_select 0, %s20, %s18
  $region1: #{tpu_custom_call.1} parent=0
    #allocation2 [shape = 'u8[1024]{0}', space=vmem, size = 0x400, scoped, tag = 'input window, operand 1, single buffered']
    #allocation3 [shape = 's32[2]{0}', space=sflag, size = 0x8, scoped, tag = 'scoped memory for tpu_custom_call.1']
    #allocation4 [shape = 's32[2]{0}', space=sflag, size = 0x8, scoped, tag = 'scoped memory for tpu_custom_call.1']
    #allocation5 [shape = 'u8[512]{0}', space=vmem, size = 0x400, scoped, tag = 'input window, operand 2, single buffered']
    #allocation6 [shape = 's32[1]{0}', space=sflag, size = 0x4, scoped, tag = 'scoped memory for tpu_custom_call.1']
    #allocation7 [shape = 'u8[512]{0}', space=vmem, size = 0x400, scoped, tag = 'input window, operand 4, single buffered']
    #allocation8 [shape = 'u8[512]{0}', space=vmem, size = 0x400, scoped, tag = 'input window, operand 6, single buffered']
    #allocation9 [shape = 's32[1]{0}', space=sflag, size = 0x4, scoped, tag = 'scoped memory for tpu_custom_call.1']
    #allocation10 [shape = 'u8[1024]{0}', space=vmem, size = 0x400, scoped, tag = 'input window, operand 7, single buffered']
    #allocation11 [shape = 'u8[512]{0}', space=vmem, size = 0x400, scoped, tag = 'input window, operand 8, single buffered']
    #allocation12 [shape = 's32[1]{0}', space=sflag, size = 0x4, scoped, tag = 'scoped memory for tpu_custom_call.1']
    #allocation13 [shape = 'u8[512]{0}', space=vmem, size = 0x400, scoped, tag = 'input window, operand 10, single buffered']
    #allocation14 [shape = 'u8[1024]{0}', space=vmem, size = 0x400, scoped, tag = 'output window, operand 0']
    %22 = vsyncpa [#allocation3], 0
    %23 = vsyncpa [#allocation6], 0
    %24 = vsyncpa [#allocation9], 0
    %25 = vsyncpa [#allocation12], 0
    %26 = vsyncpa [#allocation4], 0
    %s27 = scalar_lea.sflag [#allocation4], 1
    %28 = vsyncpa %s27, 0
    loop: start=0, step=1, limit=4
    $region2: #{tpu_custom_call.1} parent=1 // loop_pre_header
      _
    $region3: #{tpu_custom_call.1} parent=1 // loop_header
      %s30 = sphi 0, %s34
      %p31 = scmp.ge.s32.totalorder %s30, 4
      %s40 = sphi 0, %s42
      %s43 = sphi 0, %s40
      %s44 = sphi 0, %s43
      %s60 = sphi 0, %s44
      %s64 = sphi 0, %s64
      %s66 = sphi 0, %s64
      %s67 = sphi 0, %s66
      %s81 = sphi 0, %s67
      %s85 = sphi 0, %s85
      %s87 = sphi 0, %s85
      %s88 = sphi 0, %s87
      %s102 = sphi 0, %s88
      %s106 = sphi 0, %s106
      %s108 = sphi 0, %s106
      %s109 = sphi 0, %s108
      %s123 = sphi 0, %s109
      %s127 = sphi 0, %s127
      %s129 = sphi 0, %s127
      %s130 = sphi 0, %s129
      %s144 = sphi 0, %s130
      %s148 = sphi 0, %s148
      %s150 = sphi 0, %s148
      %s151 = sphi 0, %s150
      %s165 = sphi 0, %s151
      %s169 = sphi 0, %s169
      %s171 = sphi 0, %s169
      %s172 = sphi 0, %s171
      %s186 = sphi 0, %s172
      %s190 = sphi 0, %s190
      %s192 = sphi 0, %s190
      %s193 = sphi 0, %s192
      %s207 = sphi 0, %s193
      %s211 = sphi 0, %s211
      %s213 = sphi 0, %s211
      %s214 = sphi 0, %s213
      %s228 = sphi 0, %s214
      %s232 = sphi 0, %s232
      %s234 = sphi 0, %s232
      %s235 = sphi 0, %s234
      %s249 = sphi 0, %s235
      %s253 = sphi 0, %s253
      %s255 = sphi 0, %s253
      %s256 = sphi 0, %s255
      %s270 = sphi 0, %s256
      %s274 = sphi 0, %s274
      %s276 = sphi 0, %s274
      %s277 = sphi 0, %s276
      %s291 = sphi 0, %s277
      %s295 = sphi 0, %s295
      %s297 = sphi 0, %s295
      %s298 = sphi 0, %s297
      %s312 = sphi 0, %s298
      %s316 = sphi 0, %s316
      %s318 = sphi 0, %s316
      %s319 = sphi 0, %s318
      %s333 = sphi 0, %s319
      %s337 = sphi 0, %s337
      %s339 = sphi 0, %s337
      %s340 = sphi 0, %s339
      %s354 = sphi 0, %s340
      %s358 = sphi 0, %s358
      %s360 = sphi 0, %s358
      %s361 = sphi 0, %s360
      %s375 = sphi 0, %s361
      %s379 = sphi 0, %s379
      %s381 = sphi 0, %s379
      %s382 = sphi 0, %s381
      %s396 = sphi 0, %s382
      %s402 = sphi 0, %s404
      %s405 = sphi 0, %s402
      %s406 = sphi 0, %s405
      %s422 = sphi 0, %s406
    $region4: #{tpu_custom_call.1} parent=1 // loop_header_branch
      %33 = sbr.rel (%p31) target = $region8
    $region5: #{tpu_custom_call.1} parent=1 // loop_body
      %s35 = ssub.s32 %s30, 1
      %s36 = ssub.s32 %s30, 2
      %s37 = sadd.s32 %s30, 1
      %s38 = ssub.s32 %s30, %s37
      %p39 = scmp.eq.s32.totalorder %s38, 0
      %s41 = sadd.s32 %s40, 1
      %s42 = scalar_select %p39, %s40, %s41
      %p45 = pneg %p39
      %p46 = scmp.eq.s32.totalorder %s30, 1
      %p47 = por %p45, %p46
      %p48 = scmp.ne.s32.totalorder %s40, %s43
      %p49 = scmp.eq.s32.totalorder %s30, 0
      %p50 = por %p48, %p49
      %p51 = scmp.ne.s32.totalorder %s40, %s43
      %p52 = scmp.eq.s32.totalorder %s35, 1
      %p53 = por %p51, %p52
      %p54 = scmp.ne.s32.totalorder %s43, %s44
      %p55 = scmp.eq.s32.totalorder %s35, 0
      %p56 = por %p54, %p55
      %p57 = scmp.ne.s32.totalorder %s43, %s44
      %p58 = scmp.eq.s32.totalorder %s36, 1
      %p59 = por %p57, %p58
      %p61 = scmp.ne.s32.totalorder %s44, %s60
      %p62 = scmp.eq.s32.totalorder %s36, 0
      %p63 = por %p61, %p62
      %s65 = sadd.s32 %s64, 1
      %p68 = scmp.eq.s32.totalorder %s30, 1
      %p69 = scmp.ne.s32.totalorder %s64, %s66
      %p70 = scmp.eq.s32.totalorder %s30, 0
      %p71 = por %p69, %p70
      %p72 = scmp.ne.s32.totalorder %s64, %s66
      %p73 = scmp.eq.s32.totalorder %s35, 1
      %p74 = por %p72, %p73
      %p75 = scmp.ne.s32.totalorder %s66, %s67
      %p76 = scmp.eq.s32.totalorder %s35, 0
      %p77 = por %p75, %p76
      %p78 = scmp.ne.s32.totalorder %s66, %s67
      %p79 = scmp.eq.s32.totalorder %s36, 1
      %p80 = por %p78, %p79
      %p82 = scmp.ne.s32.totalorder %s67, %s81
      %p83 = scmp.eq.s32.totalorder %s36, 0
      %p84 = por %p82, %p83
      %s86 = sadd.s32 %s85, 1
      %p89 = scmp.eq.s32.totalorder %s30, 1
      %p90 = scmp.ne.s32.totalorder %s85, %s87
      %p91 = scmp.eq.s32.totalorder %s30, 0
      %p92 = por %p90, %p91
      %p93 = scmp.ne.s32.totalorder %s85, %s87
      %p94 = scmp.eq.s32.totalorder %s35, 1
      %p95 = por %p93, %p94
      %p96 = scmp.ne.s32.totalorder %s87, %s88
      %p97 = scmp.eq.s32.totalorder %s35, 0
      %p98 = por %p96, %p97
      %p99 = scmp.ne.s32.totalorder %s87, %s88
      %p100 = scmp.eq.s32.totalorder %s36, 1
      %p101 = por %p99, %p100
      %p103 = scmp.ne.s32.totalorder %s88, %s102
      %p104 = scmp.eq.s32.totalorder %s36, 0
      %p105 = por %p103, %p104
      %s107 = sadd.s32 %s106, 1
      %p110 = scmp.eq.s32.totalorder %s30, 1
      %p111 = scmp.ne.s32.totalorder %s106, %s108
      %p112 = scmp.eq.s32.totalorder %s30, 0
      %p113 = por %p111, %p112
      %p114 = scmp.ne.s32.totalorder %s106, %s108
      %p115 = scmp.eq.s32.totalorder %s35, 1
      %p116 = por %p114, %p115
      %p117 = scmp.ne.s32.totalorder %s108, %s109
      %p118 = scmp.eq.s32.totalorder %s35, 0
      %p119 = por %p117, %p118
      %p120 = scmp.ne.s32.totalorder %s108, %s109
      %p121 = scmp.eq.s32.totalorder %s36, 1
      %p122 = por %p120, %p121
      %p124 = scmp.ne.s32.totalorder %s109, %s123
      %p125 = scmp.eq.s32.totalorder %s36, 0
      %p126 = por %p124, %p125
      %s128 = sadd.s32 %s127, 1
      %p131 = scmp.eq.s32.totalorder %s30, 1
      %p132 = scmp.ne.s32.totalorder %s127, %s129
      %p133 = scmp.eq.s32.totalorder %s30, 0
      %p134 = por %p132, %p133
      %p135 = scmp.ne.s32.totalorder %s127, %s129
      %p136 = scmp.eq.s32.totalorder %s35, 1
      %p137 = por %p135, %p136
      %p138 = scmp.ne.s32.totalorder %s129, %s130
      %p139 = scmp.eq.s32.totalorder %s35, 0
      %p140 = por %p138, %p139
      %p141 = scmp.ne.s32.totalorder %s129, %s130
      %p142 = scmp.eq.s32.totalorder %s36, 1
      %p143 = por %p141, %p142
      %p145 = scmp.ne.s32.totalorder %s130, %s144
      %p146 = scmp.eq.s32.totalorder %s36, 0
      %p147 = por %p145, %p146
      %s149 = sadd.s32 %s148, 1
      %p152 = scmp.eq.s32.totalorder %s30, 1
      %p153 = scmp.ne.s32.totalorder %s148, %s150
      %p154 = scmp.eq.s32.totalorder %s30, 0
      %p155 = por %p153, %p154
      %p156 = scmp.ne.s32.totalorder %s148, %s150
      %p157 = scmp.eq.s32.totalorder %s35, 1
      %p158 = por %p156, %p157
      %p159 = scmp.ne.s32.totalorder %s150, %s151
      %p160 = scmp.eq.s32.totalorder %s35, 0
      %p161 = por %p159, %p160
      %p162 = scmp.ne.s32.totalorder %s150, %s151
      %p163 = scmp.eq.s32.totalorder %s36, 1
      %p164 = por %p162, %p163
      %p166 = scmp.ne.s32.totalorder %s151, %s165
      %p167 = scmp.eq.s32.totalorder %s36, 0
      %p168 = por %p166, %p167
      %s170 = sadd.s32 %s169, 1
      %p173 = scmp.eq.s32.totalorder %s30, 1
      %p174 = scmp.ne.s32.totalorder %s169, %s171
      %p175 = scmp.eq.s32.totalorder %s30, 0
      %p176 = por %p174, %p175
      %p177 = scmp.ne.s32.totalorder %s169, %s171
      %p178 = scmp.eq.s32.totalorder %s35, 1
      %p179 = por %p177, %p178
      %p180 = scmp.ne.s32.totalorder %s171, %s172
      %p181 = scmp.eq.s32.totalorder %s35, 0
      %p182 = por %p180, %p181
      %p183 = scmp.ne.s32.totalorder %s171, %s172
      %p184 = scmp.eq.s32.totalorder %s36, 1
      %p185 = por %p183, %p184
      %p187 = scmp.ne.s32.totalorder %s172, %s186
      %p188 = scmp.eq.s32.totalorder %s36, 0
      %p189 = por %p187, %p188
      %s191 = sadd.s32 %s190, 1
      %p194 = scmp.eq.s32.totalorder %s30, 1
      %p195 = scmp.ne.s32.totalorder %s190, %s192
      %p196 = scmp.eq.s32.totalorder %s30, 0
      %p197 = por %p195, %p196
      %p198 = scmp.ne.s32.totalorder %s190, %s192
      %p199 = scmp.eq.s32.totalorder %s35, 1
      %p200 = por %p198, %p199
      %p201 = scmp.ne.s32.totalorder %s192, %s193
      %p202 = scmp.eq.s32.totalorder %s35, 0
      %p203 = por %p201, %p202
      %p204 = scmp.ne.s32.totalorder %s192, %s193
      %p205 = scmp.eq.s32.totalorder %s36, 1
      %p206 = por %p204, %p205
      %p208 = scmp.ne.s32.totalorder %s193, %s207
      %p209 = scmp.eq.s32.totalorder %s36, 0
      %p210 = por %p208, %p209
      %s212 = sadd.s32 %s211, 1
      %p215 = scmp.eq.s32.totalorder %s30, 1
      %p216 = scmp.ne.s32.totalorder %s211, %s213
      %p217 = scmp.eq.s32.totalorder %s30, 0
      %p218 = por %p216, %p217
      %p219 = scmp.ne.s32.totalorder %s211, %s213
      %p220 = scmp.eq.s32.totalorder %s35, 1
      %p221 = por %p219, %p220
      %p222 = scmp.ne.s32.totalorder %s213, %s214
      %p223 = scmp.eq.s32.totalorder %s35, 0
      %p224 = por %p222, %p223
      %p225 = scmp.ne.s32.totalorder %s213, %s214
      %p226 = scmp.eq.s32.totalorder %s36, 1
      %p227 = por %p225, %p226
      %p229 = scmp.ne.s32.totalorder %s214, %s228
      %p230 = scmp.eq.s32.totalorder %s36, 0
      %p231 = por %p229, %p230
      %s233 = sadd.s32 %s232, 1
      %p236 = scmp.eq.s32.totalorder %s30, 1
      %p237 = scmp.ne.s32.totalorder %s232, %s234
      %p238 = scmp.eq.s32.totalorder %s30, 0
      %p239 = por %p237, %p238
      %p240 = scmp.ne.s32.totalorder %s232, %s234
      %p241 = scmp.eq.s32.totalorder %s35, 1
      %p242 = por %p240, %p241
      %p243 = scmp.ne.s32.totalorder %s234, %s235
      %p244 = scmp.eq.s32.totalorder %s35, 0
      %p245 = por %p243, %p244
      %p246 = scmp.ne.s32.totalorder %s234, %s235
      %p247 = scmp.eq.s32.totalorder %s36, 1
      %p248 = por %p246, %p247
      %p250 = scmp.ne.s32.totalorder %s235, %s249
      %p251 = scmp.eq.s32.totalorder %s36, 0
      %p252 = por %p250, %p251
      %s254 = sadd.s32 %s253, 1
      %p257 = scmp.eq.s32.totalorder %s30, 1
      %p258 = scmp.ne.s32.totalorder %s253, %s255
      %p259 = scmp.eq.s32.totalorder %s30, 0
      %p260 = por %p258, %p259
      %p261 = scmp.ne.s32.totalorder %s253, %s255
      %p262 = scmp.eq.s32.totalorder %s35, 1
      %p263 = por %p261, %p262
      %p264 = scmp.ne.s32.totalorder %s255, %s256
      %p265 = scmp.eq.s32.totalorder %s35, 0
      %p266 = por %p264, %p265
      %p267 = scmp.ne.s32.totalorder %s255, %s256
      %p268 = scmp.eq.s32.totalorder %s36, 1
      %p269 = por %p267, %p268
      %p271 = scmp.ne.s32.totalorder %s256, %s270
      %p272 = scmp.eq.s32.totalorder %s36, 0
      %p273 = por %p271, %p272
      %s275 = sadd.s32 %s274, 1
      %p278 = scmp.eq.s32.totalorder %s30, 1
      %p279 = scmp.ne.s32.totalorder %s274, %s276
      %p280 = scmp.eq.s32.totalorder %s30, 0
      %p281 = por %p279, %p280
      %p282 = scmp.ne.s32.totalorder %s274, %s276
      %p283 = scmp.eq.s32.totalorder %s35, 1
      %p284 = por %p282, %p283
      %p285 = scmp.ne.s32.totalorder %s276, %s277
      %p286 = scmp.eq.s32.totalorder %s35, 0
      %p287 = por %p285, %p286
      %p288 = scmp.ne.s32.totalorder %s276, %s277
      %p289 = scmp.eq.s32.totalorder %s36, 1
      %p290 = por %p288, %p289
      %p292 = scmp.ne.s32.totalorder %s277, %s291
      %p293 = scmp.eq.s32.totalorder %s36, 0
      %p294 = por %p292, %p293
      %s296 = sadd.s32 %s295, 1
      %p299 = scmp.eq.s32.totalorder %s30, 1
      %p300 = scmp.ne.s32.totalorder %s295, %s297
      %p301 = scmp.eq.s32.totalorder %s30, 0
      %p302 = por %p300, %p301
      %p303 = scmp.ne.s32.totalorder %s295, %s297
      %p304 = scmp.eq.s32.totalorder %s35, 1
      %p305 = por %p303, %p304
      %p306 = scmp.ne.s32.totalorder %s297, %s298
      %p307 = scmp.eq.s32.totalorder %s35, 0
      %p308 = por %p306, %p307
      %p309 = scmp.ne.s32.totalorder %s297, %s298
      %p310 = scmp.eq.s32.totalorder %s36, 1
      %p311 = por %p309, %p310
      %p313 = scmp.ne.s32.totalorder %s298, %s312
      %p314 = scmp.eq.s32.totalorder %s36, 0
      %p315 = por %p313, %p314
      %s317 = sadd.s32 %s316, 1
      %p320 = scmp.eq.s32.totalorder %s30, 1
      %p321 = scmp.ne.s32.totalorder %s316, %s318
      %p322 = scmp.eq.s32.totalorder %s30, 0
      %p323 = por %p321, %p322
      %p324 = scmp.ne.s32.totalorder %s316, %s318
      %p325 = scmp.eq.s32.totalorder %s35, 1
      %p326 = por %p324, %p325
      %p327 = scmp.ne.s32.totalorder %s318, %s319
      %p328 = scmp.eq.s32.totalorder %s35, 0
      %p329 = por %p327, %p328
      %p330 = scmp.ne.s32.totalorder %s318, %s319
      %p331 = scmp.eq.s32.totalorder %s36, 1
      %p332 = por %p330, %p331
      %p334 = scmp.ne.s32.totalorder %s319, %s333
      %p335 = scmp.eq.s32.totalorder %s36, 0
      %p336 = por %p334, %p335
      %s338 = sadd.s32 %s337, 1
      %p341 = scmp.eq.s32.totalorder %s30, 1
      %p342 = scmp.ne.s32.totalorder %s337, %s339
      %p343 = scmp.eq.s32.totalorder %s30, 0
      %p344 = por %p342, %p343
      %p345 = scmp.ne.s32.totalorder %s337, %s339
      %p346 = scmp.eq.s32.totalorder %s35, 1
      %p347 = por %p345, %p346
      %p348 = scmp.ne.s32.totalorder %s339, %s340
      %p349 = scmp.eq.s32.totalorder %s35, 0
      %p350 = por %p348, %p349
      %p351 = scmp.ne.s32.totalorder %s339, %s340
      %p352 = scmp.eq.s32.totalorder %s36, 1
      %p353 = por %p351, %p352
      %p355 = scmp.ne.s32.totalorder %s340, %s354
      %p356 = scmp.eq.s32.totalorder %s36, 0
      %p357 = por %p355, %p356
      %s359 = sadd.s32 %s358, 1
      %p362 = scmp.eq.s32.totalorder %s30, 1
      %p363 = scmp.ne.s32.totalorder %s358, %s360
      %p364 = scmp.eq.s32.totalorder %s30, 0
      %p365 = por %p363, %p364
      %p366 = scmp.ne.s32.totalorder %s358, %s360
      %p367 = scmp.eq.s32.totalorder %s35, 1
      %p368 = por %p366, %p367
      %p369 = scmp.ne.s32.totalorder %s360, %s361
      %p370 = scmp.eq.s32.totalorder %s35, 0
      %p371 = por %p369, %p370
      %p372 = scmp.ne.s32.totalorder %s360, %s361
      %p373 = scmp.eq.s32.totalorder %s36, 1
      %p374 = por %p372, %p373
      %p376 = scmp.ne.s32.totalorder %s361, %s375
      %p377 = scmp.eq.s32.totalorder %s36, 0
      %p378 = por %p376, %p377
      %s380 = sadd.s32 %s379, 1
      %p383 = scmp.eq.s32.totalorder %s30, 1
      %p384 = scmp.ne.s32.totalorder %s379, %s381
      %p385 = scmp.eq.s32.totalorder %s30, 0
      %p386 = por %p384, %p385
      %p387 = scmp.ne.s32.totalorder %s379, %s381
      %p388 = scmp.eq.s32.totalorder %s35, 1
      %p389 = por %p387, %p388
      %p390 = scmp.ne.s32.totalorder %s381, %s382
      %p391 = scmp.eq.s32.totalorder %s35, 0
      %p392 = por %p390, %p391
      %p393 = scmp.ne.s32.totalorder %s381, %s382
      %p394 = scmp.eq.s32.totalorder %s36, 1
      %p395 = por %p393, %p394
      %p397 = scmp.ne.s32.totalorder %s382, %s396
      %p398 = scmp.eq.s32.totalorder %s36, 0
      %p399 = por %p397, %p398
      %s400 = ssub.s32 %s30, %s37
      %p401 = scmp.eq.s32.totalorder %s400, 0
      %s403 = sadd.s32 %s402, 1
      %s404 = scalar_select %p401, %s402, %s403
      %p407 = pneg %p401
      %p408 = scmp.eq.s32.totalorder %s30, 1
      %p409 = por %p407, %p408
      %p410 = scmp.ne.s32.totalorder %s402, %s405
      %p411 = scmp.eq.s32.totalorder %s30, 0
      %p412 = por %p410, %p411
      %p413 = scmp.ne.s32.totalorder %s402, %s405
      %p414 = scmp.eq.s32.totalorder %s35, 1
      %p415 = por %p413, %p414
      %p416 = scmp.ne.s32.totalorder %s405, %s406
      %p417 = scmp.eq.s32.totalorder %s35, 0
      %p418 = por %p416, %p417
      %p419 = scmp.ne.s32.totalorder %s405, %s406
      %p420 = scmp.eq.s32.totalorder %s36, 1
      %p421 = por %p419, %p420
      %p423 = scmp.ne.s32.totalorder %s406, %s422
      %p424 = scmp.eq.s32.totalorder %s36, 0
      %p425 = por %p423, %p424
      %p426 = scmp.le.s32.totalorder 1, %s30
      %p427 = scmp.lt.s32.totalorder %s30, 3
      %p428 = pnand %p426, %p427
      %p429 = pneg %p428
      // Predicated region
      $region9: #{tpu_custom_call.1} parent=5 // pred_check
        _
      $region10: #{tpu_custom_call.1} parent=5 // pred_check_branch
        %431 = sbr.rel (%p428) target = $region12
      $region11: #{tpu_custom_call.1} parent=5 // pred_region
        %s432 = ssub.s32 %s30, 1
        // Predicated region
        $region13: #{tpu_custom_call.1} parent=11 // pred_check
          %p433 = pneg %p77
        $region14: #{tpu_custom_call.1} parent=11 // pred_check_branch
          %435 = sbr.rel (%p433) target = $region16
        $region15: #{tpu_custom_call.1} parent=11 // pred_region
          %437 = vsyncadd [#allocation3], 0
          %s439 = sshll.u32 %s1, 4
          %s440 = int_to_ptr.hbm [resolvable:$true] %s439
          %s441 = sshll.u32 [#allocation2], 4
          %s442 = int_to_ptr.vmem [resolvable:$true] %s441
          %444 = dma.hbm_to_vmem [thread:$0]  %s440, 32, %s442, [#allocation3]
        $region16: #{tpu_custom_call.1} parent=11 // pred_fallthru
          _
        // Predicated region
        $region17: #{tpu_custom_call.1} parent=11 // pred_check
          %p445 = pneg %p98
        $region18: #{tpu_custom_call.1} parent=11 // pred_check_branch
          %447 = sbr.rel (%p445) target = $region20
        $region19: #{tpu_custom_call.1} parent=11 // pred_region
          %449 = vsyncadd [#allocation6], 0
          %s451 = sshll.u32 %s2, 4
          %s452 = int_to_ptr.hbm [resolvable:$true] %s451
          %s453 = sshll.u32 [#allocation5], 4
          %s454 = int_to_ptr.vmem [resolvable:$true] %s453
          %456 = dma.hbm_to_vmem [thread:$0]  %s452, 16, %s454, [#allocation6]
        $region20: #{tpu_custom_call.1} parent=11 // pred_fallthru
          _
        // Predicated region
        $region21: #{tpu_custom_call.1} parent=11 // pred_check
          %p457 = pneg %p119
        $region22: #{tpu_custom_call.1} parent=11 // pred_check_branch
          %459 = sbr.rel (%p457) target = $region24
        $region23: #{tpu_custom_call.1} parent=11 // pred_region
          _
        $region24: #{tpu_custom_call.1} parent=11 // pred_fallthru
          _
        // Predicated region
        $region25: #{tpu_custom_call.1} parent=11 // pred_check
          %p460 = pneg %p140
        $region26: #{tpu_custom_call.1} parent=11 // pred_check_branch
          %462 = sbr.rel (%p460) target = $region28
        $region27: #{tpu_custom_call.1} parent=11 // pred_region
          %464 = vsyncadd [#allocation6], 0
          %s466 = sshll.u32 %s4, 4
          %s467 = int_to_ptr.hbm [resolvable:$true] %s466
          %s468 = sshll.u32 [#allocation7], 4
          %s469 = int_to_ptr.vmem [resolvable:$true] %s468
          %471 = dma.hbm_to_vmem [thread:$0]  %s467, 16, %s469, [#allocation6]
        $region28: #{tpu_custom_call.1} parent=11 // pred_fallthru
          _
        // Predicated region
        $region29: #{tpu_custom_call.1} parent=11 // pred_check
          %p472 = pneg %p161
        $region30: #{tpu_custom_call.1} parent=11 // pred_check_branch
          %474 = sbr.rel (%p472) target = $region32
        $region31: #{tpu_custom_call.1} parent=11 // pred_region
          _
        $region32: #{tpu_custom_call.1} parent=11 // pred_fallthru
          _
        // Predicated region
        $region33: #{tpu_custom_call.1} parent=11 // pred_check
          %p475 = pneg %p182
        $region34: #{tpu_custom_call.1} parent=11 // pred_check_branch
          %477 = sbr.rel (%p475) target = $region36
        $region35: #{tpu_custom_call.1} parent=11 // pred_region
          %479 = vsyncadd [#allocation9], 0
          %s481 = sshll.u32 %s6, 4
          %s482 = int_to_ptr.hbm [resolvable:$true] %s481
          %s483 = sshll.u32 [#allocation8], 4
          %s484 = int_to_ptr.vmem [resolvable:$true] %s483
          %486 = dma.hbm_to_vmem [thread:$0]  %s482, 16, %s484, [#allocation9]
        $region36: #{tpu_custom_call.1} parent=11 // pred_fallthru
          _
        // Predicated region
        $region37: #{tpu_custom_call.1} parent=11 // pred_check
          %p487 = pneg %p203
        $region38: #{tpu_custom_call.1} parent=11 // pred_check_branch
          %489 = sbr.rel (%p487) target = $region40
        $region39: #{tpu_custom_call.1} parent=11 // pred_region
          %491 = vsyncadd [#allocation9], 0
          %s493 = sshll.u32 %s7, 4
          %s494 = int_to_ptr.hbm [resolvable:$true] %s493
          %s495 = sshll.u32 [#allocation10], 4
          %s496 = int_to_ptr.vmem [resolvable:$true] %s495
          %498 = dma.hbm_to_vmem [thread:$0]  %s494, 32, %s496, [#allocation9]
        $region40: #{tpu_custom_call.1} parent=11 // pred_fallthru
          _
        // Predicated region
        $region41: #{tpu_custom_call.1} parent=11 // pred_check
          %p499 = pneg %p224
        $region42: #{tpu_custom_call.1} parent=11 // pred_check_branch
          %501 = sbr.rel (%p499) target = $region44
        $region43: #{tpu_custom_call.1} parent=11 // pred_region
          %503 = vsyncadd [#allocation12], 0
          %s505 = sshll.u32 %s8, 4
          %s506 = int_to_ptr.hbm [resolvable:$true] %s505
          %s507 = sshll.u32 [#allocation11], 4
          %s508 = int_to_ptr.vmem [resolvable:$true] %s507
          %510 = dma.hbm_to_vmem [thread:$0]  %s506, 16, %s508, [#allocation12]
        $region44: #{tpu_custom_call.1} parent=11 // pred_fallthru
          _
        // Predicated region
        $region45: #{tpu_custom_call.1} parent=11 // pred_check
          %p511 = pneg %p245
        $region46: #{tpu_custom_call.1} parent=11 // pred_check_branch
          %513 = sbr.rel (%p511) target = $region48
        $region47: #{tpu_custom_call.1} parent=11 // pred_region
          _
        $region48: #{tpu_custom_call.1} parent=11 // pred_fallthru
          _
        // Predicated region
        $region49: #{tpu_custom_call.1} parent=11 // pred_check
          %p514 = pneg %p266
        $region50: #{tpu_custom_call.1} parent=11 // pred_check_branch
          %516 = sbr.rel (%p514) target = $region52
        $region51: #{tpu_custom_call.1} parent=11 // pred_region
          %518 = vsyncadd [#allocation12], 0
          %s520 = sshll.u32 %s10, 4
          %s521 = int_to_ptr.hbm [resolvable:$true] %s520
          %s522 = sshll.u32 [#allocation13], 4
          %s523 = int_to_ptr.vmem [resolvable:$true] %s522
          %525 = dma.hbm_to_vmem [thread:$0]  %s521, 16, %s523, [#allocation12]
        $region52: #{tpu_custom_call.1} parent=11 // pred_fallthru
          _
        // Predicated region
        $region53: #{tpu_custom_call.1} parent=11 // pred_check
          %p526 = pneg %p287
        $region54: #{tpu_custom_call.1} parent=11 // pred_check_branch
          %528 = sbr.rel (%p526) target = $region56
        $region55: #{tpu_custom_call.1} parent=11 // pred_region
          _
        $region56: #{tpu_custom_call.1} parent=11 // pred_fallthru
          _
        // Predicated region
        $region57: #{tpu_custom_call.1} parent=11 // pred_check
          %p529 = pneg %p308
        $region58: #{tpu_custom_call.1} parent=11 // pred_check_branch
          %531 = sbr.rel (%p529) target = $region60
        $region59: #{tpu_custom_call.1} parent=11 // pred_region
          _
        $region60: #{tpu_custom_call.1} parent=11 // pred_fallthru
          _
        // Predicated region
        $region61: #{tpu_custom_call.1} parent=11 // pred_check
          %p532 = pneg %p329
        $region62: #{tpu_custom_call.1} parent=11 // pred_check_branch
          %534 = sbr.rel (%p532) target = $region64
        $region63: #{tpu_custom_call.1} parent=11 // pred_region
          _
        $region64: #{tpu_custom_call.1} parent=11 // pred_fallthru
          _
        // Predicated region
        $region65: #{tpu_custom_call.1} parent=11 // pred_check
          %p535 = pneg %p350
        $region66: #{tpu_custom_call.1} parent=11 // pred_check_branch
          %537 = sbr.rel (%p535) target = $region68
        $region67: #{tpu_custom_call.1} parent=11 // pred_region
          _
        $region68: #{tpu_custom_call.1} parent=11 // pred_fallthru
          _
        // Predicated region
        $region69: #{tpu_custom_call.1} parent=11 // pred_check
          %p538 = pneg %p371
        $region70: #{tpu_custom_call.1} parent=11 // pred_check_branch
          %540 = sbr.rel (%p538) target = $region72
        $region71: #{tpu_custom_call.1} parent=11 // pred_region
          _
        $region72: #{tpu_custom_call.1} parent=11 // pred_fallthru
          _
        // Predicated region
        $region73: #{tpu_custom_call.1} parent=11 // pred_check
          %p541 = pneg %p392
        $region74: #{tpu_custom_call.1} parent=11 // pred_check_branch
          %543 = sbr.rel (%p541) target = $region76
        $region75: #{tpu_custom_call.1} parent=11 // pred_region
          _
        $region76: #{tpu_custom_call.1} parent=11 // pred_fallthru
          _
      $region12: #{tpu_custom_call.1} parent=5 // pred_fallthru
        _
      %p544 = scmp.lt.s32.totalorder %s30, 2
      // Predicated region
      $region77: #{tpu_custom_call.1} parent=5 // pred_check
        %p545 = pneg %p544
      $region78: #{tpu_custom_call.1} parent=5 // pred_check_branch
        %547 = sbr.rel (%p545) target = $region80
      $region79: #{tpu_custom_call.1} parent=5 // pred_region
        // Predicated region
        $region81: #{tpu_custom_call.1} parent=79 // pred_check
          %p548 = pneg %p50
        $region82: #{tpu_custom_call.1} parent=79 // pred_check_branch
          %550 = sbr.rel (%p548) target = $region84
        $region83: #{tpu_custom_call.1} parent=79 // pred_region
          %p551 = scmp.lt.s32.totalorder %s30, 1
          %s552 = scalar_select %p551, %s30, 1
          %s553 = smul.addr %s552, 2
          %s554 = smul.addr %s553, 8
          %s555 = scalar_lea.vmem %s0, %s554
        $region84: #{tpu_custom_call.1} parent=79 // pred_fallthru
          _
      $region80: #{tpu_custom_call.1} parent=5 // pred_fallthru
        _
      %p556 = scmp.le.s32.totalorder 1, %s30
      %p557 = scmp.lt.s32.totalorder %s30, 3
      %p558 = pnand %p556, %p557
      %p559 = pneg %p558
      // Predicated region
      $region85: #{tpu_custom_call.1} parent=5 // pred_check
        _
      $region86: #{tpu_custom_call.1} parent=5 // pred_check_branch
        %561 = sbr.rel (%p558) target = $region88
      $region87: #{tpu_custom_call.1} parent=5 // pred_region
        %s562 = ssub.s32 %s30, 1
        // Predicated region
        $region89: #{tpu_custom_call.1} parent=87 // pred_check
          %p563 = pneg %p77
        $region90: #{tpu_custom_call.1} parent=87 // pred_check_branch
          %565 = sbr.rel (%p563) target = $region92
        $region91: #{tpu_custom_call.1} parent=87 // pred_region
          %567 = dma.done [#allocation3], 32
        $region92: #{tpu_custom_call.1} parent=87 // pred_fallthru
          _
        // Predicated region
        $region93: #{tpu_custom_call.1} parent=87 // pred_check
          %p568 = pneg %p98
        $region94: #{tpu_custom_call.1} parent=87 // pred_check_branch
          %570 = sbr.rel (%p568) target = $region96
        $region95: #{tpu_custom_call.1} parent=87 // pred_region
          %572 = dma.done [#allocation6], 16
        $region96: #{tpu_custom_call.1} parent=87 // pred_fallthru
          _
        // Predicated region
        $region97: #{tpu_custom_call.1} parent=87 // pred_check
          %p573 = pneg %p140
        $region98: #{tpu_custom_call.1} parent=87 // pred_check_branch
          %575 = sbr.rel (%p573) target = $region100
        $region99: #{tpu_custom_call.1} parent=87 // pred_region
          %577 = dma.done [#allocation6], 16
        $region100: #{tpu_custom_call.1} parent=87 // pred_fallthru
          _
        // Predicated region
        $region101: #{tpu_custom_call.1} parent=87 // pred_check
          %p578 = pneg %p182
        $region102: #{tpu_custom_call.1} parent=87 // pred_check_branch
          %580 = sbr.rel (%p578) target = $region104
        $region103: #{tpu_custom_call.1} parent=87 // pred_region
          %582 = dma.done [#allocation9], 16
        $region104: #{tpu_custom_call.1} parent=87 // pred_fallthru
          _
        // Predicated region
        $region105: #{tpu_custom_call.1} parent=87 // pred_check
          %p583 = pneg %p203
        $region106: #{tpu_custom_call.1} parent=87 // pred_check_branch
          %585 = sbr.rel (%p583) target = $region108
        $region107: #{tpu_custom_call.1} parent=87 // pred_region
          %587 = dma.done [#allocation9], 32
        $region108: #{tpu_custom_call.1} parent=87 // pred_fallthru
          _
        // Predicated region
        $region109: #{tpu_custom_call.1} parent=87 // pred_check
          %p588 = pneg %p224
        $region110: #{tpu_custom_call.1} parent=87 // pred_check_branch
          %590 = sbr.rel (%p588) target = $region112
        $region111: #{tpu_custom_call.1} parent=87 // pred_region
          %592 = dma.done [#allocation12], 16
        $region112: #{tpu_custom_call.1} parent=87 // pred_fallthru
          _
        // Predicated region
        $region113: #{tpu_custom_call.1} parent=87 // pred_check
          %p593 = pneg %p266
        $region114: #{tpu_custom_call.1} parent=87 // pred_check_branch
          %595 = sbr.rel (%p593) target = $region116
        $region115: #{tpu_custom_call.1} parent=87 // pred_region
          %597 = dma.done [#allocation12], 16
        $region116: #{tpu_custom_call.1} parent=87 // pred_fallthru
          _
        %p598 = scmp.lt.s32.totalorder %s35, 1
        %s599 = scalar_select %p598, %s35, 1
        %s600 = smul.addr %s599, 2
        %s601 = smul.addr %s600, 8
        %s602 = scalar_lea.vmem %s0, %s601
        %p603 = pneg %p56
        %p604 = pneg %p53
        %p605 = pneg %p77
        %p606 = pneg %p74
        %p607 = pneg %p98
        %p608 = pneg %p95
        %p609 = pneg %p119
        %p610 = pneg %p116
        %p611 = pneg %p140
        %p612 = pneg %p137
        %p613 = pneg %p161
        %p614 = pneg %p158
        %p615 = pneg %p182
        %p616 = pneg %p179
        %p617 = pneg %p203
        %p618 = pneg %p200
        %p619 = pneg %p224
        %p620 = pneg %p221
        %p621 = pneg %p245
        %p622 = pneg %p242
        %p623 = pneg %p266
        %p624 = pneg %p263
        %p625 = pneg %p287
        %p626 = pneg %p284
        %p627 = pneg %p308
        %p628 = pneg %p305
        %p629 = pneg %p329
        %p630 = pneg %p326
        %p631 = pneg %p350
        %p632 = pneg %p347
        %p633 = pneg %p371
        %p634 = pneg %p368
        %p635 = pneg %p392
        %p636 = pneg %p389
        %p637 = pneg %p418
        %p638 = pneg %p415
        %s639 = sand.u32 %s405, 1
        %s640 = scalar_lea.sflag [#allocation4], %s639
        %s641 = sand.u32 %s405, 1
        %s642 = scalar_lea.vmem [#allocation14], %s641
        %p643 = scmp.lt.s32.totalorder %s35, 1
        %s644 = scalar_select %p643, %s35, 1
        %s645 = smul.addr %s644, 2
        %s646 = smul.addr %s645, 8
        %s647 = scalar_lea.vmem %s0, %s646
        %v649 = vlaneseq
        %v650 = vshrl.u32 %v649, 7
        %v651 = vadd.s32 %v650, 8
        %v652 = vlaneseq
        %v653 = vand.u32 %v652, 127
        %v654 = vld [vmem:[%s647] sm:$0xff]
        %v655 = vld [vmem:[%s647 + $0x8] sm:$0xff]
        %v656 = vpack.c.bf16 %v655, %v654
        %v657 = vld [vmem:[#allocation2] sm:$0x3]
        %v658 = vld [vmem:[#allocation5] sm:$0x1]
        %v660 = vperm.slane %v658, 0
        %vm662 = vcmask 31744
        %v664 = vsel %vm662, %v656, 0
        %vm666 = vcmask 1041408
        %v668 = vsel %vm666, %v657, 0
        %670 = vmatpush.bf16.msra.mxu0 0
        %671 = vmatpush.bf16.msra.mxu0 0
        %672 = vmatpush.bf16.msra.mxu0 0
        %673 = vmatpush.bf16.msra.mxu0 0
        %674 = vmatpush.bf16.msra.mxu0 0
        %675 = vmatpush.bf16.msra.mxu0 0
        %676 = vmatpush.bf16.msra.mxu0 0
        %677 = vmatpush.bf16.msra.mxu0 %v668
        %678 = vmatmul.bf16.gmra.mxu0 %v664
        %v679 = vpop.f32.mrf.mxu0
        %v680 = vadd.f32 %v660, %v679
        %v681 = vpop.f32.mrf.mxu0
        %v682 = vadd.f32 %v660, %v681
        %683 = vdwg.mxu0
        %v684 = vmul.f32 %v680, 0.2
        %v685 = vmul.f32 %v682, 0.2
        %v686 = vpack.c.bf16 %v684, %v684
        %v687 = vpack.c.bf16 %v685, %v685
        %v688 = vpack.c.bf16 %v680, %v680
        %v689 = vpack.c.bf16 %v682, %v682
        %v692 = vunpack.c.l.b16 %v686
        %v693 = vunpack.c.l.b16 %v687
        %v694 = vpack.c.b16 %v693, %v692
        %v697 = vunpack.c.l.b16 %v688
        %v698 = vunpack.c.l.b16 %v689
        %v699 = vpack.c.b16 %v698, %v697
        %700 = vrot.lane.b32.xlu0 %v699, 103
        %v701 = vpop.permute.xlu0 %700
        %vm702 = vcmask 203776
        %v704 = vsel %vm702, %v694, 0
        %v707 = vsel %vm702, %v701, 0
        %709 = vmatpush.bf16.xpose.msra.mxu0 0
        %710 = vmatpush.bf16.xpose.msra.mxu0 0
        %711 = vmatpush.bf16.xpose.msra.mxu0 0
        %712 = vmatpush.bf16.xpose.msra.mxu0 0
        %713 = vmatpush.bf16.xpose.msra.mxu0 0
        %714 = vmatpush.bf16.xpose.msra.mxu0 0
        %715 = vmatpush.bf16.xpose.msra.mxu0 0
        %716 = vmatpush.bf16.xpose.msra.mxu0 %v707
        %717 = vmatmul.bf16.gmra.mxu0 %v704
        %v718 = vpop.f32.mrf.mxu0
        %v719 = vadd.f32 0.0, %v718
        %v720 = vpop.f32.mrf.mxu0
        %v721 = vadd.f32 0.0, %v720
        %722 = vdwg.mxu0
        %vm723 = vcmp.gt.s32.totalorder %v653, %v650
        %vm724 = vcmp.gt.s32.totalorder %v653, %v651
        %v725 = vsel %vm723, -inf, %v719
        %v726 = vsel %vm724, -inf, %v721
        %vm727 = vcmask 130048
        %v728 = vsel %vm727, %v725, -inf
        %v729 = vsel %vm727, %v726, -inf
        %v730 = vmax.f32 %v728, %v729
        %v731 = vrot.slane %v730, 4
        %v732 = vmax.f32 %v730, %v731
        %v733 = vrot.slane %v732, 2
        %v734 = vmax.f32 %v732, %v733
        %v735 = vrot.slane %v734, 1
        %v736 = vmax.f32 %v734, %v735
        %v737 = vsub.f32 %v725, %v736
        %v738 = vsub.f32 %v726, %v736
        %v739 = vmul.f32 %v737, 1.442695
        %v740 = vpow.pop %v739
        %v741 = vmul.f32 %v738, 1.442695
        %v742 = vpow.pop %v741
        %v743 = vsel %vm727, %v740, 0.0
        %v744 = vsel %vm727, %v742, 0.0
        %v745 = vadd.f32 %v743, %v744
        %v746 = vrot.slane %v745, 4
        %v747 = vadd.f32 %v745, %v746
        %v748 = vrot.slane %v747, 2
        %v749 = vadd.f32 %v747, %v748
        %v750 = vrot.slane %v749, 1
        %v751 = vadd.f32 %v749, %v750
        %v752 = vrcp.pop %v751
        %v753 = vlaneseq
        %v754 = vshrl.u32 %v753, 7
        %756 = vset.pattern.permute.xlu0 %v754
        %757 = vperm.xlu0 %756, %v752
        %v758 = vpop.permute.xlu0 %757
        %v759 = vlaneseq
        %v760 = vshrl.u32 %v759, 7
        %v761 = vadd.s32 %v760, 8
        %762 = vset.pattern.permute.xlu0 %v761
        %763 = vperm.xlu0 %762, %v752
        %v764 = vpop.permute.xlu0 %763
        %v765 = vmul.f32 %v680, %v758
        %v766 = vmul.f32 %v682, %v764
        %769 = vrot.lane.b32.xlu0 %v765, 78
        %v770 = vpop.permute.xlu0 %769
        %771 = vrot.lane.b32.xlu0 %v766, 78
        %v772 = vpop.permute.xlu0 %771
        %v775 = vsel %vm662, %v770, %v758
        %v776 = vsel %vm662, %v772, %v764
        %v777 = vpack.c.bf16 %v740, %v740
        %v778 = vpack.c.bf16 %v742, %v742
        %v779 = vpack.c.bf16 %v775, %v775
        %v780 = vpack.c.bf16 %v776, %v776
        %v783 = vunpack.c.l.b16 %v777
        %v784 = vunpack.c.l.b16 %v778
        %v785 = vpack.c.b16 %v784, %v783
        %v788 = vunpack.c.l.b16 %v779
        %v789 = vunpack.c.l.b16 %v780
        %v790 = vpack.c.b16 %v789, %v788
        %v793 = vsel %vm727, %v785, 0
        %795 = vmatpush.bf16.msra.mxu0 0
        %796 = vmatpush.bf16.msra.mxu0 0
        %797 = vmatpush.bf16.msra.mxu0 0
        %798 = vmatpush.bf16.msra.mxu0 0
        %799 = vmatpush.bf16.msra.mxu0 0
        %800 = vmatpush.bf16.msra.mxu0 0
        %801 = vmatpush.bf16.msra.mxu0 0
        %802 = vmatpush.bf16.msra.mxu0 %v790
        %803 = vmatmul.bf16.gmra.mxu0 %v793
        %v804 = vpop.f32.mrf.mxu0
        %v805 = vadd.f32 0.0, %v804
        %v806 = vpop.f32.mrf.mxu0
        %v807 = vadd.f32 0.0, %v806
        %808 = vdwg.mxu0
        %vm809 = vcmask 39968
        %v810 = vsel %vm809, %v805, -inf
        %v811 = vsel %vm809, %v807, -inf
        %v812 = vmax.f32 %v810, %v811
        %v813 = vrot.slane %v812, 4
        %v814 = vmax.f32 %v812, %v813
        %v815 = vrot.slane %v814, 2
        %v816 = vmax.f32 %v814, %v815
        %v817 = vrot.slane %v816, 1
        %v818 = vmax.f32 %v816, %v817
        %v819 = vsub.f32 %v805, %v818
        %v820 = vsub.f32 %v807, %v818
        %v821 = vmul.f32 %v819, 1.442695
        %v822 = vpow.pop %v821
        %v823 = vmul.f32 %v820, 1.442695
        %v824 = vpow.pop %v823
        %v825 = vsel %vm809, %v822, 0.0
        %v826 = vsel %vm809, %v824, 0.0
        %v827 = vadd.f32 %v825, %v826
        %v828 = vrot.slane %v827, 4
        %v829 = vadd.f32 %v827, %v828
        %v830 = vrot.slane %v829, 2
        %v831 = vadd.f32 %v829, %v830
        %v832 = vrot.slane %v831, 1
        %v833 = vadd.f32 %v831, %v832
        %v834 = vrcp.pop %v833
        %v835 = vmul.f32 %v833, %v834
        %v836 = vsub.f32 1.0, %v835
        %v837 = vmul.f32 %v834, %v836
        %v838 = vadd.f32 %v834, %v837
        %vm839 = vweird.f32 %v833
        %vm840 = vweird.f32 %v834
        %vm841 = vmor %vm839, %vm840
        %v842 = vsel %vm841, %v834, %v838
        %v843 = vand.u32 2147483647, %v833
        %vm844 = vcmp.eq.f32.partialorder %v843, 8.507059e+37
        %v845 = vand.u32 %v833, 2147483648
        %v846 = vor.u32 1.1754944e-38, %v845
        %v847 = vsel %vm844, %v846, %v842
        %v848 = vmul.f32 %v822, %v847
        %v849 = vmul.f32 %v824, %v847
        %v852 = vrot.slane %v805, 6
        %v853 = vrot.slane %v807, 6
        %v854 = vsel %vm666, %v852, %v853
        %v857 = vsel %vm666, 0.0, %v852
        %v858 = vpack.c.bf16 %v854, %v857
        %v859 = vld [vmem:[%s3] sm:$0x3]
        %vm860 = vcmask 1040384
        %v861 = vrot.slane %v805, 7
        %v862 = vrot.slane %v807, 7
        %v863 = vsel %vm860, %v861, %v862
        %v866 = vsel %vm860, 0.0, %v861
        %v867 = vpack.c.bf16 %v863, %v866
        %s868 = scalar_lea.vmem %s3, 2
        %v869 = vld [vmem:[%s868] sm:$0x3]
        %v871 = vsel %vm662, %v867, 0
        %v874 = vsel %vm666, %v869, 0
        %876 = vmatpush.bf16.msra.mxu0 0
        %877 = vmatpush.bf16.msra.mxu0 0
        %878 = vmatpush.bf16.msra.mxu0 0
        %879 = vmatpush.bf16.msra.mxu0 0
        %880 = vmatpush.bf16.msra.mxu0 0
        %881 = vmatpush.bf16.msra.mxu0 0
        %882 = vmatpush.bf16.msra.mxu0 0
        %883 = vmatpush.bf16.msra.mxu0 %v874
        %884 = vmatmul.bf16.gmra.mxu0 %v871
        %v885 = vpop.f32.mrf.mxu0
        %v886 = vadd.f32 0.0, %v885
        %v887 = vpop.f32.mrf.mxu0
        %v888 = vadd.f32 0.0, %v887
        %889 = vdwg.mxu0
        %v891 = vsel %vm662, %v858, 0
        %v894 = vsel %vm666, %v859, 0
        %896 = vmatpush.bf16.msra.mxu0 0
        %897 = vmatpush.bf16.msra.mxu0 0
        %898 = vmatpush.bf16.msra.mxu0 0
        %899 = vmatpush.bf16.msra.mxu0 0
        %900 = vmatpush.bf16.msra.mxu0 0
        %901 = vmatpush.bf16.msra.mxu0 0
        %902 = vmatpush.bf16.msra.mxu0 0
        %903 = vmatpush.bf16.msra.mxu0 %v894
        %904 = vmatmul.bf16.gmra.mxu0 %v891
        %v905 = vpop.f32.mrf.mxu0
        %v906 = vadd.f32 %v886, %v905
        %v907 = vpop.f32.mrf.mxu0
        %v908 = vadd.f32 %v888, %v907
        %909 = vdwg.mxu0
        %v910 = vpack.c.bf16 %v807, %v805
        %s911 = scalar_lea.vmem %s3, 4
        %v912 = vld [vmem:[%s911] sm:$0x3]
        %v914 = vsel %vm662, %v910, 0
        %v917 = vsel %vm666, %v912, 0
        %919 = vmatpush.bf16.msra.mxu0 0
        %920 = vmatpush.bf16.msra.mxu0 0
        %921 = vmatpush.bf16.msra.mxu0 0
        %922 = vmatpush.bf16.msra.mxu0 0
        %923 = vmatpush.bf16.msra.mxu0 0
        %924 = vmatpush.bf16.msra.mxu0 0
        %925 = vmatpush.bf16.msra.mxu0 0
        %926 = vmatpush.bf16.msra.mxu0 %v917
        %927 = vmatmul.bf16.gmra.mxu0 %v914
        %v928 = vpop.f32.mrf.mxu0
        %v929 = vadd.f32 0.0, %v928
        %v930 = vpop.f32.mrf.mxu0
        %v931 = vadd.f32 0.0, %v930
        %932 = vdwg.mxu0
        %v933 = vadd.f32 %v906, %v929
        %v934 = vadd.f32 %v908, %v931
        %v935 = vld [vmem:[#allocation7] sm:$0x1]
        %v937 = vperm.slane %v935, 0
        %v939 = vadd.f32 %v933, %v937
        %v940 = vadd.f32 %v934, %v937
        %v941 = vmax.f32 %v939, 0.0
        %v942 = vmax.f32 %v940, 0.0
        %v945 = vrot.slane %v941, 6
        %v946 = vrot.slane %v942, 6
        %v947 = vsel %vm666, %v945, %v946
        %v950 = vsel %vm666, 0.0, %v945
        %v951 = vpack.c.bf16 %v947, %v950
        %v952 = vld [vmem:[%s5] sm:$0xf]
        %v953 = vrot.slane %v941, 7
        %v954 = vrot.slane %v942, 7
        %v955 = vsel %vm860, %v953, %v954
        %v958 = vsel %vm860, 0.0, %v953
        %v959 = vpack.c.bf16 %v955, %v958
        %s960 = scalar_lea.vmem %s5, 4
        %v961 = vld [vmem:[%s960] sm:$0xf]
        %vm962 = vcmask 64512
        %v964 = vsel %vm962, %v959, 0
        %vm966 = vcmask 1043456
        %v968 = vsel %vm966, %v961, 0
        %970 = vmatpush.bf16.msra.mxu0 0
        %971 = vmatpush.bf16.msra.mxu0 0
        %972 = vmatpush.bf16.msra.mxu0 0
        %973 = vmatpush.bf16.msra.mxu0 0
        %974 = vmatpush.bf16.msra.mxu0 0
        %975 = vmatpush.bf16.msra.mxu0 0
        %976 = vmatpush.bf16.msra.mxu0 0
        %977 = vmatpush.bf16.msra.mxu0 %v968
        %978 = vmatmul.bf16.gmra.mxu0 %v964
        %v979 = vpop.f32.mrf.mxu0
        %v980 = vadd.f32 0.0, %v979
        %v981 = vpop.f32.mrf.mxu0
        %v982 = vadd.f32 0.0, %v981
        %983 = vdwg.mxu0
        %v985 = vsel %vm962, %v951, 0
        %v988 = vsel %vm966, %v952, 0
        %990 = vmatpush.bf16.msra.mxu0 0
        %991 = vmatpush.bf16.msra.mxu0 0
        %992 = vmatpush.bf16.msra.mxu0 0
        %993 = vmatpush.bf16.msra.mxu0 0
        %994 = vmatpush.bf16.msra.mxu0 0
        %995 = vmatpush.bf16.msra.mxu0 0
        %996 = vmatpush.bf16.msra.mxu0 0
        %997 = vmatpush.bf16.msra.mxu0 %v988
        %998 = vmatmul.bf16.gmra.mxu0 %v985
        %v999 = vpop.f32.mrf.mxu0
        %v1000 = vadd.f32 %v980, %v999
        %v1001 = vpop.f32.mrf.mxu0
        %v1002 = vadd.f32 %v982, %v1001
        %1003 = vdwg.mxu0
        %v1004 = vpack.c.bf16 %v942, %v941
        %s1005 = scalar_lea.vmem %s5, 8
        %v1006 = vld [vmem:[%s1005] sm:$0xf]
        %v1008 = vsel %vm962, %v1004, 0
        %v1011 = vsel %vm966, %v1006, 0
        %1013 = vmatpush.bf16.msra.mxu0 0
        %1014 = vmatpush.bf16.msra.mxu0 0
        %1015 = vmatpush.bf16.msra.mxu0 0
        %1016 = vmatpush.bf16.msra.mxu0 0
        %1017 = vmatpush.bf16.msra.mxu0 0
        %1018 = vmatpush.bf16.msra.mxu0 0
        %1019 = vmatpush.bf16.msra.mxu0 0
        %1020 = vmatpush.bf16.msra.mxu0 %v1011
        %1021 = vmatmul.bf16.gmra.mxu0 %v1008
        %v1022 = vpop.f32.mrf.mxu0
        %v1023 = vadd.f32 0.0, %v1022
        %v1024 = vpop.f32.mrf.mxu0
        %v1025 = vadd.f32 0.0, %v1024
        %1026 = vdwg.mxu0
        %v1027 = vadd.f32 %v1000, %v1023
        %v1028 = vadd.f32 %v1002, %v1025
        %v1029 = vld [vmem:[#allocation8] sm:$0x1]
        %v1031 = vperm.slane %v1029, 0
        %v1033 = vadd.f32 %v1027, %v1031
        %v1034 = vadd.f32 %v1028, %v1031
        %v1035 = vmax.f32 %v1033, 0.0
        %v1036 = vmax.f32 %v1034, 0.0
        %v1037 = vadd.f32 %v848, 1.0
        %v1038 = vadd.f32 %v849, 1.0
        %1040 = vset.pattern.permute.xlu0 4
        %1041 = vperm.xlu0 %1040, %v1037
        %v1042 = vpop.permute.xlu0 %1041
        %1045 = vset.pattern.permute.xlu0 4
        %1046 = vperm.xlu0 %1045, %v1038
        %v1047 = vpop.permute.xlu0 %1046
        %v1049 = vmul.f32 %v1042, %v654
        %v1050 = vmul.f32 %v1047, %v655
        %v1051 = vpack.c.bf16 %v1050, %v1049
        %v1052 = vld [vmem:[#allocation10] sm:$0x3]
        %v1053 = vld [vmem:[#allocation11] sm:$0x1]
        %v1055 = vperm.slane %v1053, 0
        %v1058 = vsel %vm662, %v1051, 0
        %v1061 = vsel %vm666, %v1052, 0
        %1063 = vmatpush.bf16.msra.mxu0 0
        %1064 = vmatpush.bf16.msra.mxu0 0
        %1065 = vmatpush.bf16.msra.mxu0 0
        %1066 = vmatpush.bf16.msra.mxu0 0
        %1067 = vmatpush.bf16.msra.mxu0 0
        %1068 = vmatpush.bf16.msra.mxu0 0
        %1069 = vmatpush.bf16.msra.mxu0 0
        %1070 = vmatpush.bf16.msra.mxu0 %v1061
        %1071 = vmatmul.bf16.gmra.mxu0 %v1058
        %v1072 = vpop.f32.mrf.mxu0
        %v1073 = vadd.f32 %v1055, %v1072
        %v1074 = vpop.f32.mrf.mxu0
        %v1075 = vadd.f32 %v1055, %v1074
        %1076 = vdwg.mxu0
        %v1077 = vadd.f32 %v1035, %v1073
        %v1078 = vadd.f32 %v1036, %v1075
        %v1079 = vmax.f32 %v1077, 0.0
        %v1080 = vmax.f32 %v1078, 0.0
        %v1081 = vpack.c.bf16 %v1080, %v1079
        %v1082 = vld [vmem:[%s9] sm:$0xf]
        %v1083 = vld [vmem:[#allocation13] sm:$0x1]
        %v1085 = vperm.slane %v1083, 0
        %v1088 = vsel %vm962, %v1081, 0
        %v1091 = vsel %vm966, %v1082, 0
        %1093 = vmatpush.bf16.msra.mxu0 0
        %1094 = vmatpush.bf16.msra.mxu0 0
        %1095 = vmatpush.bf16.msra.mxu0 0
        %1096 = vmatpush.bf16.msra.mxu0 0
        %1097 = vmatpush.bf16.msra.mxu0 0
        %1098 = vmatpush.bf16.msra.mxu0 0
        %1099 = vmatpush.bf16.msra.mxu0 0
        %1100 = vmatpush.bf16.msra.mxu0 %v1091
        %1101 = vmatmul.bf16.gmra.mxu0 %v1088
        %v1102 = vpop.f32.mrf.mxu0
        %v1103 = vadd.f32 %v1085, %v1102
        %v1104 = vpop.f32.mrf.mxu0
        %v1105 = vadd.f32 %v1085, %v1104
        %1106 = vdwg.mxu0
        %v1107 = vmul.f32 %v1103, 0.2
        %v1108 = vmul.f32 %v1105, 0.2
        %v1109 = vpack.c.bf16 %v1107, %v1107
        %v1110 = vpack.c.bf16 %v1108, %v1108
        %v1111 = vpack.c.bf16 %v1103, %v1103
        %v1112 = vpack.c.bf16 %v1105, %v1105
        %v1115 = vunpack.c.l.b16 %v1109
        %v1116 = vunpack.c.l.b16 %v1110
        %v1117 = vpack.c.b16 %v1116, %v1115
        %v1120 = vunpack.c.l.b16 %v1111
        %v1121 = vunpack.c.l.b16 %v1112
        %v1122 = vpack.c.b16 %v1121, %v1120
        %1123 = vrot.lane.b32.xlu0 %v1122, 103
        %v1124 = vpop.permute.xlu0 %1123
        %v1126 = vsel %vm702, %v1117, 0
        %v1129 = vsel %vm702, %v1124, 0
        %1131 = vmatpush.bf16.xpose.msra.mxu0 0
        %1132 = vmatpush.bf16.xpose.msra.mxu0 0
        %1133 = vmatpush.bf16.xpose.msra.mxu0 0
        %1134 = vmatpush.bf16.xpose.msra.mxu0 0
        %1135 = vmatpush.bf16.xpose.msra.mxu0 0
        %1136 = vmatpush.bf16.xpose.msra.mxu0 0
        %1137 = vmatpush.bf16.xpose.msra.mxu0 0
        %1138 = vmatpush.bf16.xpose.msra.mxu0 %v1129
        %1139 = vmatmul.bf16.gmra.mxu0 %v1126
        %v1140 = vpop.f32.mrf.mxu0
        %v1141 = vadd.f32 0.0, %v1140
        %v1142 = vpop.f32.mrf.mxu0
        %v1143 = vadd.f32 0.0, %v1142
        %1144 = vdwg.mxu0
        %v1145 = vsel %vm723, -inf, %v1141
        %v1146 = vsel %vm724, -inf, %v1143
        %v1147 = vsel %vm727, %v1145, -inf
        %v1148 = vsel %vm727, %v1146, -inf
        %v1149 = vmax.f32 %v1147, %v1148
        %v1150 = vrot.slane %v1149, 4
        %v1151 = vmax.f32 %v1149, %v1150
        %v1152 = vrot.slane %v1151, 2
        %v1153 = vmax.f32 %v1151, %v1152
        %v1154 = vrot.slane %v1153, 1
        %v1155 = vmax.f32 %v1153, %v1154
        %v1156 = vsub.f32 %v1145, %v1155
        %v1157 = vsub.f32 %v1146, %v1155
        %v1158 = vmul.f32 %v1156, 1.442695
        %v1159 = vpow.pop %v1158
        %v1160 = vmul.f32 %v1157, 1.442695
        %v1161 = vpow.pop %v1160
        %v1162 = vsel %vm727, %v1159, 0.0
        %v1163 = vsel %vm727, %v1161, 0.0
        %v1164 = vadd.f32 %v1162, %v1163
        %v1165 = vrot.slane %v1164, 4
        %v1166 = vadd.f32 %v1164, %v1165
        %v1167 = vrot.slane %v1166, 2
        %v1168 = vadd.f32 %v1166, %v1167
        %v1169 = vrot.slane %v1168, 1
        %v1170 = vadd.f32 %v1168, %v1169
        %v1171 = vrcp.pop %v1170
        %v1172 = vlaneseq
        %v1173 = vshrl.u32 %v1172, 7
        %1175 = vset.pattern.permute.xlu0 %v1173
        %1176 = vperm.xlu0 %1175, %v1171
        %v1177 = vpop.permute.xlu0 %1176
        %v1178 = vlaneseq
        %v1179 = vshrl.u32 %v1178, 7
        %v1180 = vadd.s32 %v1179, 8
        %1181 = vset.pattern.permute.xlu0 %v1180
        %1182 = vperm.xlu0 %1181, %v1171
        %v1183 = vpop.permute.xlu0 %1182
        %v1184 = vmul.f32 %v1103, %v1177
        %v1185 = vmul.f32 %v1105, %v1183
        %1188 = vrot.lane.b32.xlu0 %v1184, 78
        %v1189 = vpop.permute.xlu0 %1188
        %1190 = vrot.lane.b32.xlu0 %v1185, 78
        %v1191 = vpop.permute.xlu0 %1190
        %v1194 = vsel %vm962, %v1189, %v1177
        %v1195 = vsel %vm962, %v1191, %v1183
        %v1196 = vpack.c.bf16 %v1159, %v1159
        %v1197 = vpack.c.bf16 %v1161, %v1161
        %v1198 = vpack.c.bf16 %v1194, %v1194
        %v1199 = vpack.c.bf16 %v1195, %v1195
        %v1202 = vunpack.c.l.b16 %v1196
        %v1203 = vunpack.c.l.b16 %v1197
        %v1204 = vpack.c.b16 %v1203, %v1202
        %v1207 = vunpack.c.l.b16 %v1198
        %v1208 = vunpack.c.l.b16 %v1199
        %v1209 = vpack.c.b16 %v1208, %v1207
        %v1212 = vsel %vm727, %v1204, 0
        %1214 = vmatpush.bf16.msra.mxu0 0
        %1215 = vmatpush.bf16.msra.mxu0 0
        %1216 = vmatpush.bf16.msra.mxu0 0
        %1217 = vmatpush.bf16.msra.mxu0 0
        %1218 = vmatpush.bf16.msra.mxu0 0
        %1219 = vmatpush.bf16.msra.mxu0 0
        %1220 = vmatpush.bf16.msra.mxu0 0
        %1221 = vmatpush.bf16.msra.mxu0 %v1209
        %1222 = vmatmul.bf16.gmra.mxu0 %v1212
        %v1223 = vpop.f32.mrf.mxu0
        %v1224 = vadd.f32 0.0, %v1223
        %v1225 = vpop.f32.mrf.mxu0
        %v1226 = vadd.f32 0.0, %v1225
        %1227 = vdwg.mxu0
        %vm1228 = vcmask 72768
        %v1229 = vsel %vm1228, %v1224, -inf
        %v1230 = vsel %vm1228, %v1226, -inf
        %v1231 = vmax.f32 %v1229, %v1230
        %v1232 = vrot.slane %v1231, 4
        %v1233 = vmax.f32 %v1231, %v1232
        %v1234 = vrot.slane %v1233, 2
        %v1235 = vmax.f32 %v1233, %v1234
        %v1236 = vrot.slane %v1235, 1
        %v1237 = vmax.f32 %v1235, %v1236
        %v1238 = vsub.f32 %v1224, %v1237
        %v1239 = vsub.f32 %v1226, %v1237
        %v1240 = vmul.f32 %v1238, 1.442695
        %v1241 = vpow.pop %v1240
        %v1242 = vmul.f32 %v1239, 1.442695
        %v1243 = vpow.pop %v1242
        %v1244 = vsel %vm1228, %v1241, 0.0
        %v1245 = vsel %vm1228, %v1243, 0.0
        %v1246 = vadd.f32 %v1244, %v1245
        %v1247 = vrot.slane %v1246, 4
        %v1248 = vadd.f32 %v1246, %v1247
        %v1249 = vrot.slane %v1248, 2
        %v1250 = vadd.f32 %v1248, %v1249
        %v1251 = vrot.slane %v1250, 1
        %v1252 = vadd.f32 %v1250, %v1251
        %v1253 = vrcp.pop %v1252
        %v1254 = vmul.f32 %v1252, %v1253
        %v1255 = vsub.f32 1.0, %v1254
        %v1256 = vmul.f32 %v1253, %v1255
        %v1257 = vadd.f32 %v1253, %v1256
        %vm1258 = vweird.f32 %v1252
        %vm1259 = vweird.f32 %v1253
        %vm1260 = vmor %vm1258, %vm1259
        %v1261 = vsel %vm1260, %v1253, %v1257
        %v1262 = vand.u32 2147483647, %v1252
        %vm1263 = vcmp.eq.f32.partialorder %v1262, 8.507059e+37
        %v1264 = vand.u32 %v1252, 2147483648
        %v1265 = vor.u32 1.1754944e-38, %v1264
        %v1266 = vsel %vm1263, %v1265, %v1261
        %v1267 = vmul.f32 %v1243, %v1266
        %v1270 = vrot.slane %v1224, 4
        %v1271 = vrot.slane %v1226, 4
        %v1272 = vsel %vm966, %v1270, %v1271
        %v1275 = vsel %vm966, 0.0, %v1270
        %v1276 = vpack.c.bf16 %v1272, %v1275
        %v1277 = vld [vmem:[%s11] sm:$0xf]
        %v1278 = vrot.slane %v1224, 6
        %v1279 = vrot.slane %v1226, 6
        %v1280 = vsel %vm666, %v1278, %v1279
        %v1283 = vsel %vm666, 0.0, %v1278
        %v1284 = vpack.c.bf16 %v1280, %v1283
        %s1285 = scalar_lea.vmem %s11, 4
        %v1286 = vld [vmem:[%s1285] sm:$0xf]
        %v1288 = vsel %vm962, %v1284, 0
        %v1291 = vsel %vm966, %v1286, 0
        %1293 = vmatpush.bf16.msra.mxu0 0
        %1294 = vmatpush.bf16.msra.mxu0 0
        %1295 = vmatpush.bf16.msra.mxu0 0
        %1296 = vmatpush.bf16.msra.mxu0 0
        %1297 = vmatpush.bf16.msra.mxu0 0
        %1298 = vmatpush.bf16.msra.mxu0 0
        %1299 = vmatpush.bf16.msra.mxu0 0
        %1300 = vmatpush.bf16.msra.mxu0 %v1291
        %1301 = vmatmul.bf16.gmra.mxu0 %v1288
        %v1302 = vpop.f32.mrf.mxu0
        %v1303 = vadd.f32 0.0, %v1302
        %v1304 = vpop.f32.mrf.mxu0
        %v1305 = vadd.f32 0.0, %v1304
        %1306 = vdwg.mxu0
        %v1308 = vsel %vm962, %v1276, 0
        %v1311 = vsel %vm966, %v1277, 0
        %1313 = vmatpush.bf16.msra.mxu0 0
        %1314 = vmatpush.bf16.msra.mxu0 0
        %1315 = vmatpush.bf16.msra.mxu0 0
        %1316 = vmatpush.bf16.msra.mxu0 0
        %1317 = vmatpush.bf16.msra.mxu0 0
        %1318 = vmatpush.bf16.msra.mxu0 0
        %1319 = vmatpush.bf16.msra.mxu0 0
        %1320 = vmatpush.bf16.msra.mxu0 %v1311
        %1321 = vmatmul.bf16.gmra.mxu0 %v1308
        %v1322 = vpop.f32.mrf.mxu0
        %v1323 = vadd.f32 %v1303, %v1322
        %v1324 = vpop.f32.mrf.mxu0
        %v1325 = vadd.f32 %v1305, %v1324
        %1326 = vdwg.mxu0
        %v1327 = vpack.c.bf16 %v1226, %v1224
        %s1328 = scalar_lea.vmem %s11, 8
        %v1329 = vld [vmem:[%s1328] sm:$0xf]
        %v1331 = vsel %vm962, %v1327, 0
        %v1334 = vsel %vm966, %v1329, 0
        %1336 = vmatpush.bf16.msra.mxu0 0
        %1337 = vmatpush.bf16.msra.mxu0 0
        %1338 = vmatpush.bf16.msra.mxu0 0
        %1339 = vmatpush.bf16.msra.mxu0 0
        %1340 = vmatpush.bf16.msra.mxu0 0
        %1341 = vmatpush.bf16.msra.mxu0 0
        %1342 = vmatpush.bf16.msra.mxu0 0
        %1343 = vmatpush.bf16.msra.mxu0 %v1334
        %1344 = vmatmul.bf16.gmra.mxu0 %v1331
        %v1345 = vpop.f32.mrf.mxu0
        %v1346 = vadd.f32 0.0, %v1345
        %v1347 = vpop.f32.mrf.mxu0
        %v1348 = vadd.f32 0.0, %v1347
        %1349 = vdwg.mxu0
        %v1350 = vadd.f32 %v1323, %v1346
        %v1351 = vadd.f32 %v1325, %v1348
        %v1352 = vld [vmem:[%s12] sm:$0x1]
        %v1354 = vperm.slane %v1352, 0
        %v1356 = vadd.f32 %v1350, %v1354
        %v1357 = vadd.f32 %v1351, %v1354
        %v1358 = vmax.f32 %v1356, 0.0
        %v1359 = vmax.f32 %v1357, 0.0
        %v1362 = vrot.slane %v1358, 4
        %v1363 = vrot.slane %v1359, 4
        %v1364 = vsel %vm966, %v1362, %v1363
        %v1367 = vsel %vm966, 0.0, %v1362
        %v1368 = vpack.c.bf16 %v1364, %v1367
        %v1369 = vld [vmem:[%s13] sm:$0xf]
        %v1370 = vrot.slane %v1358, 6
        %v1371 = vrot.slane %v1359, 6
        %v1372 = vsel %vm666, %v1370, %v1371
        %v1375 = vsel %vm666, 0.0, %v1370
        %v1376 = vpack.c.bf16 %v1372, %v1375
        %s1377 = scalar_lea.vmem %s13, 4
        %v1378 = vld [vmem:[%s1377] sm:$0xf]
        %v1380 = vsel %vm962, %v1376, 0
        %v1383 = vsel %vm966, %v1378, 0
        %1385 = vmatpush.bf16.msra.mxu0 0
        %1386 = vmatpush.bf16.msra.mxu0 0
        %1387 = vmatpush.bf16.msra.mxu0 0
        %1388 = vmatpush.bf16.msra.mxu0 0
        %1389 = vmatpush.bf16.msra.mxu0 0
        %1390 = vmatpush.bf16.msra.mxu0 0
        %1391 = vmatpush.bf16.msra.mxu0 0
        %1392 = vmatpush.bf16.msra.mxu0 %v1383
        %1393 = vmatmul.bf16.gmra.mxu0 %v1380
        %v1394 = vpop.f32.mrf.mxu0
        %v1395 = vpop.f32.mrf.mxu0
        %v1396 = vadd.f32 0.0, %v1395
        %1397 = vdwg.mxu0
        %v1399 = vsel %vm962, %v1368, 0
        %v1402 = vsel %vm966, %v1369, 0
        %1404 = vmatpush.bf16.msra.mxu0 0
        %1405 = vmatpush.bf16.msra.mxu0 0
        %1406 = vmatpush.bf16.msra.mxu0 0
        %1407 = vmatpush.bf16.msra.mxu0 0
        %1408 = vmatpush.bf16.msra.mxu0 0
        %1409 = vmatpush.bf16.msra.mxu0 0
        %1410 = vmatpush.bf16.msra.mxu0 0
        %1411 = vmatpush.bf16.msra.mxu0 %v1402
        %1412 = vmatmul.bf16.gmra.mxu0 %v1399
        %v1413 = vpop.f32.mrf.mxu0
        %v1414 = vpop.f32.mrf.mxu0
        %v1415 = vadd.f32 %v1396, %v1414
        %1416 = vdwg.mxu0
        %v1417 = vpack.c.bf16 %v1359, %v1358
        %s1418 = scalar_lea.vmem %s13, 8
        %v1419 = vld [vmem:[%s1418] sm:$0xf]
        %v1421 = vsel %vm962, %v1417, 0
        %v1424 = vsel %vm966, %v1419, 0
        %1426 = vmatpush.bf16.msra.mxu0 0
        %1427 = vmatpush.bf16.msra.mxu0 0
        %1428 = vmatpush.bf16.msra.mxu0 0
        %1429 = vmatpush.bf16.msra.mxu0 0
        %1430 = vmatpush.bf16.msra.mxu0 0
        %1431 = vmatpush.bf16.msra.mxu0 0
        %1432 = vmatpush.bf16.msra.mxu0 0
        %1433 = vmatpush.bf16.msra.mxu0 %v1424
        %1434 = vmatmul.bf16.gmra.mxu0 %v1421
        %v1435 = vpop.f32.mrf.mxu0
        %v1436 = vpop.f32.mrf.mxu0
        %v1437 = vadd.f32 0.0, %v1436
        %1438 = vdwg.mxu0
        %v1439 = vadd.f32 %v1415, %v1437
        %v1440 = vld [vmem:[%s14] sm:$0x1]
        %v1442 = vperm.slane %v1440, 0
        %v1444 = vadd.f32 %v1439, %v1442
        %v1445 = vmax.f32 %v1444, 0.0
        %v1446 = vadd.f32 %v1267, 1.0
        %1448 = vset.pattern.permute.xlu0 8
        %1449 = vperm.xlu0 %1448, %v1446
        %v1450 = vpop.permute.xlu0 %1449
        %v1452 = vmul.f32 %v1450, %v1080
        %v1453 = vadd.f32 %v1445, %v1452
        %v1454 = vmax.f32 %v1453, 0.0
        %v1455 = vpack.c.bf16 %v1454, %v1454
        %v1456 = vld [vmem:[%s15] sm:$0xf]
        %v1457 = vld [vmem:[%s16] sm:$0x1]
        %v1459 = vshrl.u32 %v1455, 16
        %v1461 = vrot.slane %v1459, 3
        %v1463 = vsel %vm962, %v1461, 0
        %v1466 = vsel %vm966, %v1456, 0
        %1468 = vmatpush.bf16.msra.mxu0 0
        %1469 = vmatpush.bf16.msra.mxu0 0
        %1470 = vmatpush.bf16.msra.mxu0 0
        %1471 = vmatpush.bf16.msra.mxu0 0
        %1472 = vmatpush.bf16.msra.mxu0 0
        %1473 = vmatpush.bf16.msra.mxu0 0
        %1474 = vmatpush.bf16.msra.mxu0 0
        %1475 = vmatpush.bf16.msra.mxu0 %v1466
        %1476 = vmatmul.bf16.gmra.mxu0 %v1463
        %v1477 = vpop.f32.mrf.mxu0
        %v1478 = vadd.f32 %v1457, %v1477
        %v1479 = vpop.f32.mrf.mxu0
        %1480 = vdwg.mxu0
        %vm1481 = vcmask 73728
        %v1482 = vsel %vm1481, %v1478, -inf
        %1483 = vmax.xlane.f32.xlu0 %v1482
        %v1484 = vpop.xlane.xlu0 %1483
        %v1485 = vsub.f32 %v1478, %v1484
        %v1486 = vmul.f32 %v1485, 1.442695
        %v1487 = vpow.pop %v1486
        %v1488 = vsel %vm1481, %v1487, 0.0
        %1489 = vadd.xlane.f32.xlu0 %v1488
        %v1490 = vpop.xlane.xlu0 %1489
        %v1491 = vlog2.pop %v1490
        %v1492 = vmul.f32 %v1491, 0.6931472
        %v1493 = vsub.f32 %v1485, %v1492
        %1494 = vst.msk [vmem:[%s642] sm:$0x1] %vm1481, %v1493
        %s1495 = sand.u32 %s405, 1
        %s1496 = scalar_lea.sflag [#allocation4], %s1495
        %s1497 = sand.u32 %s405, 1
        %s1498 = scalar_lea.vmem [#allocation14], %s1497
        // Predicated region
        $region117: #{tpu_custom_call.1} parent=87 // pred_check
          %p1499 = pneg %p415
        $region118: #{tpu_custom_call.1} parent=87 // pred_check_branch
          %1501 = sbr.rel (%p1499) target = $region120
        $region119: #{tpu_custom_call.1} parent=87 // pred_region
          %1503 = vsyncadd %s1496, 0
          %s1504 = scalar_lea.hbm %s17, %s35
          %s1506 = sshll.u32 %s1498, 4
          %s1507 = int_to_ptr.vmem [resolvable:$true] %s1506
          %s1508 = sshll.u32 %s1504, 4
          %s1509 = int_to_ptr.hbm [resolvable:$true] %s1508
          %1511 = dma.vmem_to_hbm [thread:$0]  %s1507, 16, %s1509, %s1496
        $region120: #{tpu_custom_call.1} parent=87 // pred_fallthru
          _
      $region88: #{tpu_custom_call.1} parent=5 // pred_fallthru
        _
      %p1512 = scmp.le.s32.totalorder 2, %s30
      // Predicated region
      $region121: #{tpu_custom_call.1} parent=5 // pred_check
        %p1513 = pneg %p1512
      $region122: #{tpu_custom_call.1} parent=5 // pred_check_branch
        %1515 = sbr.rel (%p1513) target = $region124
      $region123: #{tpu_custom_call.1} parent=5 // pred_region
        %s1516 = ssub.s32 %s30, 2
        // Predicated region
        $region125: #{tpu_custom_call.1} parent=123 // pred_check
          %p1517 = pneg %p421
        $region126: #{tpu_custom_call.1} parent=123 // pred_check_branch
          %1519 = sbr.rel (%p1517) target = $region128
        $region127: #{tpu_custom_call.1} parent=123 // pred_region
          %s1520 = sand.u32 %s406, 1
          %s1521 = scalar_lea.sflag [#allocation4], %s1520
          %s1522 = sand.u32 %s406, 1
          %s1523 = scalar_lea.vmem [#allocation14], %s1522
          %1525 = dma.done %s1521, 16
        $region128: #{tpu_custom_call.1} parent=123 // pred_fallthru
          _
      $region124: #{tpu_custom_call.1} parent=5 // pred_fallthru
        _
    $region6: #{tpu_custom_call.1} parent=1 // loop_footer
      %s34 = sadd.s32 1, %s30
    $region7: #{tpu_custom_call.1} parent=1 // loop_footer_branch
      %29 = sbr.rel target = $region3
    $region8: #{tpu_custom_call.1} parent=1 // loop_exit
      _
    %1526 = vsyncpa [#allocation3], 1
    %s1527 = scalar_lea.sflag [#allocation3], 1
    %1528 = vsyncpa %s1527, 1
    %1529 = vsyncpa [#allocation6], 1
    %1530 = vsyncpa [#allocation9], 1
    %1531 = vsyncpa [#allocation12], 1
    %1532 = vsyncpa [#allocation4], 1
    %s1533 = scalar_lea.sflag [#allocation4], 1
    %1534 = vsyncpa %s1533, 1

</llo_original>
